<compile_context>
chip_gen: v7x
topology: tpu7x:2x2x1
jax: 0.10.0
libtpu: 0.0.40
codegen_flags: <defaults>
</compile_context>

<pallas_src>
from math import sqrt

import jax
import jax.numpy as jnp
from jax import lax
from jax.experimental import pallas as pl
from jax.experimental.pallas import tpu as pltpu  # noqa: F401  (kept for parity / future tiling)

# ----------------------------- small deterministic config -----------------------------
B = 2              # batch
T = 32             # seq_len
N_CH = 4           # enc_in (channels) == decoder "sequence" length
PRED_LEN = 8       # pred_len
LLM_DIM = 64       # llm_dim
N_HEAD = 4         # n_heads
HEAD_DIM = LLM_DIM // N_HEAD
N_LAYER = 2        # llm_layers
P_SOFT = 4         # softprompt_seq_len
FM_DIM = 1024      # MOMENT embedding dim (conv_moment in_channels=1024)
INTERMEDIATE = 4 * LLM_DIM               # GPT-NeoX MLP intermediate
ROT_DIMS = max(2, int(HEAD_DIM * 0.25))  # pythia rotary_pct = 0.25 -> 4
EPS = 1e-5
TOP_K = 5
BN = B * N_CH      # rows of every (batch, channel) matrix


# ----------------------------------- fused kernel -----------------------------------
def _fused_forecast_kernel(
    # inputs
    x_ref,        # (BN, T)        f32   per-(batch,channel) time series
    wfm_ref,      # (T, FM)        bf16  MOMENT stand-in
    wconv_ref,    # (FM, D)        bf16  conv_moment (1x1 conv == matmul)
    pk_ref,       # (L, H, hd, P)  bf16  prefix keys (pre-transposed)
    pv_ref,       # (L, H, P, hd)  bf16  prefix values
    wqkv_ref,     # (L, D, 3D)     bf16  ln1-folded fused qkv proj (scale folded into q)
    bqkv_ref,     # (L, 1, 3D)     f32
    wo_ref,       # (L, D, D)      bf16  attention dense
    bo_ref,       # (L, 1, D)      f32
    wfc1_ref,     # (L, D, I)      bf16  ln2-folded dense_h_to_4h
    bfc1_ref,     # (L, 1, I)      f32
    wfc2_ref,     # (L, I, D)      bf16  dense_4h_to_h
    bfc2_ref,     # (L, 1, D)      f32
    wout_ref,     # (D, PRED)      f32   final-LN-folded output_projection_moment
    bout_ref,     # (1, PRED)      f32
    cos_ref,      # (BN, D)        f32   rotary cos, tiled per head (1 in pass lanes)
    sin_ref,      # (BN, D)        f32   rotary sin, tiled per head (0 in pass lanes)
    pfull_ref,    # (D, D)         bf16  block-diagonal rotate-half matrix
    mask_ts_ref,  # (BN, BN)       f32   batch-isolation mask for ts past keys
    mask_cur_ref, # (BN, BN)       f32   batch-isolation + causal mask for current keys
    # output
    out_ref,      # (BN, PRED)     f32
):
    f32, bf16 = jnp.float32, jnp.bfloat16
    D, hd = LLM_DIM, HEAD_DIM
    dn = (((1,), (1,)), ((), ()))   # contract last dims (A @ B^T) without a transpose

    # ---------------- RevIN 'norm' (non-affine), per (batch, channel) over time --------
    x = x_ref[...]
    mean_t = jnp.mean(x, axis=-1, keepdims=True)
    var_t = jnp.mean(jnp.square(x - mean_t), axis=-1, keepdims=True)   # unbiased=False
    std_t = jnp.sqrt(var_t + EPS)
    x_n = (x - mean_t) / std_t

    # ------ MOMENT stand-in (T -> 1024, bf16 like the reference) + conv_moment ---------
    emb = jnp.dot(x_n.astype(bf16), wfm_ref[...], preferred_element_type=f32)
    hid = jnp.dot(emb.astype(bf16), wconv_ref[...], preferred_element_type=f32)
    # ts_representation == inputs_embeds == conv_moment output; its per-head split is
    # simply the head-slices of `hid` (no extra matmuls needed).
    ts_b = hid.astype(bf16)

    cos_t = cos_ref[...]
    sin_t = sin_ref[...]
    pfull = pfull_ref[...]
    mask_ts = mask_ts_ref[...]
    mask_cur = mask_cur_ref[...]

    # ------------- GPT-NeoX decoder with prefix past-KV (parallel residual) ------------
    for l in range(N_LAYER):
        # shared LayerNorm statistics; ln1/ln2 gains+biases are folded into the weights
        mu = jnp.mean(hid, axis=-1, keepdims=True)
        var = jnp.mean(jnp.square(hid - mu), axis=-1, keepdims=True)
        normed = ((hid - mu) * lax.rsqrt(var + EPS)).astype(bf16)

        # fused Q/K/V projection (heads contiguous in lanes); scale pre-folded into q
        qkv = jnp.dot(normed, wqkv_ref[l], preferred_element_type=f32) + bqkv_ref[l]
        q = qkv[:, 0:D]
        k = qkv[:, D:2 * D]
        v = qkv[:, 2 * D:3 * D]
        # partial rotary (GPT-NeoX) for all heads at once: x*cos + (x @ P_blockdiag)*sin
        q = q * cos_t + jnp.dot(q.astype(bf16), pfull, preferred_element_type=f32) * sin_t
        k = k * cos_t + jnp.dot(k.astype(bf16), pfull, preferred_element_type=f32) * sin_t
        q_b = q.astype(bf16)
        k_b = k.astype(bf16)
        v_b = v.astype(bf16)

        ctx_heads = []
        for hh in range(N_HEAD):
            sl = slice(hh * hd, (hh + 1) * hd)
            qh, kh, vh, tsh = q_b[:, sl], k_b[:, sl], v_b[:, sl], ts_b[:, sl]

            # softmax over the concatenated keys [prefix | ts_rep | current(causal)];
            # batch isolation + causality handled by host-built additive masks.
            s_pre = jnp.dot(qh, pk_ref[l, hh], preferred_element_type=f32)
            s_ts = lax.dot_general(qh, tsh, dn, preferred_element_type=f32) + mask_ts
            s_cur = lax.dot_general(qh, kh, dn, preferred_element_type=f32) + mask_cur

            m = jnp.maximum(jnp.max(s_pre, axis=-1, keepdims=True),
                            jnp.maximum(jnp.max(s_ts, axis=-1, keepdims=True),
                                        jnp.max(s_cur, axis=-1, keepdims=True)))
            p_pre = jnp.exp(s_pre - m)
            p_ts = jnp.exp(s_ts - m)
            p_cur = jnp.exp(s_cur - m)
            denom = (jnp.sum(p_pre, axis=-1, keepdims=True)
                     + jnp.sum(p_ts, axis=-1, keepdims=True)
                     + jnp.sum(p_cur, axis=-1, keepdims=True))
            ctx = (jnp.dot(p_pre.astype(bf16), pv_ref[l, hh], preferred_element_type=f32)
                   + jnp.dot(p_ts.astype(bf16), tsh, preferred_element_type=f32)
                   + jnp.dot(p_cur.astype(bf16), vh, preferred_element_type=f32))
            ctx_heads.append(ctx * pl.reciprocal(denom, approx=True))

        # attention output projection: heads packed in lanes -> single (BN,D)@(D,D) dot
        ctx_full = jnp.concatenate(ctx_heads, axis=-1).astype(bf16)
        attn_out = jnp.dot(ctx_full, wo_ref[l], preferred_element_type=f32) + bo_ref[l]

        # MLP (ln2 folded into wfc1/bfc1)
        mpre = jnp.dot(normed, wfc1_ref[l], preferred_element_type=f32) + bfc1_ref[l]
        # TODO(synk): GPT-NeoX exact erf-GELU approximated with the tanh form inside the kernel.
        act = jax.nn.gelu(mpre, approximate=True)
        mlp_out = jnp.dot(act.astype(bf16), wfc2_ref[l],
                          preferred_element_type=f32) + bfc2_ref[l]

        hid = attn_out + mlp_out + hid        # GPT-NeoX parallel residual

    # ---- final LayerNorm (folded into wout/bout) + output projection + RevIN denorm ---
    mu = jnp.mean(hid, axis=-1, keepdims=True)
    var = jnp.mean(jnp.square(hid - mu), axis=-1, keepdims=True)
    normed_f = (hid - mu) * lax.rsqrt(var + EPS)
    out = jnp.dot(normed_f, wout_ref[...], preferred_element_type=f32) + bout_ref[...]
    out_ref[...] = out * std_t + mean_t


def fused_forecast(kp, x_cn):
    """x_cn: (B*N, T) f32 -> (B*N, pred_len) f32, whole numeric path in one kernel."""
    # TODO(synk): if called with many more (batch, channel) rows, add a row grid axis with
    # constant weight index_maps + dimension_semantics=("parallel",) to pipeline rows and
    # use both v7x TensorCores; with BN=8 a single invocation is already latency-bound.
    return pl.pallas_call(
        _fused_forecast_kernel,
        out_shape=jax.ShapeDtypeStruct((BN, PRED_LEN), jnp.float32),
    )(x_cn,
      kp["w_fm"], kp["w_conv"], kp["prefix_k"], kp["prefix_v"],
      kp["wqkv"], kp["bqkv"], kp["wo"], kp["bo"],
      kp["wfc1"], kp["bfc1"], kp["wfc2"], kp["bfc2"],
      kp["w_out"], kp["b_out"], kp["cos_full"], kp["sin_full"], kp["p_full"],
      kp["mask_ts"], kp["mask_cur"])


# ----------------------------------- parameters -----------------------------------
def init_params(key):
    def nrm(k, shape, scale=0.02):
        return scale * jax.random.normal(k, shape, jnp.float32)

    keys = iter(jax.random.split(key, 64))
    p = {}
    # TODO(synk): stand-in for the frozen pretrained MOMENT foundation model (T -> 1024 embedding).
    p["W_fm"] = nrm(next(keys), (T, FM_DIM))
    # conv_moment: Conv1d(1024 -> llm_dim, kernel_size=1, bias=False) == matmul
    p["W_conv_moment"] = nrm(next(keys), (FM_DIM, LLM_DIM))
    # PrefixEncoder embedding table: (softprompt_seq_len, n_layer*2*llm_dim)
    p["prefix_emb"] = nrm(next(keys), (P_SOFT, 2 * N_LAYER * LLM_DIM))
    p["layers"] = []
    for _ in range(N_LAYER):
        p["layers"].append({
            "ln1_g": jnp.ones((LLM_DIM,)), "ln1_b": jnp.zeros((LLM_DIM,)),
            "ln2_g": jnp.ones((LLM_DIM,)), "ln2_b": jnp.zeros((LLM_DIM,)),
            "W_qkv": nrm(next(keys), (LLM_DIM, 3 * LLM_DIM)),
            "b_qkv": jnp.zeros((3 * LLM_DIM,)),
            "W_o": nrm(next(keys), (LLM_DIM, LLM_DIM)),
            "b_o": jnp.zeros((LLM_DIM,)),
            "W_fc1": nrm(next(keys), (LLM_DIM, INTERMEDIATE)),
            "b_fc1": jnp.zeros((INTERMEDIATE,)),
            "W_fc2": nrm(next(keys), (INTERMEDIATE, LLM_DIM)),
            "b_fc2": jnp.zeros((LLM_DIM,)),
        })
    p["lnf_g"] = jnp.ones((LLM_DIM,))
    p["lnf_b"] = jnp.zeros((LLM_DIM,))
    # output_projection_moment: Linear(llm_dim -> pred_len, bias=True)
    p["W_out_moment"] = nrm(next(keys), (LLM_DIM, PRED_LEN))
    p["b_out_moment"] = jnp.zeros((PRED_LEN,))
    return p


def prepare_kernel_params(p):
    """Fold LayerNorms + attention scale into projections, fuse QKV, build prefix-KV,
    rotary tables, rotate-half matrix and additive masks (all host-side, one time)."""
    f32, bf16 = jnp.float32, jnp.bfloat16
    L, D, H, hd = N_LAYER, LLM_DIM, N_HEAD, HEAD_DIM
    scale = 1.0 / sqrt(hd)

    wqkv, bqkv, wo, bo, wfc1, bfc1, wfc2, bfc2 = ([] for _ in range(8))
    for lp in p["layers"]:
        g1, c1 = lp["ln1_g"], lp["ln1_b"]
        g2, c2 = lp["ln2_g"], lp["ln2_b"]
        # ln(x)@W + b == normed(x) @ (diag(g)W) + (b_ln@W + b)
        Wf = g1[:, None] * lp["W_qkv"]
        bf_ = c1 @ lp["W_qkv"] + lp["b_qkv"]
        Wr = Wf.reshape(D, H, 3, hd)           # GPT-NeoX: per-head interleaved [q|k|v]
        br = bf_.reshape(H, 3, hd)
        # fold 1/sqrt(head_dim) attention scale into the q projection
        Wr = Wr.at[:, :, 0, :].multiply(scale)
        br = br.at[:, 0, :].multiply(scale)
        # de-interleave to [q heads | k heads | v heads], each head contiguous in lanes
        wqkv.append(jnp.transpose(Wr, (0, 2, 1, 3)).reshape(D, 3 * D))
        bqkv.append(jnp.transpose(br, (1, 0, 2)).reshape(1, 3 * D))
        wo.append(lp["W_o"])
        bo.append(lp["b_o"][None, :])
        wfc1.append(g2[:, None] * lp["W_fc1"])
        bfc1.append((c2 @ lp["W_fc1"] + lp["b_fc1"])[None, :])
        wfc2.append(lp["W_fc2"])
        bfc2.append(lp["b_fc2"][None, :])

    # PrefixEncoder -> per-layer / per-head prefix K,V (batch-independent, as in get_prompt)
    pe = p["prefix_emb"].reshape(P_SOFT, L, 2, H, hd)
    prefix_k = jnp.transpose(pe[:, :, 0], (1, 2, 3, 0))   # (L, H, hd, P)  pre-transposed
    prefix_v = jnp.transpose(pe[:, :, 1], (1, 2, 0, 3))   # (L, H, P, hd)

    # rotary tables (GPT-NeoX partial rotary, positions offset by past length P+N)
    past_len = P_SOFT + N_CH
    pos = past_len + jnp.arange(N_CH, dtype=f32)
    inv_freq = 1.0 / (10000.0 ** (jnp.arange(0, ROT_DIMS, 2, dtype=f32) / ROT_DIMS))
    freqs = pos[:, None] * inv_freq[None, :]
    emb = jnp.concatenate([freqs, freqs], axis=-1)         # (S, ROT_DIMS)
    cos_h = jnp.concatenate([jnp.cos(emb), jnp.ones((N_CH, hd - ROT_DIMS), f32)], axis=-1)
    sin_h = jnp.concatenate([jnp.sin(emb), jnp.zeros((N_CH, hd - ROT_DIMS), f32)], axis=-1)
    cos_full = jnp.tile(jnp.tile(cos_h, (B, 1)), (1, H))   # (BN, D) rows ordered (b, s)
    sin_full = jnp.tile(jnp.tile(sin_h, (B, 1)), (1, H))

    # rotate_half-with-sign as a block-diagonal constant matrix (one per head block)
    half = ROT_DIMS // 2
    p_head = jnp.zeros((hd, hd), f32)
    p_head = p_head.at[half:ROT_DIMS, 0:half].set(-jnp.eye(half, dtype=f32))
    p_head = p_head.at[0:half, half:ROT_DIMS].set(jnp.eye(half, dtype=f32))
    p_full = jnp.kron(jnp.eye(H, dtype=f32), p_head)       # (D, D)

    # additive masks for the full (BN, BN) score matrices:
    #   ts past keys: visible only within the same batch
    #   current keys: same batch + causal
    rows = jnp.arange(BN)
    same_batch = (rows[:, None] // N_CH) == (rows[None, :] // N_CH)
    causal = (rows[None, :] % N_CH) <= (rows[:, None] % N_CH)
    mask_ts = jnp.where(same_batch, 0.0, -1e30).astype(f32)
    mask_cur = jnp.where(same_batch & causal, 0.0, -1e30).astype(f32)

    # final LayerNorm folded into output_projection_moment
    w_out = p["lnf_g"][:, None] * p["W_out_moment"]
    b_out = (p["lnf_b"] @ p["W_out_moment"] + p["b_out_moment"])[None, :]

    return dict(
        w_fm=p["W_fm"].astype(bf16),
        w_conv=p["W_conv_moment"].astype(bf16),
        prefix_k=prefix_k.astype(bf16), prefix_v=prefix_v.astype(bf16),
        wqkv=jnp.stack(wqkv).astype(bf16), bqkv=jnp.stack(bqkv).astype(f32),
        wo=jnp.stack(wo).astype(bf16), bo=jnp.stack(bo).astype(f32),
        wfc1=jnp.stack(wfc1).astype(bf16), bfc1=jnp.stack(bfc1).astype(f32),
        wfc2=jnp.stack(wfc2).astype(bf16), bfc2=jnp.stack(bfc2).astype(f32),
        w_out=w_out.astype(f32), b_out=b_out.astype(f32),
        cos_full=cos_full.astype(f32), sin_full=sin_full.astype(f32),
        p_full=p_full.astype(bf16),
        mask_ts=mask_ts, mask_cur=mask_cur,
    )


# ------------------------------------ forward ------------------------------------
def calcute_lags(x):
    # x: (B*N, T, 1). FFT autocorrelation + top-k (feeds the text prompt only).
    xt = jnp.transpose(x, (0, 2, 1))
    q_fft = jnp.fft.rfft(xt, axis=-1)
    res = q_fft * jnp.conj(q_fft)
    corr = jnp.fft.irfft(res, n=xt.shape[-1], axis=-1)
    mean_value = jnp.mean(corr, axis=1)
    _, lags = lax.top_k(mean_value, TOP_K)
    return lags


def forecast(kp, x_enc, x_mark_enc, x_dec, x_mark_dec):
    B_, T_, N_ = x_enc.shape
    x_cn = jnp.transpose(x_enc, (0, 2, 1)).reshape(B_ * N_, T_).astype(jnp.float32)

    # -------- statistics feeding only the text hard-prompt (numerically dead; DCE'd) ---
    mean_t = jnp.mean(x_cn, axis=-1, keepdims=True)
    std_t = jnp.sqrt(jnp.mean(jnp.square(x_cn - mean_t), axis=-1, keepdims=True) + EPS)
    xs = ((x_cn - mean_t) / std_t)[..., None]
    _min_values = jnp.min(xs, axis=1)
    _max_values = jnp.max(xs, axis=1)
    _medians = jnp.median(xs, axis=1)
    _trends = jnp.sum(jnp.diff(xs, axis=1), axis=1)
    _lags = calcute_lags(xs)
    # TODO(synk): tokenizer + llm_model.get_input_embeddings() on the formatted text prompt
    # have no Pallas equivalent; their result is unused by the numeric output in the reference.

    # -------- fused numeric path (single Pallas kernel) --------
    out2d = fused_forecast(kp, x_cn)                                      # (B*N, pred_len)
    dec_out = jnp.transpose(out2d.reshape(B_, N_, PRED_LEN), (0, 2, 1))   # (B, pred_len, N)
    return dec_out


@jax.jit
def model_forward(kernel_params, x_enc, x_mark_enc, x_dec, x_mark_dec):
    dec_out = forecast(kernel_params, x_enc, x_mark_enc, x_dec, x_mark_dec)
    return dec_out[:, -PRED_LEN:, :]


# -------------------------------------- main --------------------------------------
if __name__ == "__main__":
    key = jax.random.PRNGKey(0)
    k1, k2, k3, k4, kparam = jax.random.split(key, 5)
    x_enc = jax.random.normal(k1, (B, T, N_CH), jnp.float32)
    x_mark_enc = jax.random.normal(k2, (B, T, N_CH), jnp.float32)
    x_dec = jax.random.normal(k3, (B, PRED_LEN, N_CH), jnp.float32)
    x_mark_dec = jax.random.normal(k4, (B, PRED_LEN, N_CH), jnp.float32)

    params = init_params(kparam)
    kernel_params = prepare_kernel_params(params)

    out = model_forward(kernel_params, x_enc, x_mark_enc, x_dec, x_mark_dec)
    out = jax.block_until_ready(out)
    assert out.shape == (B, PRED_LEN, N_CH), out.shape
    assert bool(jnp.all(jnp.isfinite(out)))
    print("KERNEL_OK")
</pallas_src>

<mosaic_0001>
module attributes {stable_mosaic.version = 11 : i64} {
  func.func @_fused_forecast_kernel(%arg0: memref<8x32xf32, #tpu.memory_space<vmem>>, %arg1: memref<32x1024xbf16, #tpu.memory_space<vmem>>, %arg2: memref<1024x64xbf16, #tpu.memory_space<vmem>>, %arg3: memref<2x4x16x4xbf16, #tpu.memory_space<vmem>>, %arg4: memref<2x4x4x16xbf16, #tpu.memory_space<vmem>>, %arg5: memref<2x64x192xbf16, #tpu.memory_space<vmem>>, %arg6: memref<2x1x192xf32, #tpu.memory_space<vmem>>, %arg7: memref<2x64x64xbf16, #tpu.memory_space<vmem>>, %arg8: memref<2x1x64xf32, #tpu.memory_space<vmem>>, %arg9: memref<2x64x256xbf16, #tpu.memory_space<vmem>>, %arg10: memref<2x1x256xf32, #tpu.memory_space<vmem>>, %arg11: memref<2x256x64xbf16, #tpu.memory_space<vmem>>, %arg12: memref<2x1x64xf32, #tpu.memory_space<vmem>>, %arg13: memref<64x8xf32, #tpu.memory_space<vmem>>, %arg14: memref<1x8xf32, #tpu.memory_space<vmem>>, %arg15: memref<8x64xf32, #tpu.memory_space<vmem>>, %arg16: memref<8x64xf32, #tpu.memory_space<vmem>>, %arg17: memref<64x64xbf16, #tpu.memory_space<vmem>>, %arg18: memref<8x8xf32, #tpu.memory_space<vmem>>, %arg19: memref<8x8xf32, #tpu.memory_space<vmem>>, %arg20: memref<8x8xf32, #tpu.memory_space<vmem>>) attributes {dimension_semantics = [], scalar_prefetch = 0 : i64, scratch_operands = 0 : i64, tpu.core_type = #tpu.core_type<tc>} {
    %c0 = arith.constant 0 : index
    %c0_0 = arith.constant 0 : index
    %0 = vector.load %arg0[%c0, %c0_0] : memref<8x32xf32, #tpu.memory_space<vmem>>, vector<8x32xf32>
    %cst = arith.constant dense<0.000000e+00> : vector<8xf32>
    %1 = vector.multi_reduction <add>, %0, %cst [1] : vector<8x32xf32> to vector<8xf32>
    %2 = vector.shape_cast %1 : vector<8xf32> to vector<8x1xf32>
    %cst_1 = arith.constant 3.200000e+01 : f32
    %3 = vector.broadcast %cst_1 : f32 to vector<8x1xf32>
    %4 = arith.divf %2, %3 : vector<8x1xf32>
    %5 = vector.broadcast %4 : vector<8x1xf32> to vector<8x32xf32>
    %6 = arith.subf %0, %5 : vector<8x32xf32>
    %7 = arith.mulf %6, %6 : vector<8x32xf32>
    %cst_2 = arith.constant dense<0.000000e+00> : vector<8xf32>
    %8 = vector.multi_reduction <add>, %7, %cst_2 [1] : vector<8x32xf32> to vector<8xf32>
    %9 = vector.shape_cast %8 : vector<8xf32> to vector<8x1xf32>
    %cst_3 = arith.constant 3.200000e+01 : f32
    %10 = vector.broadcast %cst_3 : f32 to vector<8x1xf32>
    %11 = arith.divf %9, %10 : vector<8x1xf32>
    %cst_4 = arith.constant 9.99999974E-6 : f32
    %12 = vector.broadcast %cst_4 : f32 to vector<8x1xf32>
    %13 = arith.addf %11, %12 : vector<8x1xf32>
    %14 = math.sqrt %13 : vector<8x1xf32>
    %15 = vector.broadcast %4 : vector<8x1xf32> to vector<8x32xf32>
    %16 = arith.subf %0, %15 : vector<8x32xf32>
    %17 = vector.broadcast %14 : vector<8x1xf32> to vector<8x32xf32>
    %18 = arith.divf %16, %17 : vector<8x32xf32>
    %19 = arith.truncf %18 : vector<8x32xf32> to vector<8x32xbf16>
    %c0_5 = arith.constant 0 : index
    %c0_6 = arith.constant 0 : index
    %20 = vector.load %arg1[%c0_5, %c0_6] : memref<32x1024xbf16, #tpu.memory_space<vmem>>, vector<32x1024xbf16>
    %cst_7 = arith.constant dense<0.000000e+00> : vector<8x1024xf32>
    %21 = tpu.matmul %19, %20, %cst_7 {dimension_numbers = #tpu.dot_dimension_numbers<[1], [0], [0], [1], [0, 0, 1, 1], [], []>} : vector<8x32xbf16>, vector<32x1024xbf16>, vector<8x1024xf32> -> vector<8x1024xf32>
    %22 = arith.truncf %21 : vector<8x1024xf32> to vector<8x1024xbf16>
    %c0_8 = arith.constant 0 : index
    %c0_9 = arith.constant 0 : index
    %23 = vector.load %arg2[%c0_8, %c0_9] : memref<1024x64xbf16, #tpu.memory_space<vmem>>, vector<1024x64xbf16>
    %cst_10 = arith.constant dense<0.000000e+00> : vector<8x64xf32>
    %24 = tpu.matmul %22, %23, %cst_10 {dimension_numbers = #tpu.dot_dimension_numbers<[1], [0], [0], [1], [0, 0, 1, 1], [], []>} : vector<8x1024xbf16>, vector<1024x64xbf16>, vector<8x64xf32> -> vector<8x64xf32>
    %25 = arith.truncf %24 : vector<8x64xf32> to vector<8x64xbf16>
    %c0_11 = arith.constant 0 : index
    %c0_12 = arith.constant 0 : index
    %26 = vector.load %arg15[%c0_11, %c0_12] : memref<8x64xf32, #tpu.memory_space<vmem>>, vector<8x64xf32>
    %c0_13 = arith.constant 0 : index
    %c0_14 = arith.constant 0 : index
    %27 = vector.load %arg16[%c0_13, %c0_14] : memref<8x64xf32, #tpu.memory_space<vmem>>, vector<8x64xf32>
    %c0_15 = arith.constant 0 : index
    %c0_16 = arith.constant 0 : index
    %28 = vector.load %arg17[%c0_15, %c0_16] : memref<64x64xbf16, #tpu.memory_space<vmem>>, vector<64x64xbf16>
    %c0_17 = arith.constant 0 : index
    %c0_18 = arith.constant 0 : index
    %29 = vector.load %arg18[%c0_17, %c0_18] : memref<8x8xf32, #tpu.memory_space<vmem>>, vector<8x8xf32>
    %c0_19 = arith.constant 0 : index
    %c0_20 = arith.constant 0 : index
    %30 = vector.load %arg19[%c0_19, %c0_20] : memref<8x8xf32, #tpu.memory_space<vmem>>, vector<8x8xf32>
    %cst_21 = arith.constant dense<0.000000e+00> : vector<8xf32>
    %31 = vector.multi_reduction <add>, %24, %cst_21 [1] : vector<8x64xf32> to vector<8xf32>
    %32 = vector.shape_cast %31 : vector<8xf32> to vector<8x1xf32>
    %cst_22 = arith.constant 6.400000e+01 : f32
    %33 = vector.broadcast %cst_22 : f32 to vector<8x1xf32>
    %34 = arith.divf %32, %33 : vector<8x1xf32>
    %35 = vector.broadcast %34 : vector<8x1xf32> to vector<8x64xf32>
    %36 = arith.subf %24, %35 : vector<8x64xf32>
    %37 = arith.mulf %36, %36 : vector<8x64xf32>
    %cst_23 = arith.constant dense<0.000000e+00> : vector<8xf32>
    %38 = vector.multi_reduction <add>, %37, %cst_23 [1] : vector<8x64xf32> to vector<8xf32>
    %39 = vector.shape_cast %38 : vector<8xf32> to vector<8x1xf32>
    %cst_24 = arith.constant 6.400000e+01 : f32
    %40 = vector.broadcast %cst_24 : f32 to vector<8x1xf32>
    %41 = arith.divf %39, %40 : vector<8x1xf32>
    %42 = vector.broadcast %34 : vector<8x1xf32> to vector<8x64xf32>
    %43 = arith.subf %24, %42 : vector<8x64xf32>
    %cst_25 = arith.constant 9.99999974E-6 : f32
    %44 = vector.broadcast %cst_25 : f32 to vector<8x1xf32>
    %45 = arith.addf %41, %44 : vector<8x1xf32>
    %46 = math.rsqrt %45 : vector<8x1xf32>
    %47 = vector.broadcast %46 : vector<8x1xf32> to vector<8x64xf32>
    %48 = arith.mulf %43, %47 : vector<8x64xf32>
    %49 = arith.truncf %48 : vector<8x64xf32> to vector<8x64xbf16>
    %c0_26 = arith.constant 0 : index
    %c0_27 = arith.constant 0 : index
    %c0_28 = arith.constant 0 : index
    %50 = vector.load %arg5[%c0_26, %c0_27, %c0_28] : memref<2x64x192xbf16, #tpu.memory_space<vmem>>, vector<1x64x192xbf16>
    %51 = vector.shape_cast %50 : vector<1x64x192xbf16> to vector<64x192xbf16>
    %cst_29 = arith.constant dense<0.000000e+00> : vector<8x192xf32>
    %52 = tpu.matmul %49, %51, %cst_29 {dimension_numbers = #tpu.dot_dimension_numbers<[1], [0], [0], [1], [0, 0, 1, 1], [], []>} : vector<8x64xbf16>, vector<64x192xbf16>, vector<8x192xf32> -> vector<8x192xf32>
    %c0_30 = arith.constant 0 : index
    %c0_31 = arith.constant 0 : index
    %c0_32 = arith.constant 0 : index
    %53 = vector.load %arg6[%c0_30, %c0_31, %c0_32] : memref<2x1x192xf32, #tpu.memory_space<vmem>>, vector<1x1x192xf32>
    %54 = vector.shape_cast %53 : vector<1x1x192xf32> to vector<1x192xf32>
    %55 = vector.broadcast %54 : vector<1x192xf32> to vector<8x192xf32>
    %56 = arith.addf %52, %55 : vector<8x192xf32>
    %57 = vector.extract_strided_slice %56 {offsets = [0, 0], sizes = [8, 64], strides = [1, 1]} : vector<8x192xf32> to vector<8x64xf32>
    %58 = vector.extract_strided_slice %56 {offsets = [0, 64], sizes = [8, 64], strides = [1, 1]} : vector<8x192xf32> to vector<8x64xf32>
    %59 = vector.extract_strided_slice %56 {offsets = [0, 128], sizes = [8, 64], strides = [1, 1]} : vector<8x192xf32> to vector<8x64xf32>
    %60 = arith.mulf %57, %26 : vector<8x64xf32>
    %61 = arith.truncf %57 : vector<8x64xf32> to vector<8x64xbf16>
    %cst_33 = arith.constant dense<0.000000e+00> : vector<8x64xf32>
    %62 = tpu.matmul %61, %28, %cst_33 {dimension_numbers = #tpu.dot_dimension_numbers<[1], [0], [0], [1], [0, 0, 1, 1], [], []>} : vector<8x64xbf16>, vector<64x64xbf16>, vector<8x64xf32> -> vector<8x64xf32>
    %63 = arith.mulf %62, %27 : vector<8x64xf32>
    %64 = arith.addf %60, %63 : vector<8x64xf32>
    %65 = arith.mulf %58, %26 : vector<8x64xf32>
    %66 = arith.truncf %58 : vector<8x64xf32> to vector<8x64xbf16>
    %cst_34 = arith.constant dense<0.000000e+00> : vector<8x64xf32>
    %67 = tpu.matmul %66, %28, %cst_34 {dimension_numbers = #tpu.dot_dimension_numbers<[1], [0], [0], [1], [0, 0, 1, 1], [], []>} : vector<8x64xbf16>, vector<64x64xbf16>, vector<8x64xf32> -> vector<8x64xf32>
    %68 = arith.mulf %67, %27 : vector<8x64xf32>
    %69 = arith.addf %65, %68 : vector<8x64xf32>
    %70 = arith.truncf %64 : vector<8x64xf32> to vector<8x64xbf16>
    %71 = arith.truncf %69 : vector<8x64xf32> to vector<8x64xbf16>
    %72 = arith.truncf %59 : vector<8x64xf32> to vector<8x64xbf16>
    %73 = vector.extract_strided_slice %70 {offsets = [0, 0], sizes = [8, 16], strides = [1, 1]} : vector<8x64xbf16> to vector<8x16xbf16>
    %74 = vector.extract_strided_slice %71 {offsets = [0, 0], sizes = [8, 16], strides = [1, 1]} : vector<8x64xbf16> to vector<8x16xbf16>
    %75 = vector.extract_strided_slice %72 {offsets = [0, 0], sizes = [8, 16], strides = [1, 1]} : vector<8x64xbf16> to vector<8x16xbf16>
    %76 = vector.extract_strided_slice %25 {offsets = [0, 0], sizes = [8, 16], strides = [1, 1]} : vector<8x64xbf16> to vector<8x16xbf16>
    %c0_35 = arith.constant 0 : index
    %c0_36 = arith.constant 0 : index
    %c0_37 = arith.constant 0 : index
    %c0_38 = arith.constant 0 : index
    %77 = vector.load %arg3[%c0_35, %c0_36, %c0_37, %c0_38] : memref<2x4x16x4xbf16, #tpu.memory_space<vmem>>, vector<1x1x16x4xbf16>
    %78 = vector.shape_cast %77 : vector<1x1x16x4xbf16> to vector<16x4xbf16>
    %cst_39 = arith.constant dense<0.000000e+00> : vector<8x4xf32>
    %79 = tpu.matmul %73, %78, %cst_39 {dimension_numbers = #tpu.dot_dimension_numbers<[1], [0], [0], [1], [0, 0, 1, 1], [], []>} : vector<8x16xbf16>, vector<16x4xbf16>, vector<8x4xf32> -> vector<8x4xf32>
    %cst_40 = arith.constant dense<0.000000e+00> : vector<8x8xf32>
    %80 = tpu.matmul %73, %76, %cst_40 {dimension_numbers = #tpu.dot_dimension_numbers<[1], [1], [0], [0], [0, 0, 1, 0], [], []>} : vector<8x16xbf16>, vector<8x16xbf16>, vector<8x8xf32> -> vector<8x8xf32>
    %81 = arith.addf %80, %29 : vector<8x8xf32>
    %cst_41 = arith.constant dense<0.000000e+00> : vector<8x8xf32>
    %82 = tpu.matmul %73, %74, %cst_41 {dimension_numbers = #tpu.dot_dimension_numbers<[1], [1], [0], [0], [0, 0, 1, 0], [], []>} : vector<8x16xbf16>, vector<8x16xbf16>, vector<8x8xf32> -> vector<8x8xf32>
    %83 = arith.addf %82, %30 : vector<8x8xf32>
    %cst_42 = arith.constant dense<0xFF800000> : vector<8xf32>
    %84 = vector.multi_reduction <maximumf>, %79, %cst_42 [1] : vector<8x4xf32> to vector<8xf32>
    %85 = vector.shape_cast %84 : vector<8xf32> to vector<8x1xf32>
    %cst_43 = arith.constant dense<0xFF800000> : vector<8xf32>
    %86 = vector.multi_reduction <maximumf>, %81, %cst_43 [1] : vector<8x8xf32> to vector<8xf32>
    %87 = vector.shape_cast %86 : vector<8xf32> to vector<8x1xf32>
    %cst_44 = arith.constant dense<0xFF800000> : vector<8xf32>
    %88 = vector.multi_reduction <maximumf>, %83, %cst_44 [1] : vector<8x8xf32> to vector<8xf32>
    %89 = vector.shape_cast %88 : vector<8xf32> to vector<8x1xf32>
    %90 = arith.maximumf %87, %89 : vector<8x1xf32>
    %91 = arith.maximumf %85, %90 : vector<8x1xf32>
    %92 = vector.broadcast %91 : vector<8x1xf32> to vector<8x4xf32>
    %93 = arith.subf %79, %92 : vector<8x4xf32>
    %94 = math.exp %93 : vector<8x4xf32>
    %95 = vector.broadcast %91 : vector<8x1xf32> to vector<8x8xf32>
    %96 = arith.subf %81, %95 : vector<8x8xf32>
    %97 = math.exp %96 : vector<8x8xf32>
    %98 = vector.broadcast %91 : vector<8x1xf32> to vector<8x8xf32>
    %99 = arith.subf %83, %98 : vector<8x8xf32>
    %100 = math.exp %99 : vector<8x8xf32>
    %cst_45 = arith.constant dense<0.000000e+00> : vector<8xf32>
    %101 = vector.multi_reduction <add>, %94, %cst_45 [1] : vector<8x4xf32> to vector<8xf32>
    %102 = vector.shape_cast %101 : vector<8xf32> to vector<8x1xf32>
    %cst_46 = arith.constant dense<0.000000e+00> : vector<8xf32>
    %103 = vector.multi_reduction <add>, %97, %cst_46 [1] : vector<8x8xf32> to vector<8xf32>
    %104 = vector.shape_cast %103 : vector<8xf32> to vector<8x1xf32>
    %105 = arith.addf %102, %104 : vector<8x1xf32>
    %cst_47 = arith.constant dense<0.000000e+00> : vector<8xf32>
    %106 = vector.multi_reduction <add>, %100, %cst_47 [1] : vector<8x8xf32> to vector<8xf32>
    %107 = vector.shape_cast %106 : vector<8xf32> to vector<8x1xf32>
    %108 = arith.addf %105, %107 : vector<8x1xf32>
    %109 = arith.truncf %94 : vector<8x4xf32> to vector<8x4xbf16>
    %c0_48 = arith.constant 0 : index
    %c0_49 = arith.constant 0 : index
    %c0_50 = arith.constant 0 : index
    %c0_51 = arith.constant 0 : index
    %110 = vector.load %arg4[%c0_48, %c0_49, %c0_50, %c0_51] : memref<2x4x4x16xbf16, #tpu.memory_space<vmem>>, vector<1x1x4x16xbf16>
    %111 = vector.shape_cast %110 : vector<1x1x4x16xbf16> to vector<4x16xbf16>
    %cst_52 = arith.constant dense<0.000000e+00> : vector<8x16xf32>
    %112 = tpu.matmul %109, %111, %cst_52 {dimension_numbers = #tpu.dot_dimension_numbers<[1], [0], [0], [1], [0, 0, 1, 1], [], []>} : vector<8x4xbf16>, vector<4x16xbf16>, vector<8x16xf32> -> vector<8x16xf32>
    %113 = arith.truncf %97 : vector<8x8xf32> to vector<8x8xbf16>
    %cst_53 = arith.constant dense<0.000000e+00> : vector<8x16xf32>
    %114 = tpu.matmul %113, %76, %cst_53 {dimension_numbers = #tpu.dot_dimension_numbers<[1], [0], [0], [1], [0, 0, 1, 1], [], []>} : vector<8x8xbf16>, vector<8x16xbf16>, vector<8x16xf32> -> vector<8x16xf32>
    %115 = arith.addf %112, %114 : vector<8x16xf32>
    %116 = arith.truncf %100 : vector<8x8xf32> to vector<8x8xbf16>
    %cst_54 = arith.constant dense<0.000000e+00> : vector<8x16xf32>
    %117 = tpu.matmul %116, %75, %cst_54 {dimension_numbers = #tpu.dot_dimension_numbers<[1], [0], [0], [1], [0, 0, 1, 1], [], []>} : vector<8x8xbf16>, vector<8x16xbf16>, vector<8x16xf32> -> vector<8x16xf32>
    %118 = arith.addf %115, %117 : vector<8x16xf32>
    %119 = tpu.reciprocal %108 {approx = true} : vector<8x1xf32> -> vector<8x1xf32>
    %120 = vector.broadcast %119 : vector<8x1xf32> to vector<8x16xf32>
    %121 = arith.mulf %118, %120 : vector<8x16xf32>
    %122 = vector.extract_strided_slice %70 {offsets = [0, 16], sizes = [8, 16], strides = [1, 1]} : vector<8x64xbf16> to vector<8x16xbf16>
    %123 = vector.extract_strided_slice %71 {offsets = [0, 16], sizes = [8, 16], strides = [1, 1]} : vector<8x64xbf16> to vector<8x16xbf16>
    %124 = vector.extract_strided_slice %72 {offsets = [0, 16], sizes = [8, 16], strides = [1, 1]} : vector<8x64xbf16> to vector<8x16xbf16>
    %125 = vector.extract_strided_slice %25 {offsets = [0, 16], sizes = [8, 16], strides = [1, 1]} : vector<8x64xbf16> to vector<8x16xbf16>
    %c0_55 = arith.constant 0 : index
    %c1 = arith.constant 1 : index
    %c0_56 = arith.constant 0 : index
    %c0_57 = arith.constant 0 : index
    %126 = vector.load %arg3[%c0_55, %c1, %c0_56, %c0_57] : memref<2x4x16x4xbf16, #tpu.memory_space<vmem>>, vector<1x1x16x4xbf16>
    %127 = vector.shape_cast %126 : vector<1x1x16x4xbf16> to vector<16x4xbf16>
    %cst_58 = arith.constant dense<0.000000e+00> : vector<8x4xf32>
    %128 = tpu.matmul %122, %127, %cst_58 {dimension_numbers = #tpu.dot_dimension_numbers<[1], [0], [0], [1], [0, 0, 1, 1], [], []>} : vector<8x16xbf16>, vector<16x4xbf16>, vector<8x4xf32> -> vector<8x4xf32>
    %cst_59 = arith.constant dense<0.000000e+00> : vector<8x8xf32>
    %129 = tpu.matmul %122, %125, %cst_59 {dimension_numbers = #tpu.dot_dimension_numbers<[1], [1], [0], [0], [0, 0, 1, 0], [], []>} : vector<8x16xbf16>, vector<8x16xbf16>, vector<8x8xf32> -> vector<8x8xf32>
    %130 = arith.addf %129, %29 : vector<8x8xf32>
    %cst_60 = arith.constant dense<0.000000e+00> : vector<8x8xf32>
    %131 = tpu.matmul %122, %123, %cst_60 {dimension_numbers = #tpu.dot_dimension_numbers<[1], [1], [0], [0], [0, 0, 1, 0], [], []>} : vector<8x16xbf16>, vector<8x16xbf16>, vector<8x8xf32> -> vector<8x8xf32>
    %132 = arith.addf %131, %30 : vector<8x8xf32>
    %cst_61 = arith.constant dense<0xFF800000> : vector<8xf32>
    %133 = vector.multi_reduction <maximumf>, %128, %cst_61 [1] : vector<8x4xf32> to vector<8xf32>
    %134 = vector.shape_cast %133 : vector<8xf32> to vector<8x1xf32>
    %cst_62 = arith.constant dense<0xFF800000> : vector<8xf32>
    %135 = vector.multi_reduction <maximumf>, %130, %cst_62 [1] : vector<8x8xf32> to vector<8xf32>
    %136 = vector.shape_cast %135 : vector<8xf32> to vector<8x1xf32>
    %cst_63 = arith.constant dense<0xFF800000> : vector<8xf32>
    %137 = vector.multi_reduction <maximumf>, %132, %cst_63 [1] : vector<8x8xf32> to vector<8xf32>
    %138 = vector.shape_cast %137 : vector<8xf32> to vector<8x1xf32>
    %139 = arith.maximumf %136, %138 : vector<8x1xf32>
    %140 = arith.maximumf %134, %139 : vector<8x1xf32>
    %141 = vector.broadcast %140 : vector<8x1xf32> to vector<8x4xf32>
    %142 = arith.subf %128, %141 : vector<8x4xf32>
    %143 = math.exp %142 : vector<8x4xf32>
    %144 = vector.broadcast %140 : vector<8x1xf32> to vector<8x8xf32>
    %145 = arith.subf %130, %144 : vector<8x8xf32>
    %146 = math.exp %145 : vector<8x8xf32>
    %147 = vector.broadcast %140 : vector<8x1xf32> to vector<8x8xf32>
    %148 = arith.subf %132, %147 : vector<8x8xf32>
    %149 = math.exp %148 : vector<8x8xf32>
    %cst_64 = arith.constant dense<0.000000e+00> : vector<8xf32>
    %150 = vector.multi_reduction <add>, %143, %cst_64 [1] : vector<8x4xf32> to vector<8xf32>
    %151 = vector.shape_cast %150 : vector<8xf32> to vector<8x1xf32>
    %cst_65 = arith.constant dense<0.000000e+00> : vector<8xf32>
    %152 = vector.multi_reduction <add>, %146, %cst_65 [1] : vector<8x8xf32> to vector<8xf32>
    %153 = vector.shape_cast %152 : vector<8xf32> to vector<8x1xf32>
    %154 = arith.addf %151, %153 : vector<8x1xf32>
    %cst_66 = arith.constant dense<0.000000e+00> : vector<8xf32>
    %155 = vector.multi_reduction <add>, %149, %cst_66 [1] : vector<8x8xf32> to vector<8xf32>
    %156 = vector.shape_cast %155 : vector<8xf32> to vector<8x1xf32>
    %157 = arith.addf %154, %156 : vector<8x1xf32>
    %158 = arith.truncf %143 : vector<8x4xf32> to vector<8x4xbf16>
    %c0_67 = arith.constant 0 : index
    %c1_68 = arith.constant 1 : index
    %c0_69 = arith.constant 0 : index
    %c0_70 = arith.constant 0 : index
    %159 = vector.load %arg4[%c0_67, %c1_68, %c0_69, %c0_70] : memref<2x4x4x16xbf16, #tpu.memory_space<vmem>>, vector<1x1x4x16xbf16>
    %160 = vector.shape_cast %159 : vector<1x1x4x16xbf16> to vector<4x16xbf16>
    %cst_71 = arith.constant dense<0.000000e+00> : vector<8x16xf32>
    %161 = tpu.matmul %158, %160, %cst_71 {dimension_numbers = #tpu.dot_dimension_numbers<[1], [0], [0], [1], [0, 0, 1, 1], [], []>} : vector<8x4xbf16>, vector<4x16xbf16>, vector<8x16xf32> -> vector<8x16xf32>
    %162 = arith.truncf %146 : vector<8x8xf32> to vector<8x8xbf16>
    %cst_72 = arith.constant dense<0.000000e+00> : vector<8x16xf32>
    %163 = tpu.matmul %162, %125, %cst_72 {dimension_numbers = #tpu.dot_dimension_numbers<[1], [0], [0], [1], [0, 0, 1, 1], [], []>} : vector<8x8xbf16>, vector<8x16xbf16>, vector<8x16xf32> -> vector<8x16xf32>
    %164 = arith.addf %161, %163 : vector<8x16xf32>
    %165 = arith.truncf %149 : vector<8x8xf32> to vector<8x8xbf16>
    %cst_73 = arith.constant dense<0.000000e+00> : vector<8x16xf32>
    %166 = tpu.matmul %165, %124, %cst_73 {dimension_numbers = #tpu.dot_dimension_numbers<[1], [0], [0], [1], [0, 0, 1, 1], [], []>} : vector<8x8xbf16>, vector<8x16xbf16>, vector<8x16xf32> -> vector<8x16xf32>
    %167 = arith.addf %164, %166 : vector<8x16xf32>
    %168 = tpu.reciprocal %157 {approx = true} : vector<8x1xf32> -> vector<8x1xf32>
    %169 = vector.broadcast %168 : vector<8x1xf32> to vector<8x16xf32>
    %170 = arith.mulf %167, %169 : vector<8x16xf32>
    %171 = vector.extract_strided_slice %70 {offsets = [0, 32], sizes = [8, 16], strides = [1, 1]} : vector<8x64xbf16> to vector<8x16xbf16>
    %172 = vector.extract_strided_slice %71 {offsets = [0, 32], sizes = [8, 16], strides = [1, 1]} : vector<8x64xbf16> to vector<8x16xbf16>
    %173 = vector.extract_strided_slice %72 {offsets = [0, 32], sizes = [8, 16], strides = [1, 1]} : vector<8x64xbf16> to vector<8x16xbf16>
    %174 = vector.extract_strided_slice %25 {offsets = [0, 32], sizes = [8, 16], strides = [1, 1]} : vector<8x64xbf16> to vector<8x16xbf16>
    %c0_74 = arith.constant 0 : index
    %c2 = arith.constant 2 : index
    %c0_75 = arith.constant 0 : index
    %c0_76 = arith.constant 0 : index
    %175 = vector.load %arg3[%c0_74, %c2, %c0_75, %c0_76] : memref<2x4x16x4xbf16, #tpu.memory_space<vmem>>, vector<1x1x16x4xbf16>
    %176 = vector.shape_cast %175 : vector<1x1x16x4xbf16> to vector<16x4xbf16>
    %cst_77 = arith.constant dense<0.000000e+00> : vector<8x4xf32>
    %177 = tpu.matmul %171, %176, %cst_77 {dimension_numbers = #tpu.dot_dimension_numbers<[1], [0], [0], [1], [0, 0, 1, 1], [], []>} : vector<8x16xbf16>, vector<16x4xbf16>, vector<8x4xf32> -> vector<8x4xf32>
    %cst_78 = arith.constant dense<0.000000e+00> : vector<8x8xf32>
    %178 = tpu.matmul %171, %174, %cst_78 {dimension_numbers = #tpu.dot_dimension_numbers<[1], [1], [0], [0], [0, 0, 1, 0], [], []>} : vector<8x16xbf16>, vector<8x16xbf16>, vector<8x8xf32> -> vector<8x8xf32>
    %179 = arith.addf %178, %29 : vector<8x8xf32>
    %cst_79 = arith.constant dense<0.000000e+00> : vector<8x8xf32>
    %180 = tpu.matmul %171, %172, %cst_79 {dimension_numbers = #tpu.dot_dimension_numbers<[1], [1], [0], [0], [0, 0, 1, 0], [], []>} : vector<8x16xbf16>, vector<8x16xbf16>, vector<8x8xf32> -> vector<8x8xf32>
    %181 = arith.addf %180, %30 : vector<8x8xf32>
    %cst_80 = arith.constant dense<0xFF800000> : vector<8xf32>
    %182 = vector.multi_reduction <maximumf>, %177, %cst_80 [1] : vector<8x4xf32> to vector<8xf32>
    %183 = vector.shape_cast %182 : vector<8xf32> to vector<8x1xf32>
    %cst_81 = arith.constant dense<0xFF800000> : vector<8xf32>
    %184 = vector.multi_reduction <maximumf>, %179, %cst_81 [1] : vector<8x8xf32> to vector<8xf32>
    %185 = vector.shape_cast %184 : vector<8xf32> to vector<8x1xf32>
    %cst_82 = arith.constant dense<0xFF800000> : vector<8xf32>
    %186 = vector.multi_reduction <maximumf>, %181, %cst_82 [1] : vector<8x8xf32> to vector<8xf32>
    %187 = vector.shape_cast %186 : vector<8xf32> to vector<8x1xf32>
    %188 = arith.maximumf %185, %187 : vector<8x1xf32>
    %189 = arith.maximumf %183, %188 : vector<8x1xf32>
    %190 = vector.broadcast %189 : vector<8x1xf32> to vector<8x4xf32>
    %191 = arith.subf %177, %190 : vector<8x4xf32>
    %192 = math.exp %191 : vector<8x4xf32>
    %193 = vector.broadcast %189 : vector<8x1xf32> to vector<8x8xf32>
    %194 = arith.subf %179, %193 : vector<8x8xf32>
    %195 = math.exp %194 : vector<8x8xf32>
    %196 = vector.broadcast %189 : vector<8x1xf32> to vector<8x8xf32>
    %197 = arith.subf %181, %196 : vector<8x8xf32>
    %198 = math.exp %197 : vector<8x8xf32>
    %cst_83 = arith.constant dense<0.000000e+00> : vector<8xf32>
    %199 = vector.multi_reduction <add>, %192, %cst_83 [1] : vector<8x4xf32> to vector<8xf32>
    %200 = vector.shape_cast %199 : vector<8xf32> to vector<8x1xf32>
    %cst_84 = arith.constant dense<0.000000e+00> : vector<8xf32>
    %201 = vector.multi_reduction <add>, %195, %cst_84 [1] : vector<8x8xf32> to vector<8xf32>
    %202 = vector.shape_cast %201 : vector<8xf32> to vector<8x1xf32>
    %203 = arith.addf %200, %202 : vector<8x1xf32>
    %cst_85 = arith.constant dense<0.000000e+00> : vector<8xf32>
    %204 = vector.multi_reduction <add>, %198, %cst_85 [1] : vector<8x8xf32> to vector<8xf32>
    %205 = vector.shape_cast %204 : vector<8xf32> to vector<8x1xf32>
    %206 = arith.addf %203, %205 : vector<8x1xf32>
    %207 = arith.truncf %192 : vector<8x4xf32> to vector<8x4xbf16>
    %c0_86 = arith.constant 0 : index
    %c2_87 = arith.constant 2 : index
    %c0_88 = arith.constant 0 : index
    %c0_89 = arith.constant 0 : index
    %208 = vector.load %arg4[%c0_86, %c2_87, %c0_88, %c0_89] : memref<2x4x4x16xbf16, #tpu.memory_space<vmem>>, vector<1x1x4x16xbf16>
    %209 = vector.shape_cast %208 : vector<1x1x4x16xbf16> to vector<4x16xbf16>
    %cst_90 = arith.constant dense<0.000000e+00> : vector<8x16xf32>
    %210 = tpu.matmul %207, %209, %cst_90 {dimension_numbers = #tpu.dot_dimension_numbers<[1], [0], [0], [1], [0, 0, 1, 1], [], []>} : vector<8x4xbf16>, vector<4x16xbf16>, vector<8x16xf32> -> vector<8x16xf32>
    %211 = arith.truncf %195 : vector<8x8xf32> to vector<8x8xbf16>
    %cst_91 = arith.constant dense<0.000000e+00> : vector<8x16xf32>
    %212 = tpu.matmul %211, %174, %cst_91 {dimension_numbers = #tpu.dot_dimension_numbers<[1], [0], [0], [1], [0, 0, 1, 1], [], []>} : vector<8x8xbf16>, vector<8x16xbf16>, vector<8x16xf32> -> vector<8x16xf32>
    %213 = arith.addf %210, %212 : vector<8x16xf32>
    %214 = arith.truncf %198 : vector<8x8xf32> to vector<8x8xbf16>
    %cst_92 = arith.constant dense<0.000000e+00> : vector<8x16xf32>
    %215 = tpu.matmul %214, %173, %cst_92 {dimension_numbers = #tpu.dot_dimension_numbers<[1], [0], [0], [1], [0, 0, 1, 1], [], []>} : vector<8x8xbf16>, vector<8x16xbf16>, vector<8x16xf32> -> vector<8x16xf32>
    %216 = arith.addf %213, %215 : vector<8x16xf32>
    %217 = tpu.reciprocal %206 {approx = true} : vector<8x1xf32> -> vector<8x1xf32>
    %218 = vector.broadcast %217 : vector<8x1xf32> to vector<8x16xf32>
    %219 = arith.mulf %216, %218 : vector<8x16xf32>
    %220 = vector.extract_strided_slice %70 {offsets = [0, 48], sizes = [8, 16], strides = [1, 1]} : vector<8x64xbf16> to vector<8x16xbf16>
    %221 = vector.extract_strided_slice %71 {offsets = [0, 48], sizes = [8, 16], strides = [1, 1]} : vector<8x64xbf16> to vector<8x16xbf16>
    %222 = vector.extract_strided_slice %72 {offsets = [0, 48], sizes = [8, 16], strides = [1, 1]} : vector<8x64xbf16> to vector<8x16xbf16>
    %223 = vector.extract_strided_slice %25 {offsets = [0, 48], sizes = [8, 16], strides = [1, 1]} : vector<8x64xbf16> to vector<8x16xbf16>
    %c0_93 = arith.constant 0 : index
    %c3 = arith.constant 3 : index
    %c0_94 = arith.constant 0 : index
    %c0_95 = arith.constant 0 : index
    %224 = vector.load %arg3[%c0_93, %c3, %c0_94, %c0_95] : memref<2x4x16x4xbf16, #tpu.memory_space<vmem>>, vector<1x1x16x4xbf16>
    %225 = vector.shape_cast %224 : vector<1x1x16x4xbf16> to vector<16x4xbf16>
    %cst_96 = arith.constant dense<0.000000e+00> : vector<8x4xf32>
    %226 = tpu.matmul %220, %225, %cst_96 {dimension_numbers = #tpu.dot_dimension_numbers<[1], [0], [0], [1], [0, 0, 1, 1], [], []>} : vector<8x16xbf16>, vector<16x4xbf16>, vector<8x4xf32> -> vector<8x4xf32>
    %cst_97 = arith.constant dense<0.000000e+00> : vector<8x8xf32>
    %227 = tpu.matmul %220, %223, %cst_97 {dimension_numbers = #tpu.dot_dimension_numbers<[1], [1], [0], [0], [0, 0, 1, 0], [], []>} : vector<8x16xbf16>, vector<8x16xbf16>, vector<8x8xf32> -> vector<8x8xf32>
    %228 = arith.addf %227, %29 : vector<8x8xf32>
    %cst_98 = arith.constant dense<0.000000e+00> : vector<8x8xf32>
    %229 = tpu.matmul %220, %221, %cst_98 {dimension_numbers = #tpu.dot_dimension_numbers<[1], [1], [0], [0], [0, 0, 1, 0], [], []>} : vector<8x16xbf16>, vector<8x16xbf16>, vector<8x8xf32> -> vector<8x8xf32>
    %230 = arith.addf %229, %30 : vector<8x8xf32>
    %cst_99 = arith.constant dense<0xFF800000> : vector<8xf32>
    %231 = vector.multi_reduction <maximumf>, %226, %cst_99 [1] : vector<8x4xf32> to vector<8xf32>
    %232 = vector.shape_cast %231 : vector<8xf32> to vector<8x1xf32>
    %cst_100 = arith.constant dense<0xFF800000> : vector<8xf32>
    %233 = vector.multi_reduction <maximumf>, %228, %cst_100 [1] : vector<8x8xf32> to vector<8xf32>
    %234 = vector.shape_cast %233 : vector<8xf32> to vector<8x1xf32>
    %cst_101 = arith.constant dense<0xFF800000> : vector<8xf32>
    %235 = vector.multi_reduction <maximumf>, %230, %cst_101 [1] : vector<8x8xf32> to vector<8xf32>
    %236 = vector.shape_cast %235 : vector<8xf32> to vector<8x1xf32>
    %237 = arith.maximumf %234, %236 : vector<8x1xf32>
    %238 = arith.maximumf %232, %237 : vector<8x1xf32>
    %239 = vector.broadcast %238 : vector<8x1xf32> to vector<8x4xf32>
    %240 = arith.subf %226, %239 : vector<8x4xf32>
    %241 = math.exp %240 : vector<8x4xf32>
    %242 = vector.broadcast %238 : vector<8x1xf32> to vector<8x8xf32>
    %243 = arith.subf %228, %242 : vector<8x8xf32>
    %244 = math.exp %243 : vector<8x8xf32>
    %245 = vector.broadcast %238 : vector<8x1xf32> to vector<8x8xf32>
    %246 = arith.subf %230, %245 : vector<8x8xf32>
    %247 = math.exp %246 : vector<8x8xf32>
    %cst_102 = arith.constant dense<0.000000e+00> : vector<8xf32>
    %248 = vector.multi_reduction <add>, %241, %cst_102 [1] : vector<8x4xf32> to vector<8xf32>
    %249 = vector.shape_cast %248 : vector<8xf32> to vector<8x1xf32>
    %cst_103 = arith.constant dense<0.000000e+00> : vector<8xf32>
    %250 = vector.multi_reduction <add>, %244, %cst_103 [1] : vector<8x8xf32> to vector<8xf32>
    %251 = vector.shape_cast %250 : vector<8xf32> to vector<8x1xf32>
    %252 = arith.addf %249, %251 : vector<8x1xf32>
    %cst_104 = arith.constant dense<0.000000e+00> : vector<8xf32>
    %253 = vector.multi_reduction <add>, %247, %cst_104 [1] : vector<8x8xf32> to vector<8xf32>
    %254 = vector.shape_cast %253 : vector<8xf32> to vector<8x1xf32>
    %255 = arith.addf %252, %254 : vector<8x1xf32>
    %256 = arith.truncf %241 : vector<8x4xf32> to vector<8x4xbf16>
    %c0_105 = arith.constant 0 : index
    %c3_106 = arith.constant 3 : index
    %c0_107 = arith.constant 0 : index
    %c0_108 = arith.constant 0 : index
    %257 = vector.load %arg4[%c0_105, %c3_106, %c0_107, %c0_108] : memref<2x4x4x16xbf16, #tpu.memory_space<vmem>>, vector<1x1x4x16xbf16>
    %258 = vector.shape_cast %257 : vector<1x1x4x16xbf16> to vector<4x16xbf16>
    %cst_109 = arith.constant dense<0.000000e+00> : vector<8x16xf32>
    %259 = tpu.matmul %256, %258, %cst_109 {dimension_numbers = #tpu.dot_dimension_numbers<[1], [0], [0], [1], [0, 0, 1, 1], [], []>} : vector<8x4xbf16>, vector<4x16xbf16>, vector<8x16xf32> -> vector<8x16xf32>
    %260 = arith.truncf %244 : vector<8x8xf32> to vector<8x8xbf16>
    %cst_110 = arith.constant dense<0.000000e+00> : vector<8x16xf32>
    %261 = tpu.matmul %260, %223, %cst_110 {dimension_numbers = #tpu.dot_dimension_numbers<[1], [0], [0], [1], [0, 0, 1, 1], [], []>} : vector<8x8xbf16>, vector<8x16xbf16>, vector<8x16xf32> -> vector<8x16xf32>
    %262 = arith.addf %259, %261 : vector<8x16xf32>
    %263 = arith.truncf %247 : vector<8x8xf32> to vector<8x8xbf16>
    %cst_111 = arith.constant dense<0.000000e+00> : vector<8x16xf32>
    %264 = tpu.matmul %263, %222, %cst_111 {dimension_numbers = #tpu.dot_dimension_numbers<[1], [0], [0], [1], [0, 0, 1, 1], [], []>} : vector<8x8xbf16>, vector<8x16xbf16>, vector<8x16xf32> -> vector<8x16xf32>
    %265 = arith.addf %262, %264 : vector<8x16xf32>
    %266 = tpu.reciprocal %255 {approx = true} : vector<8x1xf32> -> vector<8x1xf32>
    %267 = vector.broadcast %266 : vector<8x1xf32> to vector<8x16xf32>
    %268 = arith.mulf %265, %267 : vector<8x16xf32>
    %269 = tpu.concatenate %121, %170, %219, %268 in 1 : vector<8x16xf32>, vector<8x16xf32>, vector<8x16xf32>, vector<8x16xf32> -> vector<8x64xf32>
    %270 = arith.truncf %269 : vector<8x64xf32> to vector<8x64xbf16>
    %c0_112 = arith.constant 0 : index
    %c0_113 = arith.constant 0 : index
    %c0_114 = arith.constant 0 : index
    %271 = vector.load %arg7[%c0_112, %c0_113, %c0_114] : memref<2x64x64xbf16, #tpu.memory_space<vmem>>, vector<1x64x64xbf16>
    %272 = vector.shape_cast %271 : vector<1x64x64xbf16> to vector<64x64xbf16>
    %cst_115 = arith.constant dense<0.000000e+00> : vector<8x64xf32>
    %273 = tpu.matmul %270, %272, %cst_115 {dimension_numbers = #tpu.dot_dimension_numbers<[1], [0], [0], [1], [0, 0, 1, 1], [], []>} : vector<8x64xbf16>, vector<64x64xbf16>, vector<8x64xf32> -> vector<8x64xf32>
    %c0_116 = arith.constant 0 : index
    %c0_117 = arith.constant 0 : index
    %c0_118 = arith.constant 0 : index
    %274 = vector.load %arg8[%c0_116, %c0_117, %c0_118] : memref<2x1x64xf32, #tpu.memory_space<vmem>>, vector<1x1x64xf32>
    %275 = vector.shape_cast %274 : vector<1x1x64xf32> to vector<1x64xf32>
    %276 = vector.broadcast %275 : vector<1x64xf32> to vector<8x64xf32>
    %277 = arith.addf %273, %276 : vector<8x64xf32>
    %c0_119 = arith.constant 0 : index
    %c0_120 = arith.constant 0 : index
    %c0_121 = arith.constant 0 : index
    %278 = vector.load %arg9[%c0_119, %c0_120, %c0_121] : memref<2x64x256xbf16, #tpu.memory_space<vmem>>, vector<1x64x256xbf16>
    %279 = vector.shape_cast %278 : vector<1x64x256xbf16> to vector<64x256xbf16>
    %cst_122 = arith.constant dense<0.000000e+00> : vector<8x256xf32>
    %280 = tpu.matmul %49, %279, %cst_122 {dimension_numbers = #tpu.dot_dimension_numbers<[1], [0], [0], [1], [0, 0, 1, 1], [], []>} : vector<8x64xbf16>, vector<64x256xbf16>, vector<8x256xf32> -> vector<8x256xf32>
    %c0_123 = arith.constant 0 : index
    %c0_124 = arith.constant 0 : index
    %c0_125 = arith.constant 0 : index
    %281 = vector.load %arg10[%c0_123, %c0_124, %c0_125] : memref<2x1x256xf32, #tpu.memory_space<vmem>>, vector<1x1x256xf32>
    %282 = vector.shape_cast %281 : vector<1x1x256xf32> to vector<1x256xf32>
    %283 = vector.broadcast %282 : vector<1x256xf32> to vector<8x256xf32>
    %284 = arith.addf %280, %283 : vector<8x256xf32>
    %285 = arith.mulf %284, %284 : vector<8x256xf32>
    %286 = arith.mulf %284, %285 : vector<8x256xf32>
    %cst_126 = arith.constant 4.471500e-02 : f32
    %287 = vector.broadcast %cst_126 : f32 to vector<8x256xf32>
    %288 = arith.mulf %287, %286 : vector<8x256xf32>
    %289 = arith.addf %284, %288 : vector<8x256xf32>
    %cst_127 = arith.constant 0.797884583 : f32
    %290 = vector.broadcast %cst_127 : f32 to vector<8x256xf32>
    %291 = arith.mulf %290, %289 : vector<8x256xf32>
    %292 = math.tanh %291 : vector<8x256xf32>
    %cst_128 = arith.constant 1.000000e+00 : f32
    %293 = vector.broadcast %cst_128 : f32 to vector<8x256xf32>
    %294 = arith.addf %293, %292 : vector<8x256xf32>
    %cst_129 = arith.constant 5.000000e-01 : f32
    %295 = vector.broadcast %cst_129 : f32 to vector<8x256xf32>
    %296 = arith.mulf %295, %294 : vector<8x256xf32>
    %297 = arith.mulf %284, %296 : vector<8x256xf32>
    %298 = arith.truncf %297 : vector<8x256xf32> to vector<8x256xbf16>
    %c0_130 = arith.constant 0 : index
    %c0_131 = arith.constant 0 : index
    %c0_132 = arith.constant 0 : index
    %299 = vector.load %arg11[%c0_130, %c0_131, %c0_132] : memref<2x256x64xbf16, #tpu.memory_space<vmem>>, vector<1x256x64xbf16>
    %300 = vector.shape_cast %299 : vector<1x256x64xbf16> to vector<256x64xbf16>
    %cst_133 = arith.constant dense<0.000000e+00> : vector<8x64xf32>
    %301 = tpu.matmul %298, %300, %cst_133 {dimension_numbers = #tpu.dot_dimension_numbers<[1], [0], [0], [1], [0, 0, 1, 1], [], []>} : vector<8x256xbf16>, vector<256x64xbf16>, vector<8x64xf32> -> vector<8x64xf32>
    %c0_134 = arith.constant 0 : index
    %c0_135 = arith.constant 0 : index
    %c0_136 = arith.constant 0 : index
    %302 = vector.load %arg12[%c0_134, %c0_135, %c0_136] : memref<2x1x64xf32, #tpu.memory_space<vmem>>, vector<1x1x64xf32>
    %303 = vector.shape_cast %302 : vector<1x1x64xf32> to vector<1x64xf32>
    %304 = vector.broadcast %303 : vector<1x64xf32> to vector<8x64xf32>
    %305 = arith.addf %301, %304 : vector<8x64xf32>
    %306 = arith.addf %277, %305 : vector<8x64xf32>
    %307 = arith.addf %306, %24 : vector<8x64xf32>
    %cst_137 = arith.constant dense<0.000000e+00> : vector<8xf32>
    %308 = vector.multi_reduction <add>, %307, %cst_137 [1] : vector<8x64xf32> to vector<8xf32>
    %309 = vector.shape_cast %308 : vector<8xf32> to vector<8x1xf32>
    %cst_138 = arith.constant 6.400000e+01 : f32
    %310 = vector.broadcast %cst_138 : f32 to vector<8x1xf32>
    %311 = arith.divf %309, %310 : vector<8x1xf32>
    %312 = vector.broadcast %311 : vector<8x1xf32> to vector<8x64xf32>
    %313 = arith.subf %307, %312 : vector<8x64xf32>
    %314 = arith.mulf %313, %313 : vector<8x64xf32>
    %cst_139 = arith.constant dense<0.000000e+00> : vector<8xf32>
    %315 = vector.multi_reduction <add>, %314, %cst_139 [1] : vector<8x64xf32> to vector<8xf32>
    %316 = vector.shape_cast %315 : vector<8xf32> to vector<8x1xf32>
    %cst_140 = arith.constant 6.400000e+01 : f32
    %317 = vector.broadcast %cst_140 : f32 to vector<8x1xf32>
    %318 = arith.divf %316, %317 : vector<8x1xf32>
    %319 = vector.broadcast %311 : vector<8x1xf32> to vector<8x64xf32>
    %320 = arith.subf %307, %319 : vector<8x64xf32>
    %cst_141 = arith.constant 9.99999974E-6 : f32
    %321 = vector.broadcast %cst_141 : f32 to vector<8x1xf32>
    %322 = arith.addf %318, %321 : vector<8x1xf32>
    %323 = math.rsqrt %322 : vector<8x1xf32>
    %324 = vector.broadcast %323 : vector<8x1xf32> to vector<8x64xf32>
    %325 = arith.mulf %320, %324 : vector<8x64xf32>
    %326 = arith.truncf %325 : vector<8x64xf32> to vector<8x64xbf16>
    %c1_142 = arith.constant 1 : index
    %c0_143 = arith.constant 0 : index
    %c0_144 = arith.constant 0 : index
    %327 = vector.load %arg5[%c1_142, %c0_143, %c0_144] : memref<2x64x192xbf16, #tpu.memory_space<vmem>>, vector<1x64x192xbf16>
    %328 = vector.shape_cast %327 : vector<1x64x192xbf16> to vector<64x192xbf16>
    %cst_145 = arith.constant dense<0.000000e+00> : vector<8x192xf32>
    %329 = tpu.matmul %326, %328, %cst_145 {dimension_numbers = #tpu.dot_dimension_numbers<[1], [0], [0], [1], [0, 0, 1, 1], [], []>} : vector<8x64xbf16>, vector<64x192xbf16>, vector<8x192xf32> -> vector<8x192xf32>
    %c1_146 = arith.constant 1 : index
    %c0_147 = arith.constant 0 : index
    %c0_148 = arith.constant 0 : index
    %330 = vector.load %arg6[%c1_146, %c0_147, %c0_148] : memref<2x1x192xf32, #tpu.memory_space<vmem>>, vector<1x1x192xf32>
    %331 = vector.shape_cast %330 : vector<1x1x192xf32> to vector<1x192xf32>
    %332 = vector.broadcast %331 : vector<1x192xf32> to vector<8x192xf32>
    %333 = arith.addf %329, %332 : vector<8x192xf32>
    %334 = vector.extract_strided_slice %333 {offsets = [0, 0], sizes = [8, 64], strides = [1, 1]} : vector<8x192xf32> to vector<8x64xf32>
    %335 = vector.extract_strided_slice %333 {offsets = [0, 64], sizes = [8, 64], strides = [1, 1]} : vector<8x192xf32> to vector<8x64xf32>
    %336 = vector.extract_strided_slice %333 {offsets = [0, 128], sizes = [8, 64], strides = [1, 1]} : vector<8x192xf32> to vector<8x64xf32>
    %337 = arith.mulf %334, %26 : vector<8x64xf32>
    %338 = arith.truncf %334 : vector<8x64xf32> to vector<8x64xbf16>
    %cst_149 = arith.constant dense<0.000000e+00> : vector<8x64xf32>
    %339 = tpu.matmul %338, %28, %cst_149 {dimension_numbers = #tpu.dot_dimension_numbers<[1], [0], [0], [1], [0, 0, 1, 1], [], []>} : vector<8x64xbf16>, vector<64x64xbf16>, vector<8x64xf32> -> vector<8x64xf32>
    %340 = arith.mulf %339, %27 : vector<8x64xf32>
    %341 = arith.addf %337, %340 : vector<8x64xf32>
    %342 = arith.mulf %335, %26 : vector<8x64xf32>
    %343 = arith.truncf %335 : vector<8x64xf32> to vector<8x64xbf16>
    %cst_150 = arith.constant dense<0.000000e+00> : vector<8x64xf32>
    %344 = tpu.matmul %343, %28, %cst_150 {dimension_numbers = #tpu.dot_dimension_numbers<[1], [0], [0], [1], [0, 0, 1, 1], [], []>} : vector<8x64xbf16>, vector<64x64xbf16>, vector<8x64xf32> -> vector<8x64xf32>
    %345 = arith.mulf %344, %27 : vector<8x64xf32>
    %346 = arith.addf %342, %345 : vector<8x64xf32>
    %347 = arith.truncf %341 : vector<8x64xf32> to vector<8x64xbf16>
    %348 = arith.truncf %346 : vector<8x64xf32> to vector<8x64xbf16>
    %349 = arith.truncf %336 : vector<8x64xf32> to vector<8x64xbf16>
    %350 = vector.extract_strided_slice %347 {offsets = [0, 0], sizes = [8, 16], strides = [1, 1]} : vector<8x64xbf16> to vector<8x16xbf16>
    %351 = vector.extract_strided_slice %348 {offsets = [0, 0], sizes = [8, 16], strides = [1, 1]} : vector<8x64xbf16> to vector<8x16xbf16>
    %352 = vector.extract_strided_slice %349 {offsets = [0, 0], sizes = [8, 16], strides = [1, 1]} : vector<8x64xbf16> to vector<8x16xbf16>
    %353 = vector.extract_strided_slice %25 {offsets = [0, 0], sizes = [8, 16], strides = [1, 1]} : vector<8x64xbf16> to vector<8x16xbf16>
    %c1_151 = arith.constant 1 : index
    %c0_152 = arith.constant 0 : index
    %c0_153 = arith.constant 0 : index
    %c0_154 = arith.constant 0 : index
    %354 = vector.load %arg3[%c1_151, %c0_152, %c0_153, %c0_154] : memref<2x4x16x4xbf16, #tpu.memory_space<vmem>>, vector<1x1x16x4xbf16>
    %355 = vector.shape_cast %354 : vector<1x1x16x4xbf16> to vector<16x4xbf16>
    %cst_155 = arith.constant dense<0.000000e+00> : vector<8x4xf32>
    %356 = tpu.matmul %350, %355, %cst_155 {dimension_numbers = #tpu.dot_dimension_numbers<[1], [0], [0], [1], [0, 0, 1, 1], [], []>} : vector<8x16xbf16>, vector<16x4xbf16>, vector<8x4xf32> -> vector<8x4xf32>
    %cst_156 = arith.constant dense<0.000000e+00> : vector<8x8xf32>
    %357 = tpu.matmul %350, %353, %cst_156 {dimension_numbers = #tpu.dot_dimension_numbers<[1], [1], [0], [0], [0, 0, 1, 0], [], []>} : vector<8x16xbf16>, vector<8x16xbf16>, vector<8x8xf32> -> vector<8x8xf32>
    %358 = arith.addf %357, %29 : vector<8x8xf32>
    %cst_157 = arith.constant dense<0.000000e+00> : vector<8x8xf32>
    %359 = tpu.matmul %350, %351, %cst_157 {dimension_numbers = #tpu.dot_dimension_numbers<[1], [1], [0], [0], [0, 0, 1, 0], [], []>} : vector<8x16xbf16>, vector<8x16xbf16>, vector<8x8xf32> -> vector<8x8xf32>
    %360 = arith.addf %359, %30 : vector<8x8xf32>
    %cst_158 = arith.constant dense<0xFF800000> : vector<8xf32>
    %361 = vector.multi_reduction <maximumf>, %356, %cst_158 [1] : vector<8x4xf32> to vector<8xf32>
    %362 = vector.shape_cast %361 : vector<8xf32> to vector<8x1xf32>
    %cst_159 = arith.constant dense<0xFF800000> : vector<8xf32>
    %363 = vector.multi_reduction <maximumf>, %358, %cst_159 [1] : vector<8x8xf32> to vector<8xf32>
    %364 = vector.shape_cast %363 : vector<8xf32> to vector<8x1xf32>
    %cst_160 = arith.constant dense<0xFF800000> : vector<8xf32>
    %365 = vector.multi_reduction <maximumf>, %360, %cst_160 [1] : vector<8x8xf32> to vector<8xf32>
    %366 = vector.shape_cast %365 : vector<8xf32> to vector<8x1xf32>
    %367 = arith.maximumf %364, %366 : vector<8x1xf32>
    %368 = arith.maximumf %362, %367 : vector<8x1xf32>
    %369 = vector.broadcast %368 : vector<8x1xf32> to vector<8x4xf32>
    %370 = arith.subf %356, %369 : vector<8x4xf32>
    %371 = math.exp %370 : vector<8x4xf32>
    %372 = vector.broadcast %368 : vector<8x1xf32> to vector<8x8xf32>
    %373 = arith.subf %358, %372 : vector<8x8xf32>
    %374 = math.exp %373 : vector<8x8xf32>
    %375 = vector.broadcast %368 : vector<8x1xf32> to vector<8x8xf32>
    %376 = arith.subf %360, %375 : vector<8x8xf32>
    %377 = math.exp %376 : vector<8x8xf32>
    %cst_161 = arith.constant dense<0.000000e+00> : vector<8xf32>
    %378 = vector.multi_reduction <add>, %371, %cst_161 [1] : vector<8x4xf32> to vector<8xf32>
    %379 = vector.shape_cast %378 : vector<8xf32> to vector<8x1xf32>
    %cst_162 = arith.constant dense<0.000000e+00> : vector<8xf32>
    %380 = vector.multi_reduction <add>, %374, %cst_162 [1] : vector<8x8xf32> to vector<8xf32>
    %381 = vector.shape_cast %380 : vector<8xf32> to vector<8x1xf32>
    %382 = arith.addf %379, %381 : vector<8x1xf32>
    %cst_163 = arith.constant dense<0.000000e+00> : vector<8xf32>
    %383 = vector.multi_reduction <add>, %377, %cst_163 [1] : vector<8x8xf32> to vector<8xf32>
    %384 = vector.shape_cast %383 : vector<8xf32> to vector<8x1xf32>
    %385 = arith.addf %382, %384 : vector<8x1xf32>
    %386 = arith.truncf %371 : vector<8x4xf32> to vector<8x4xbf16>
    %c1_164 = arith.constant 1 : index
    %c0_165 = arith.constant 0 : index
    %c0_166 = arith.constant 0 : index
    %c0_167 = arith.constant 0 : index
    %387 = vector.load %arg4[%c1_164, %c0_165, %c0_166, %c0_167] : memref<2x4x4x16xbf16, #tpu.memory_space<vmem>>, vector<1x1x4x16xbf16>
    %388 = vector.shape_cast %387 : vector<1x1x4x16xbf16> to vector<4x16xbf16>
    %cst_168 = arith.constant dense<0.000000e+00> : vector<8x16xf32>
    %389 = tpu.matmul %386, %388, %cst_168 {dimension_numbers = #tpu.dot_dimension_numbers<[1], [0], [0], [1], [0, 0, 1, 1], [], []>} : vector<8x4xbf16>, vector<4x16xbf16>, vector<8x16xf32> -> vector<8x16xf32>
    %390 = arith.truncf %374 : vector<8x8xf32> to vector<8x8xbf16>
    %cst_169 = arith.constant dense<0.000000e+00> : vector<8x16xf32>
    %391 = tpu.matmul %390, %353, %cst_169 {dimension_numbers = #tpu.dot_dimension_numbers<[1], [0], [0], [1], [0, 0, 1, 1], [], []>} : vector<8x8xbf16>, vector<8x16xbf16>, vector<8x16xf32> -> vector<8x16xf32>
    %392 = arith.addf %389, %391 : vector<8x16xf32>
    %393 = arith.truncf %377 : vector<8x8xf32> to vector<8x8xbf16>
    %cst_170 = arith.constant dense<0.000000e+00> : vector<8x16xf32>
    %394 = tpu.matmul %393, %352, %cst_170 {dimension_numbers = #tpu.dot_dimension_numbers<[1], [0], [0], [1], [0, 0, 1, 1], [], []>} : vector<8x8xbf16>, vector<8x16xbf16>, vector<8x16xf32> -> vector<8x16xf32>
    %395 = arith.addf %392, %394 : vector<8x16xf32>
    %396 = tpu.reciprocal %385 {approx = true} : vector<8x1xf32> -> vector<8x1xf32>
    %397 = vector.broadcast %396 : vector<8x1xf32> to vector<8x16xf32>
    %398 = arith.mulf %395, %397 : vector<8x16xf32>
    %399 = vector.extract_strided_slice %347 {offsets = [0, 16], sizes = [8, 16], strides = [1, 1]} : vector<8x64xbf16> to vector<8x16xbf16>
    %400 = vector.extract_strided_slice %348 {offsets = [0, 16], sizes = [8, 16], strides = [1, 1]} : vector<8x64xbf16> to vector<8x16xbf16>
    %401 = vector.extract_strided_slice %349 {offsets = [0, 16], sizes = [8, 16], strides = [1, 1]} : vector<8x64xbf16> to vector<8x16xbf16>
    %402 = vector.extract_strided_slice %25 {offsets = [0, 16], sizes = [8, 16], strides = [1, 1]} : vector<8x64xbf16> to vector<8x16xbf16>
    %c1_171 = arith.constant 1 : index
    %c1_172 = arith.constant 1 : index
    %c0_173 = arith.constant 0 : index
    %c0_174 = arith.constant 0 : index
    %403 = vector.load %arg3[%c1_171, %c1_172, %c0_173, %c0_174] : memref<2x4x16x4xbf16, #tpu.memory_space<vmem>>, vector<1x1x16x4xbf16>
    %404 = vector.shape_cast %403 : vector<1x1x16x4xbf16> to vector<16x4xbf16>
    %cst_175 = arith.constant dense<0.000000e+00> : vector<8x4xf32>
    %405 = tpu.matmul %399, %404, %cst_175 {dimension_numbers = #tpu.dot_dimension_numbers<[1], [0], [0], [1], [0, 0, 1, 1], [], []>} : vector<8x16xbf16>, vector<16x4xbf16>, vector<8x4xf32> -> vector<8x4xf32>
    %cst_176 = arith.constant dense<0.000000e+00> : vector<8x8xf32>
    %406 = tpu.matmul %399, %402, %cst_176 {dimension_numbers = #tpu.dot_dimension_numbers<[1], [1], [0], [0], [0, 0, 1, 0], [], []>} : vector<8x16xbf16>, vector<8x16xbf16>, vector<8x8xf32> -> vector<8x8xf32>
    %407 = arith.addf %406, %29 : vector<8x8xf32>
    %cst_177 = arith.constant dense<0.000000e+00> : vector<8x8xf32>
    %408 = tpu.matmul %399, %400, %cst_177 {dimension_numbers = #tpu.dot_dimension_numbers<[1], [1], [0], [0], [0, 0, 1, 0], [], []>} : vector<8x16xbf16>, vector<8x16xbf16>, vector<8x8xf32> -> vector<8x8xf32>
    %409 = arith.addf %408, %30 : vector<8x8xf32>
    %cst_178 = arith.constant dense<0xFF800000> : vector<8xf32>
    %410 = vector.multi_reduction <maximumf>, %405, %cst_178 [1] : vector<8x4xf32> to vector<8xf32>
    %411 = vector.shape_cast %410 : vector<8xf32> to vector<8x1xf32>
    %cst_179 = arith.constant dense<0xFF800000> : vector<8xf32>
    %412 = vector.multi_reduction <maximumf>, %407, %cst_179 [1] : vector<8x8xf32> to vector<8xf32>
    %413 = vector.shape_cast %412 : vector<8xf32> to vector<8x1xf32>
    %cst_180 = arith.constant dense<0xFF800000> : vector<8xf32>
    %414 = vector.multi_reduction <maximumf>, %409, %cst_180 [1] : vector<8x8xf32> to vector<8xf32>
    %415 = vector.shape_cast %414 : vector<8xf32> to vector<8x1xf32>
    %416 = arith.maximumf %413, %415 : vector<8x1xf32>
    %417 = arith.maximumf %411, %416 : vector<8x1xf32>
    %418 = vector.broadcast %417 : vector<8x1xf32> to vector<8x4xf32>
    %419 = arith.subf %405, %418 : vector<8x4xf32>
    %420 = math.exp %419 : vector<8x4xf32>
    %421 = vector.broadcast %417 : vector<8x1xf32> to vector<8x8xf32>
    %422 = arith.subf %407, %421 : vector<8x8xf32>
    %423 = math.exp %422 : vector<8x8xf32>
    %424 = vector.broadcast %417 : vector<8x1xf32> to vector<8x8xf32>
    %425 = arith.subf %409, %424 : vector<8x8xf32>
    %426 = math.exp %425 : vector<8x8xf32>
    %cst_181 = arith.constant dense<0.000000e+00> : vector<8xf32>
    %427 = vector.multi_reduction <add>, %420, %cst_181 [1] : vector<8x4xf32> to vector<8xf32>
    %428 = vector.shape_cast %427 : vector<8xf32> to vector<8x1xf32>
    %cst_182 = arith.constant dense<0.000000e+00> : vector<8xf32>
    %429 = vector.multi_reduction <add>, %423, %cst_182 [1] : vector<8x8xf32> to vector<8xf32>
    %430 = vector.shape_cast %429 : vector<8xf32> to vector<8x1xf32>
    %431 = arith.addf %428, %430 : vector<8x1xf32>
    %cst_183 = arith.constant dense<0.000000e+00> : vector<8xf32>
    %432 = vector.multi_reduction <add>, %426, %cst_183 [1] : vector<8x8xf32> to vector<8xf32>
    %433 = vector.shape_cast %432 : vector<8xf32> to vector<8x1xf32>
    %434 = arith.addf %431, %433 : vector<8x1xf32>
    %435 = arith.truncf %420 : vector<8x4xf32> to vector<8x4xbf16>
    %c1_184 = arith.constant 1 : index
    %c1_185 = arith.constant 1 : index
    %c0_186 = arith.constant 0 : index
    %c0_187 = arith.constant 0 : index
    %436 = vector.load %arg4[%c1_184, %c1_185, %c0_186, %c0_187] : memref<2x4x4x16xbf16, #tpu.memory_space<vmem>>, vector<1x1x4x16xbf16>
    %437 = vector.shape_cast %436 : vector<1x1x4x16xbf16> to vector<4x16xbf16>
    %cst_188 = arith.constant dense<0.000000e+00> : vector<8x16xf32>
    %438 = tpu.matmul %435, %437, %cst_188 {dimension_numbers = #tpu.dot_dimension_numbers<[1], [0], [0], [1], [0, 0, 1, 1], [], []>} : vector<8x4xbf16>, vector<4x16xbf16>, vector<8x16xf32> -> vector<8x16xf32>
    %439 = arith.truncf %423 : vector<8x8xf32> to vector<8x8xbf16>
    %cst_189 = arith.constant dense<0.000000e+00> : vector<8x16xf32>
    %440 = tpu.matmul %439, %402, %cst_189 {dimension_numbers = #tpu.dot_dimension_numbers<[1], [0], [0], [1], [0, 0, 1, 1], [], []>} : vector<8x8xbf16>, vector<8x16xbf16>, vector<8x16xf32> -> vector<8x16xf32>
    %441 = arith.addf %438, %440 : vector<8x16xf32>
    %442 = arith.truncf %426 : vector<8x8xf32> to vector<8x8xbf16>
    %cst_190 = arith.constant dense<0.000000e+00> : vector<8x16xf32>
    %443 = tpu.matmul %442, %401, %cst_190 {dimension_numbers = #tpu.dot_dimension_numbers<[1], [0], [0], [1], [0, 0, 1, 1], [], []>} : vector<8x8xbf16>, vector<8x16xbf16>, vector<8x16xf32> -> vector<8x16xf32>
    %444 = arith.addf %441, %443 : vector<8x16xf32>
    %445 = tpu.reciprocal %434 {approx = true} : vector<8x1xf32> -> vector<8x1xf32>
    %446 = vector.broadcast %445 : vector<8x1xf32> to vector<8x16xf32>
    %447 = arith.mulf %444, %446 : vector<8x16xf32>
    %448 = vector.extract_strided_slice %347 {offsets = [0, 32], sizes = [8, 16], strides = [1, 1]} : vector<8x64xbf16> to vector<8x16xbf16>
    %449 = vector.extract_strided_slice %348 {offsets = [0, 32], sizes = [8, 16], strides = [1, 1]} : vector<8x64xbf16> to vector<8x16xbf16>
    %450 = vector.extract_strided_slice %349 {offsets = [0, 32], sizes = [8, 16], strides = [1, 1]} : vector<8x64xbf16> to vector<8x16xbf16>
    %451 = vector.extract_strided_slice %25 {offsets = [0, 32], sizes = [8, 16], strides = [1, 1]} : vector<8x64xbf16> to vector<8x16xbf16>
    %c1_191 = arith.constant 1 : index
    %c2_192 = arith.constant 2 : index
    %c0_193 = arith.constant 0 : index
    %c0_194 = arith.constant 0 : index
    %452 = vector.load %arg3[%c1_191, %c2_192, %c0_193, %c0_194] : memref<2x4x16x4xbf16, #tpu.memory_space<vmem>>, vector<1x1x16x4xbf16>
    %453 = vector.shape_cast %452 : vector<1x1x16x4xbf16> to vector<16x4xbf16>
    %cst_195 = arith.constant dense<0.000000e+00> : vector<8x4xf32>
    %454 = tpu.matmul %448, %453, %cst_195 {dimension_numbers = #tpu.dot_dimension_numbers<[1], [0], [0], [1], [0, 0, 1, 1], [], []>} : vector<8x16xbf16>, vector<16x4xbf16>, vector<8x4xf32> -> vector<8x4xf32>
    %cst_196 = arith.constant dense<0.000000e+00> : vector<8x8xf32>
    %455 = tpu.matmul %448, %451, %cst_196 {dimension_numbers = #tpu.dot_dimension_numbers<[1], [1], [0], [0], [0, 0, 1, 0], [], []>} : vector<8x16xbf16>, vector<8x16xbf16>, vector<8x8xf32> -> vector<8x8xf32>
    %456 = arith.addf %455, %29 : vector<8x8xf32>
    %cst_197 = arith.constant dense<0.000000e+00> : vector<8x8xf32>
    %457 = tpu.matmul %448, %449, %cst_197 {dimension_numbers = #tpu.dot_dimension_numbers<[1], [1], [0], [0], [0, 0, 1, 0], [], []>} : vector<8x16xbf16>, vector<8x16xbf16>, vector<8x8xf32> -> vector<8x8xf32>
    %458 = arith.addf %457, %30 : vector<8x8xf32>
    %cst_198 = arith.constant dense<0xFF800000> : vector<8xf32>
    %459 = vector.multi_reduction <maximumf>, %454, %cst_198 [1] : vector<8x4xf32> to vector<8xf32>
    %460 = vector.shape_cast %459 : vector<8xf32> to vector<8x1xf32>
    %cst_199 = arith.constant dense<0xFF800000> : vector<8xf32>
    %461 = vector.multi_reduction <maximumf>, %456, %cst_199 [1] : vector<8x8xf32> to vector<8xf32>
    %462 = vector.shape_cast %461 : vector<8xf32> to vector<8x1xf32>
    %cst_200 = arith.constant dense<0xFF800000> : vector<8xf32>
    %463 = vector.multi_reduction <maximumf>, %458, %cst_200 [1] : vector<8x8xf32> to vector<8xf32>
    %464 = vector.shape_cast %463 : vector<8xf32> to vector<8x1xf32>
    %465 = arith.maximumf %462, %464 : vector<8x1xf32>
    %466 = arith.maximumf %460, %465 : vector<8x1xf32>
    %467 = vector.broadcast %466 : vector<8x1xf32> to vector<8x4xf32>
    %468 = arith.subf %454, %467 : vector<8x4xf32>
    %469 = math.exp %468 : vector<8x4xf32>
    %470 = vector.broadcast %466 : vector<8x1xf32> to vector<8x8xf32>
    %471 = arith.subf %456, %470 : vector<8x8xf32>
    %472 = math.exp %471 : vector<8x8xf32>
    %473 = vector.broadcast %466 : vector<8x1xf32> to vector<8x8xf32>
    %474 = arith.subf %458, %473 : vector<8x8xf32>
    %475 = math.exp %474 : vector<8x8xf32>
    %cst_201 = arith.constant dense<0.000000e+00> : vector<8xf32>
    %476 = vector.multi_reduction <add>, %469, %cst_201 [1] : vector<8x4xf32> to vector<8xf32>
    %477 = vector.shape_cast %476 : vector<8xf32> to vector<8x1xf32>
    %cst_202 = arith.constant dense<0.000000e+00> : vector<8xf32>
    %478 = vector.multi_reduction <add>, %472, %cst_202 [1] : vector<8x8xf32> to vector<8xf32>
    %479 = vector.shape_cast %478 : vector<8xf32> to vector<8x1xf32>
    %480 = arith.addf %477, %479 : vector<8x1xf32>
    %cst_203 = arith.constant dense<0.000000e+00> : vector<8xf32>
    %481 = vector.multi_reduction <add>, %475, %cst_203 [1] : vector<8x8xf32> to vector<8xf32>
    %482 = vector.shape_cast %481 : vector<8xf32> to vector<8x1xf32>
    %483 = arith.addf %480, %482 : vector<8x1xf32>
    %484 = arith.truncf %469 : vector<8x4xf32> to vector<8x4xbf16>
    %c1_204 = arith.constant 1 : index
    %c2_205 = arith.constant 2 : index
    %c0_206 = arith.constant 0 : index
    %c0_207 = arith.constant 0 : index
    %485 = vector.load %arg4[%c1_204, %c2_205, %c0_206, %c0_207] : memref<2x4x4x16xbf16, #tpu.memory_space<vmem>>, vector<1x1x4x16xbf16>
    %486 = vector.shape_cast %485 : vector<1x1x4x16xbf16> to vector<4x16xbf16>
    %cst_208 = arith.constant dense<0.000000e+00> : vector<8x16xf32>
    %487 = tpu.matmul %484, %486, %cst_208 {dimension_numbers = #tpu.dot_dimension_numbers<[1], [0], [0], [1], [0, 0, 1, 1], [], []>} : vector<8x4xbf16>, vector<4x16xbf16>, vector<8x16xf32> -> vector<8x16xf32>
    %488 = arith.truncf %472 : vector<8x8xf32> to vector<8x8xbf16>
    %cst_209 = arith.constant dense<0.000000e+00> : vector<8x16xf32>
    %489 = tpu.matmul %488, %451, %cst_209 {dimension_numbers = #tpu.dot_dimension_numbers<[1], [0], [0], [1], [0, 0, 1, 1], [], []>} : vector<8x8xbf16>, vector<8x16xbf16>, vector<8x16xf32> -> vector<8x16xf32>
    %490 = arith.addf %487, %489 : vector<8x16xf32>
    %491 = arith.truncf %475 : vector<8x8xf32> to vector<8x8xbf16>
    %cst_210 = arith.constant dense<0.000000e+00> : vector<8x16xf32>
    %492 = tpu.matmul %491, %450, %cst_210 {dimension_numbers = #tpu.dot_dimension_numbers<[1], [0], [0], [1], [0, 0, 1, 1], [], []>} : vector<8x8xbf16>, vector<8x16xbf16>, vector<8x16xf32> -> vector<8x16xf32>
    %493 = arith.addf %490, %492 : vector<8x16xf32>
    %494 = tpu.reciprocal %483 {approx = true} : vector<8x1xf32> -> vector<8x1xf32>
    %495 = vector.broadcast %494 : vector<8x1xf32> to vector<8x16xf32>
    %496 = arith.mulf %493, %495 : vector<8x16xf32>
    %497 = vector.extract_strided_slice %347 {offsets = [0, 48], sizes = [8, 16], strides = [1, 1]} : vector<8x64xbf16> to vector<8x16xbf16>
    %498 = vector.extract_strided_slice %348 {offsets = [0, 48], sizes = [8, 16], strides = [1, 1]} : vector<8x64xbf16> to vector<8x16xbf16>
    %499 = vector.extract_strided_slice %349 {offsets = [0, 48], sizes = [8, 16], strides = [1, 1]} : vector<8x64xbf16> to vector<8x16xbf16>
    %500 = vector.extract_strided_slice %25 {offsets = [0, 48], sizes = [8, 16], strides = [1, 1]} : vector<8x64xbf16> to vector<8x16xbf16>
    %c1_211 = arith.constant 1 : index
    %c3_212 = arith.constant 3 : index
    %c0_213 = arith.constant 0 : index
    %c0_214 = arith.constant 0 : index
    %501 = vector.load %arg3[%c1_211, %c3_212, %c0_213, %c0_214] : memref<2x4x16x4xbf16, #tpu.memory_space<vmem>>, vector<1x1x16x4xbf16>
    %502 = vector.shape_cast %501 : vector<1x1x16x4xbf16> to vector<16x4xbf16>
    %cst_215 = arith.constant dense<0.000000e+00> : vector<8x4xf32>
    %503 = tpu.matmul %497, %502, %cst_215 {dimension_numbers = #tpu.dot_dimension_numbers<[1], [0], [0], [1], [0, 0, 1, 1], [], []>} : vector<8x16xbf16>, vector<16x4xbf16>, vector<8x4xf32> -> vector<8x4xf32>
    %cst_216 = arith.constant dense<0.000000e+00> : vector<8x8xf32>
    %504 = tpu.matmul %497, %500, %cst_216 {dimension_numbers = #tpu.dot_dimension_numbers<[1], [1], [0], [0], [0, 0, 1, 0], [], []>} : vector<8x16xbf16>, vector<8x16xbf16>, vector<8x8xf32> -> vector<8x8xf32>
    %505 = arith.addf %504, %29 : vector<8x8xf32>
    %cst_217 = arith.constant dense<0.000000e+00> : vector<8x8xf32>
    %506 = tpu.matmul %497, %498, %cst_217 {dimension_numbers = #tpu.dot_dimension_numbers<[1], [1], [0], [0], [0, 0, 1, 0], [], []>} : vector<8x16xbf16>, vector<8x16xbf16>, vector<8x8xf32> -> vector<8x8xf32>
    %507 = arith.addf %506, %30 : vector<8x8xf32>
    %cst_218 = arith.constant dense<0xFF800000> : vector<8xf32>
    %508 = vector.multi_reduction <maximumf>, %503, %cst_218 [1] : vector<8x4xf32> to vector<8xf32>
    %509 = vector.shape_cast %508 : vector<8xf32> to vector<8x1xf32>
    %cst_219 = arith.constant dense<0xFF800000> : vector<8xf32>
    %510 = vector.multi_reduction <maximumf>, %505, %cst_219 [1] : vector<8x8xf32> to vector<8xf32>
    %511 = vector.shape_cast %510 : vector<8xf32> to vector<8x1xf32>
    %cst_220 = arith.constant dense<0xFF800000> : vector<8xf32>
    %512 = vector.multi_reduction <maximumf>, %507, %cst_220 [1] : vector<8x8xf32> to vector<8xf32>
    %513 = vector.shape_cast %512 : vector<8xf32> to vector<8x1xf32>
    %514 = arith.maximumf %511, %513 : vector<8x1xf32>
    %515 = arith.maximumf %509, %514 : vector<8x1xf32>
    %516 = vector.broadcast %515 : vector<8x1xf32> to vector<8x4xf32>
    %517 = arith.subf %503, %516 : vector<8x4xf32>
    %518 = math.exp %517 : vector<8x4xf32>
    %519 = vector.broadcast %515 : vector<8x1xf32> to vector<8x8xf32>
    %520 = arith.subf %505, %519 : vector<8x8xf32>
    %521 = math.exp %520 : vector<8x8xf32>
    %522 = vector.broadcast %515 : vector<8x1xf32> to vector<8x8xf32>
    %523 = arith.subf %507, %522 : vector<8x8xf32>
    %524 = math.exp %523 : vector<8x8xf32>
    %cst_221 = arith.constant dense<0.000000e+00> : vector<8xf32>
    %525 = vector.multi_reduction <add>, %518, %cst_221 [1] : vector<8x4xf32> to vector<8xf32>
    %526 = vector.shape_cast %525 : vector<8xf32> to vector<8x1xf32>
    %cst_222 = arith.constant dense<0.000000e+00> : vector<8xf32>
    %527 = vector.multi_reduction <add>, %521, %cst_222 [1] : vector<8x8xf32> to vector<8xf32>
    %528 = vector.shape_cast %527 : vector<8xf32> to vector<8x1xf32>
    %529 = arith.addf %526, %528 : vector<8x1xf32>
    %cst_223 = arith.constant dense<0.000000e+00> : vector<8xf32>
    %530 = vector.multi_reduction <add>, %524, %cst_223 [1] : vector<8x8xf32> to vector<8xf32>
    %531 = vector.shape_cast %530 : vector<8xf32> to vector<8x1xf32>
    %532 = arith.addf %529, %531 : vector<8x1xf32>
    %533 = arith.truncf %518 : vector<8x4xf32> to vector<8x4xbf16>
    %c1_224 = arith.constant 1 : index
    %c3_225 = arith.constant 3 : index
    %c0_226 = arith.constant 0 : index
    %c0_227 = arith.constant 0 : index
    %534 = vector.load %arg4[%c1_224, %c3_225, %c0_226, %c0_227] : memref<2x4x4x16xbf16, #tpu.memory_space<vmem>>, vector<1x1x4x16xbf16>
    %535 = vector.shape_cast %534 : vector<1x1x4x16xbf16> to vector<4x16xbf16>
    %cst_228 = arith.constant dense<0.000000e+00> : vector<8x16xf32>
    %536 = tpu.matmul %533, %535, %cst_228 {dimension_numbers = #tpu.dot_dimension_numbers<[1], [0], [0], [1], [0, 0, 1, 1], [], []>} : vector<8x4xbf16>, vector<4x16xbf16>, vector<8x16xf32> -> vector<8x16xf32>
    %537 = arith.truncf %521 : vector<8x8xf32> to vector<8x8xbf16>
    %cst_229 = arith.constant dense<0.000000e+00> : vector<8x16xf32>
    %538 = tpu.matmul %537, %500, %cst_229 {dimension_numbers = #tpu.dot_dimension_numbers<[1], [0], [0], [1], [0, 0, 1, 1], [], []>} : vector<8x8xbf16>, vector<8x16xbf16>, vector<8x16xf32> -> vector<8x16xf32>
    %539 = arith.addf %536, %538 : vector<8x16xf32>
    %540 = arith.truncf %524 : vector<8x8xf32> to vector<8x8xbf16>
    %cst_230 = arith.constant dense<0.000000e+00> : vector<8x16xf32>
    %541 = tpu.matmul %540, %499, %cst_230 {dimension_numbers = #tpu.dot_dimension_numbers<[1], [0], [0], [1], [0, 0, 1, 1], [], []>} : vector<8x8xbf16>, vector<8x16xbf16>, vector<8x16xf32> -> vector<8x16xf32>
    %542 = arith.addf %539, %541 : vector<8x16xf32>
    %543 = tpu.reciprocal %532 {approx = true} : vector<8x1xf32> -> vector<8x1xf32>
    %544 = vector.broadcast %543 : vector<8x1xf32> to vector<8x16xf32>
    %545 = arith.mulf %542, %544 : vector<8x16xf32>
    %546 = tpu.concatenate %398, %447, %496, %545 in 1 : vector<8x16xf32>, vector<8x16xf32>, vector<8x16xf32>, vector<8x16xf32> -> vector<8x64xf32>
    %547 = arith.truncf %546 : vector<8x64xf32> to vector<8x64xbf16>
    %c1_231 = arith.constant 1 : index
    %c0_232 = arith.constant 0 : index
    %c0_233 = arith.constant 0 : index
    %548 = vector.load %arg7[%c1_231, %c0_232, %c0_233] : memref<2x64x64xbf16, #tpu.memory_space<vmem>>, vector<1x64x64xbf16>
    %549 = vector.shape_cast %548 : vector<1x64x64xbf16> to vector<64x64xbf16>
    %cst_234 = arith.constant dense<0.000000e+00> : vector<8x64xf32>
    %550 = tpu.matmul %547, %549, %cst_234 {dimension_numbers = #tpu.dot_dimension_numbers<[1], [0], [0], [1], [0, 0, 1, 1], [], []>} : vector<8x64xbf16>, vector<64x64xbf16>, vector<8x64xf32> -> vector<8x64xf32>
    %c1_235 = arith.constant 1 : index
    %c0_236 = arith.constant 0 : index
    %c0_237 = arith.constant 0 : index
    %551 = vector.load %arg8[%c1_235, %c0_236, %c0_237] : memref<2x1x64xf32, #tpu.memory_space<vmem>>, vector<1x1x64xf32>
    %552 = vector.shape_cast %551 : vector<1x1x64xf32> to vector<1x64xf32>
    %553 = vector.broadcast %552 : vector<1x64xf32> to vector<8x64xf32>
    %554 = arith.addf %550, %553 : vector<8x64xf32>
    %c1_238 = arith.constant 1 : index
    %c0_239 = arith.constant 0 : index
    %c0_240 = arith.constant 0 : index
    %555 = vector.load %arg9[%c1_238, %c0_239, %c0_240] : memref<2x64x256xbf16, #tpu.memory_space<vmem>>, vector<1x64x256xbf16>
    %556 = vector.shape_cast %555 : vector<1x64x256xbf16> to vector<64x256xbf16>
    %cst_241 = arith.constant dense<0.000000e+00> : vector<8x256xf32>
    %557 = tpu.matmul %326, %556, %cst_241 {dimension_numbers = #tpu.dot_dimension_numbers<[1], [0], [0], [1], [0, 0, 1, 1], [], []>} : vector<8x64xbf16>, vector<64x256xbf16>, vector<8x256xf32> -> vector<8x256xf32>
    %c1_242 = arith.constant 1 : index
    %c0_243 = arith.constant 0 : index
    %c0_244 = arith.constant 0 : index
    %558 = vector.load %arg10[%c1_242, %c0_243, %c0_244] : memref<2x1x256xf32, #tpu.memory_space<vmem>>, vector<1x1x256xf32>
    %559 = vector.shape_cast %558 : vector<1x1x256xf32> to vector<1x256xf32>
    %560 = vector.broadcast %559 : vector<1x256xf32> to vector<8x256xf32>
    %561 = arith.addf %557, %560 : vector<8x256xf32>
    %562 = arith.mulf %561, %561 : vector<8x256xf32>
    %563 = arith.mulf %561, %562 : vector<8x256xf32>
    %cst_245 = arith.constant 4.471500e-02 : f32
    %564 = vector.broadcast %cst_245 : f32 to vector<8x256xf32>
    %565 = arith.mulf %564, %563 : vector<8x256xf32>
    %566 = arith.addf %561, %565 : vector<8x256xf32>
    %cst_246 = arith.constant 0.797884583 : f32
    %567 = vector.broadcast %cst_246 : f32 to vector<8x256xf32>
    %568 = arith.mulf %567, %566 : vector<8x256xf32>
    %569 = math.tanh %568 : vector<8x256xf32>
    %cst_247 = arith.constant 1.000000e+00 : f32
    %570 = vector.broadcast %cst_247 : f32 to vector<8x256xf32>
    %571 = arith.addf %570, %569 : vector<8x256xf32>
    %cst_248 = arith.constant 5.000000e-01 : f32
    %572 = vector.broadcast %cst_248 : f32 to vector<8x256xf32>
    %573 = arith.mulf %572, %571 : vector<8x256xf32>
    %574 = arith.mulf %561, %573 : vector<8x256xf32>
    %575 = arith.truncf %574 : vector<8x256xf32> to vector<8x256xbf16>
    %c1_249 = arith.constant 1 : index
    %c0_250 = arith.constant 0 : index
    %c0_251 = arith.constant 0 : index
    %576 = vector.load %arg11[%c1_249, %c0_250, %c0_251] : memref<2x256x64xbf16, #tpu.memory_space<vmem>>, vector<1x256x64xbf16>
    %577 = vector.shape_cast %576 : vector<1x256x64xbf16> to vector<256x64xbf16>
    %cst_252 = arith.constant dense<0.000000e+00> : vector<8x64xf32>
    %578 = tpu.matmul %575, %577, %cst_252 {dimension_numbers = #tpu.dot_dimension_numbers<[1], [0], [0], [1], [0, 0, 1, 1], [], []>} : vector<8x256xbf16>, vector<256x64xbf16>, vector<8x64xf32> -> vector<8x64xf32>
    %c1_253 = arith.constant 1 : index
    %c0_254 = arith.constant 0 : index
    %c0_255 = arith.constant 0 : index
    %579 = vector.load %arg12[%c1_253, %c0_254, %c0_255] : memref<2x1x64xf32, #tpu.memory_space<vmem>>, vector<1x1x64xf32>
    %580 = vector.shape_cast %579 : vector<1x1x64xf32> to vector<1x64xf32>
    %581 = vector.broadcast %580 : vector<1x64xf32> to vector<8x64xf32>
    %582 = arith.addf %578, %581 : vector<8x64xf32>
    %583 = arith.addf %554, %582 : vector<8x64xf32>
    %584 = arith.addf %583, %307 : vector<8x64xf32>
    %cst_256 = arith.constant dense<0.000000e+00> : vector<8xf32>
    %585 = vector.multi_reduction <add>, %584, %cst_256 [1] : vector<8x64xf32> to vector<8xf32>
    %586 = vector.shape_cast %585 : vector<8xf32> to vector<8x1xf32>
    %cst_257 = arith.constant 6.400000e+01 : f32
    %587 = vector.broadcast %cst_257 : f32 to vector<8x1xf32>
    %588 = arith.divf %586, %587 : vector<8x1xf32>
    %589 = vector.broadcast %588 : vector<8x1xf32> to vector<8x64xf32>
    %590 = arith.subf %584, %589 : vector<8x64xf32>
    %591 = arith.mulf %590, %590 : vector<8x64xf32>
    %cst_258 = arith.constant dense<0.000000e+00> : vector<8xf32>
    %592 = vector.multi_reduction <add>, %591, %cst_258 [1] : vector<8x64xf32> to vector<8xf32>
    %593 = vector.shape_cast %592 : vector<8xf32> to vector<8x1xf32>
    %cst_259 = arith.constant 6.400000e+01 : f32
    %594 = vector.broadcast %cst_259 : f32 to vector<8x1xf32>
    %595 = arith.divf %593, %594 : vector<8x1xf32>
    %596 = vector.broadcast %588 : vector<8x1xf32> to vector<8x64xf32>
    %597 = arith.subf %584, %596 : vector<8x64xf32>
    %cst_260 = arith.constant 9.99999974E-6 : f32
    %598 = vector.broadcast %cst_260 : f32 to vector<8x1xf32>
    %599 = arith.addf %595, %598 : vector<8x1xf32>
    %600 = math.rsqrt %599 : vector<8x1xf32>
    %601 = vector.broadcast %600 : vector<8x1xf32> to vector<8x64xf32>
    %602 = arith.mulf %597, %601 : vector<8x64xf32>
    %c0_261 = arith.constant 0 : index
    %c0_262 = arith.constant 0 : index
    %603 = vector.load %arg13[%c0_261, %c0_262] : memref<64x8xf32, #tpu.memory_space<vmem>>, vector<64x8xf32>
    %cst_263 = arith.constant dense<0.000000e+00> : vector<8x8xf32>
    %604 = tpu.matmul %602, %603, %cst_263 {dimension_numbers = #tpu.dot_dimension_numbers<[1], [0], [0], [1], [0, 0, 1, 1], [], []>} : vector<8x64xf32>, vector<64x8xf32>, vector<8x8xf32> -> vector<8x8xf32>
    %c0_264 = arith.constant 0 : index
    %c0_265 = arith.constant 0 : index
    %605 = vector.load %arg14[%c0_264, %c0_265] : memref<1x8xf32, #tpu.memory_space<vmem>>, vector<1x8xf32>
    %606 = vector.broadcast %605 : vector<1x8xf32> to vector<8x8xf32>
    %607 = arith.addf %604, %606 : vector<8x8xf32>
    %608 = vector.broadcast %14 : vector<8x1xf32> to vector<8x8xf32>
    %609 = arith.mulf %607, %608 : vector<8x8xf32>
    %610 = vector.broadcast %4 : vector<8x1xf32> to vector<8x8xf32>
    %611 = arith.addf %609, %610 : vector<8x8xf32>
    %c0_266 = arith.constant 0 : index
    %c0_267 = arith.constant 0 : index
    %612 = vector.load %arg20[%c0_266, %c0_267] : memref<8x8xf32, #tpu.memory_space<vmem>>, vector<8x8xf32>
    tpu.vector_store %arg20[%c0_266, %c0_267], %611 {strides = array<i32>} : memref<8x8xf32, #tpu.memory_space<vmem>>, vector<8x8xf32>,
    return
  }
}

</mosaic_0001>

<llo_original>
// kernel: model_forward.1
$region0: #{model_forward.1}
  #allocation0 [shape = 'u32[]', space=smem, size = 0x4, offset = 0x4, fixed_abs, tag = 'smem constant byte address 0x4 - core index']
  #allocation1 [shape = 'u32[144,128]{1,0:T(1,128)}', space=vmem, size = 0x12000, scoped, tag = 'internal scratch']
  %s0 = inlined_call_operand.vmem [shape: f32[8,32], index: 0, kind: input, shape index: {}]
  %s1 = inlined_call_operand.vmem [shape: bf16[32,1024], index: 1, kind: input, shape index: {}]
  %s2 = inlined_call_operand.vmem [shape: bf16[1024,64], index: 2, kind: input, shape index: {}]
  %s3 = inlined_call_operand.vmem [shape: bf16[2,4,16,4], index: 3, kind: input, shape index: {}]
  %s4 = inlined_call_operand.vmem [shape: bf16[2,4,4,16], index: 4, kind: input, shape index: {}]
  %s5 = inlined_call_operand.vmem [shape: bf16[2,64,192], index: 5, kind: input, shape index: {}]
  %s6 = inlined_call_operand.vmem [shape: f32[2,1,192], index: 6, kind: input, shape index: {}]
  %s7 = inlined_call_operand.vmem [shape: bf16[2,64,64], index: 7, kind: input, shape index: {}]
  %s8 = inlined_call_operand.vmem [shape: f32[2,1,64], index: 8, kind: input, shape index: {}]
  %s9 = inlined_call_operand.vmem [shape: bf16[2,64,256], index: 9, kind: input, shape index: {}]
  %s10 = inlined_call_operand.vmem [shape: f32[2,1,256], index: 10, kind: input, shape index: {}]
  %s11 = inlined_call_operand.vmem [shape: bf16[2,256,64], index: 11, kind: input, shape index: {}]
  %s12 = inlined_call_operand.vmem [shape: f32[2,1,64], index: 12, kind: input, shape index: {}]
  %s13 = inlined_call_operand.vmem [shape: f32[64,8], index: 13, kind: input, shape index: {}]
  %s14 = inlined_call_operand.vmem [shape: f32[1,8], index: 14, kind: input, shape index: {}]
  %s15 = inlined_call_operand.vmem [shape: f32[8,64], index: 15, kind: input, shape index: {}]
  %s16 = inlined_call_operand.vmem [shape: f32[8,64], index: 16, kind: input, shape index: {}]
  %s17 = inlined_call_operand.vmem [shape: bf16[64,64], index: 17, kind: input, shape index: {}]
  %s18 = inlined_call_operand.vmem [shape: f32[8,8], index: 18, kind: input, shape index: {}]
  %s19 = inlined_call_operand.vmem [shape: f32[8,8], index: 19, kind: input, shape index: {}]
  %s20 = inlined_call_operand.hbm [shape: f32[8,8], index: 20, kind: output, shape index: {}]
  %s21 = sld [smem:[#allocation0]]
  $region90: #{model_forward.1} parent=0
    _
  %s23 = ssub.s32 1, %s21
  %s24 = scalar_select 0, %s23, %s21
  $region1: #{model_forward.1} parent=0
    #allocation2 [shape = 'u8[4096]{0}', space=vmem, size = 0x1000, scoped, tag = 'output window, operand 0, single buffered']
    #allocation3 [shape = 's32[1]{0}', space=sflag, size = 0x4, scoped, tag = 'scoped memory for model_forward.1']
    %25 = vsyncpa [#allocation3], 0
    // Predicated region
    $region2: #{model_forward.1} parent=1 // pred_check
      _
    $region3: #{model_forward.1} parent=1 // pred_check_branch
      %27 = sbr.rel (0) target = $region5
    $region4: #{model_forward.1} parent=1 // pred_region
      _
    $region5: #{model_forward.1} parent=1 // pred_fallthru
      _
    // Predicated region
    $region6: #{model_forward.1} parent=1 // pred_check
      _
    $region7: #{model_forward.1} parent=1 // pred_check_branch
      %29 = sbr.rel (0) target = $region9
    $region8: #{model_forward.1} parent=1 // pred_region
      _
    $region9: #{model_forward.1} parent=1 // pred_fallthru
      _
    // Predicated region
    $region10: #{model_forward.1} parent=1 // pred_check
      _
    $region11: #{model_forward.1} parent=1 // pred_check_branch
      %31 = sbr.rel (0) target = $region13
    $region12: #{model_forward.1} parent=1 // pred_region
      _
    $region13: #{model_forward.1} parent=1 // pred_fallthru
      _
    // Predicated region
    $region14: #{model_forward.1} parent=1 // pred_check
      _
    $region15: #{model_forward.1} parent=1 // pred_check_branch
      %33 = sbr.rel (0) target = $region17
    $region16: #{model_forward.1} parent=1 // pred_region
      _
    $region17: #{model_forward.1} parent=1 // pred_fallthru
      _
    // Predicated region
    $region18: #{model_forward.1} parent=1 // pred_check
      _
    $region19: #{model_forward.1} parent=1 // pred_check_branch
      %35 = sbr.rel (0) target = $region21
    $region20: #{model_forward.1} parent=1 // pred_region
      _
    $region21: #{model_forward.1} parent=1 // pred_fallthru
      _
    // Predicated region
    $region22: #{model_forward.1} parent=1 // pred_check
      _
    $region23: #{model_forward.1} parent=1 // pred_check_branch
      %37 = sbr.rel (0) target = $region25
    $region24: #{model_forward.1} parent=1 // pred_region
      _
    $region25: #{model_forward.1} parent=1 // pred_fallthru
      _
    // Predicated region
    $region26: #{model_forward.1} parent=1 // pred_check
      _
    $region27: #{model_forward.1} parent=1 // pred_check_branch
      %39 = sbr.rel (0) target = $region29
    $region28: #{model_forward.1} parent=1 // pred_region
      _
    $region29: #{model_forward.1} parent=1 // pred_fallthru
      _
    // Predicated region
    $region30: #{model_forward.1} parent=1 // pred_check
      _
    $region31: #{model_forward.1} parent=1 // pred_check_branch
      %41 = sbr.rel (0) target = $region33
    $region32: #{model_forward.1} parent=1 // pred_region
      _
    $region33: #{model_forward.1} parent=1 // pred_fallthru
      _
    // Predicated region
    $region34: #{model_forward.1} parent=1 // pred_check
      _
    $region35: #{model_forward.1} parent=1 // pred_check_branch
      %43 = sbr.rel (0) target = $region37
    $region36: #{model_forward.1} parent=1 // pred_region
      _
    $region37: #{model_forward.1} parent=1 // pred_fallthru
      _
    // Predicated region
    $region38: #{model_forward.1} parent=1 // pred_check
      _
    $region39: #{model_forward.1} parent=1 // pred_check_branch
      %45 = sbr.rel (0) target = $region41
    $region40: #{model_forward.1} parent=1 // pred_region
      _
    $region41: #{model_forward.1} parent=1 // pred_fallthru
      _
    // Predicated region
    $region42: #{model_forward.1} parent=1 // pred_check
      _
    $region43: #{model_forward.1} parent=1 // pred_check_branch
      %47 = sbr.rel (0) target = $region45
    $region44: #{model_forward.1} parent=1 // pred_region
      _
    $region45: #{model_forward.1} parent=1 // pred_fallthru
      _
    // Predicated region
    $region46: #{model_forward.1} parent=1 // pred_check
      _
    $region47: #{model_forward.1} parent=1 // pred_check_branch
      %49 = sbr.rel (0) target = $region49
    $region48: #{model_forward.1} parent=1 // pred_region
      _
    $region49: #{model_forward.1} parent=1 // pred_fallthru
      _
    // Predicated region
    $region50: #{model_forward.1} parent=1 // pred_check
      _
    $region51: #{model_forward.1} parent=1 // pred_check_branch
      %51 = sbr.rel (0) target = $region53
    $region52: #{model_forward.1} parent=1 // pred_region
      _
    $region53: #{model_forward.1} parent=1 // pred_fallthru
      _
    // Predicated region
    $region54: #{model_forward.1} parent=1 // pred_check
      _
    $region55: #{model_forward.1} parent=1 // pred_check_branch
      %53 = sbr.rel (0) target = $region57
    $region56: #{model_forward.1} parent=1 // pred_region
      _
    $region57: #{model_forward.1} parent=1 // pred_fallthru
      _
    // Predicated region
    $region58: #{model_forward.1} parent=1 // pred_check
      _
    $region59: #{model_forward.1} parent=1 // pred_check_branch
      %55 = sbr.rel (0) target = $region61
    $region60: #{model_forward.1} parent=1 // pred_region
      _
    $region61: #{model_forward.1} parent=1 // pred_fallthru
      _
    // Predicated region
    $region62: #{model_forward.1} parent=1 // pred_check
      _
    $region63: #{model_forward.1} parent=1 // pred_check_branch
      %57 = sbr.rel (0) target = $region65
    $region64: #{model_forward.1} parent=1 // pred_region
      _
    $region65: #{model_forward.1} parent=1 // pred_fallthru
      _
    // Predicated region
    $region66: #{model_forward.1} parent=1 // pred_check
      _
    $region67: #{model_forward.1} parent=1 // pred_check_branch
      %59 = sbr.rel (0) target = $region69
    $region68: #{model_forward.1} parent=1 // pred_region
      _
    $region69: #{model_forward.1} parent=1 // pred_fallthru
      _
    // Predicated region
    $region70: #{model_forward.1} parent=1 // pred_check
      _
    $region71: #{model_forward.1} parent=1 // pred_check_branch
      %61 = sbr.rel (0) target = $region73
    $region72: #{model_forward.1} parent=1 // pred_region
      _
    $region73: #{model_forward.1} parent=1 // pred_fallthru
      _
    // Predicated region
    $region74: #{model_forward.1} parent=1 // pred_check
      _
    $region75: #{model_forward.1} parent=1 // pred_check_branch
      %63 = sbr.rel (0) target = $region77
    $region76: #{model_forward.1} parent=1 // pred_region
      _
    $region77: #{model_forward.1} parent=1 // pred_fallthru
      _
    // Predicated region
    $region78: #{model_forward.1} parent=1 // pred_check
      _
    $region79: #{model_forward.1} parent=1 // pred_check_branch
      %65 = sbr.rel (0) target = $region81
    $region80: #{model_forward.1} parent=1 // pred_region
      _
    $region81: #{model_forward.1} parent=1 // pred_fallthru
      _
    %v67 = vld [vmem:[%s0] sm:$0xff]
    %vm68 = vcmask 261120
    %v69 = vsel %vm68, %v67, 0.0
    %70 = vadd.xlane.f32.xlu0 %v69
    %v71 = vpop.xlane.xlu0 %70
    %v72 = vrcp.pop 32.0
    %v73 = vmul.f32 %v71, %v72
    %v74 = vsub.f32 %v67, %v73
    %v75 = vmul.f32 %v74, %v74
    %v76 = vsel %vm68, %v75, 0.0
    %77 = vadd.xlane.f32.xlu0 %v76
    %v78 = vpop.xlane.xlu0 %77
    %v79 = vmul.f32 %v78, %v72
    %v80 = vadd.f32 %v79, 1e-05
    %v81 = vrsqrt.pop %v80
    %v82 = vmul.f32 %v80, %v81
    %vm83 = vcmp.eq.f32.partialorder %v80, inf
    %v84 = vsel %vm83, %v80, %v82
    %vm85 = vcmp.eq.f32.partialorder %v80, 0.0
    %v86 = vand.u32 %v80, 2147483648
    %v87 = vsel %vm85, %v86, %v84
    %v88 = vrcp.pop %v87
    %v89 = vmul.f32 %v74, %v88
    %v90 = vpack.c.bf16 %v89, %v89
    %v91 = vld [vmem:[%s1] sm:$0xff]
    %v92 = vld [vmem:[%s1 + $0x8] sm:$0xff]
    %v93 = vld [vmem:[%s1 + $0x10] sm:$0xff]
    %v94 = vld [vmem:[%s1 + $0x18] sm:$0xff]
    %v95 = vld [vmem:[%s1 + $0x20] sm:$0xff]
    %v96 = vld [vmem:[%s1 + $0x28] sm:$0xff]
    %v97 = vld [vmem:[%s1 + $0x30] sm:$0xff]
    %v98 = vld [vmem:[%s1 + $0x38] sm:$0xff]
    %v99 = vld [vmem:[%s1 + $0x40] sm:$0xff]
    %v100 = vld [vmem:[%s1 + $0x48] sm:$0xff]
    %v101 = vld [vmem:[%s1 + $0x50] sm:$0xff]
    %v102 = vld [vmem:[%s1 + $0x58] sm:$0xff]
    %v103 = vld [vmem:[%s1 + $0x60] sm:$0xff]
    %v104 = vld [vmem:[%s1 + $0x68] sm:$0xff]
    %v105 = vld [vmem:[%s1 + $0x70] sm:$0xff]
    %v106 = vld [vmem:[%s1 + $0x78] sm:$0xff]
    %v123 = vunpack.c.l.b16 %v91
    %v124 = vunpack.c.h.b16 %v91
    %v125 = vunpack.c.l.b16 %v92
    %v126 = vunpack.c.h.b16 %v92
    %v127 = vunpack.c.l.b16 %v93
    %v128 = vunpack.c.h.b16 %v93
    %v129 = vunpack.c.l.b16 %v94
    %v130 = vunpack.c.h.b16 %v94
    %v131 = vunpack.c.l.b16 %v95
    %v132 = vunpack.c.h.b16 %v95
    %v133 = vunpack.c.l.b16 %v96
    %v134 = vunpack.c.h.b16 %v96
    %v135 = vunpack.c.l.b16 %v97
    %v136 = vunpack.c.h.b16 %v97
    %v137 = vunpack.c.l.b16 %v98
    %v138 = vunpack.c.h.b16 %v98
    %v139 = vunpack.c.l.b16 %v99
    %v140 = vunpack.c.h.b16 %v99
    %v141 = vunpack.c.l.b16 %v100
    %v142 = vunpack.c.h.b16 %v100
    %v143 = vunpack.c.l.b16 %v101
    %v144 = vunpack.c.h.b16 %v101
    %v145 = vunpack.c.l.b16 %v102
    %v146 = vunpack.c.h.b16 %v102
    %v147 = vunpack.c.l.b16 %v103
    %v148 = vunpack.c.h.b16 %v103
    %v149 = vunpack.c.l.b16 %v104
    %v150 = vunpack.c.h.b16 %v104
    %v151 = vunpack.c.l.b16 %v105
    %v152 = vunpack.c.h.b16 %v105
    %v153 = vunpack.c.l.b16 %v106
    %v154 = vunpack.c.h.b16 %v106
    %v155 = vpack.c.b16 %v131, %v123
    %v156 = vpack.c.b16 %v132, %v124
    %v157 = vpack.c.b16 %v133, %v125
    %v158 = vpack.c.b16 %v134, %v126
    %v159 = vpack.c.b16 %v135, %v127
    %v160 = vpack.c.b16 %v136, %v128
    %v161 = vpack.c.b16 %v137, %v129
    %v162 = vpack.c.b16 %v138, %v130
    %v163 = vpack.c.b16 %v147, %v139
    %v164 = vpack.c.b16 %v148, %v140
    %v165 = vpack.c.b16 %v149, %v141
    %v166 = vpack.c.b16 %v150, %v142
    %v167 = vpack.c.b16 %v151, %v143
    %v168 = vpack.c.b16 %v152, %v144
    %v169 = vpack.c.b16 %v153, %v145
    %v170 = vpack.c.b16 %v154, %v146
    %v188 = vsel %vm68, %v90, 0
    %190 = vmatprep.subr.bf16.mxu0 %v156
    %191 = vmatpush1.bf16.msra.mxu0 %v155
    %192 = vmatprep.subr.bf16.mxu0 %v164
    %193 = vmatpush1.bf16.msra.mxu0 %v163
    %194 = vmatprep.subr.bf16.mxu0 0
    %195 = vmatpush1.bf16.msra.mxu0 0
    %196 = vmatprep.subr.bf16.mxu0 0
    %197 = vmatpush1.bf16.msra.mxu0 0
    %198 = vmatprep.subr.bf16.mxu0 0
    %199 = vmatpush1.bf16.msra.mxu0 0
    %200 = vmatprep.subr.bf16.mxu0 0
    %201 = vmatpush1.bf16.msra.mxu0 0
    %202 = vmatprep.subr.bf16.mxu0 0
    %203 = vmatpush1.bf16.msra.mxu0 0
    %204 = vmatprep.subr.bf16.mxu0 0
    %205 = vmatpush1.bf16.msra.mxu0 0
    %206 = vmatprep.subr.bf16.mxu0 0
    %207 = vmatpush1.bf16.msra.mxu0 0
    %208 = vmatprep.subr.bf16.mxu0 0
    %209 = vmatpush1.bf16.msra.mxu0 0
    %210 = vmatprep.subr.bf16.mxu0 0
    %211 = vmatpush1.bf16.msra.mxu0 0
    %212 = vmatprep.subr.bf16.mxu0 0
    %213 = vmatpush1.bf16.msra.mxu0 0
    %214 = vmatprep.subr.bf16.mxu0 0
    %215 = vmatpush1.bf16.msra.mxu0 0
    %216 = vmatprep.subr.bf16.mxu0 0
    %217 = vmatpush1.bf16.msra.mxu0 0
    %218 = vmatprep.subr.bf16.mxu0 0
    %219 = vmatpush1.bf16.msra.mxu0 0
    %220 = vmatprep.subr.bf16.mxu0 0
    %221 = vmatpush1.bf16.msra.mxu0 0
    %222 = vmatprep.mubr.bf16.mxu0 0
    %223 = vmatmul.mubr.bf16.gmra.mrb[0].mxu0 %v188
    %v224 = vpop.f32.mrb[0].mxu0
    %v225 = vadd.f32 0.0, %v224
    %v226 = vpop.f32.mrb[0].mxu0
    %v227 = vadd.f32 0.0, %v226
    %v228 = vpop.f32.mrb[0].mxu0
    %v229 = vpop.f32.mrb[0].mxu0
    %230 = vdwg.mxu0
    %231 = vmatprep.subr.bf16.mxu0 %v158
    %232 = vmatpush1.bf16.msra.mxu0 %v157
    %233 = vmatprep.subr.bf16.mxu0 %v166
    %234 = vmatpush1.bf16.msra.mxu0 %v165
    %235 = vmatprep.subr.bf16.mxu0 0
    %236 = vmatpush1.bf16.msra.mxu0 0
    %237 = vmatprep.subr.bf16.mxu0 0
    %238 = vmatpush1.bf16.msra.mxu0 0
    %239 = vmatprep.subr.bf16.mxu0 0
    %240 = vmatpush1.bf16.msra.mxu0 0
    %241 = vmatprep.subr.bf16.mxu0 0
    %242 = vmatpush1.bf16.msra.mxu0 0
    %243 = vmatprep.subr.bf16.mxu0 0
    %244 = vmatpush1.bf16.msra.mxu0 0
    %245 = vmatprep.subr.bf16.mxu0 0
    %246 = vmatpush1.bf16.msra.mxu0 0
    %247 = vmatprep.subr.bf16.mxu0 0
    %248 = vmatpush1.bf16.msra.mxu0 0
    %249 = vmatprep.subr.bf16.mxu0 0
    %250 = vmatpush1.bf16.msra.mxu0 0
    %251 = vmatprep.subr.bf16.mxu0 0
    %252 = vmatpush1.bf16.msra.mxu0 0
    %253 = vmatprep.subr.bf16.mxu0 0
    %254 = vmatpush1.bf16.msra.mxu0 0
    %255 = vmatprep.subr.bf16.mxu0 0
    %256 = vmatpush1.bf16.msra.mxu0 0
    %257 = vmatprep.subr.bf16.mxu0 0
    %258 = vmatpush1.bf16.msra.mxu0 0
    %259 = vmatprep.subr.bf16.mxu0 0
    %260 = vmatpush1.bf16.msra.mxu0 0
    %261 = vmatprep.subr.bf16.mxu0 0
    %262 = vmatpush1.bf16.msra.mxu0 0
    %263 = vmatprep.mubr.bf16.mxu0 0
    %264 = vmatmul.mubr.bf16.gmra.mrb[0].mxu0 %v188
    %v265 = vpop.f32.mrb[0].mxu0
    %v266 = vadd.f32 0.0, %v265
    %v267 = vpop.f32.mrb[0].mxu0
    %v268 = vadd.f32 0.0, %v267
    %v269 = vpop.f32.mrb[0].mxu0
    %v270 = vpop.f32.mrb[0].mxu0
    %271 = vdwg.mxu0
    %272 = vmatprep.subr.bf16.mxu0 %v160
    %273 = vmatpush1.bf16.msra.mxu0 %v159
    %274 = vmatprep.subr.bf16.mxu0 %v168
    %275 = vmatpush1.bf16.msra.mxu0 %v167
    %276 = vmatprep.subr.bf16.mxu0 0
    %277 = vmatpush1.bf16.msra.mxu0 0
    %278 = vmatprep.subr.bf16.mxu0 0
    %279 = vmatpush1.bf16.msra.mxu0 0
    %280 = vmatprep.subr.bf16.mxu0 0
    %281 = vmatpush1.bf16.msra.mxu0 0
    %282 = vmatprep.subr.bf16.mxu0 0
    %283 = vmatpush1.bf16.msra.mxu0 0
    %284 = vmatprep.subr.bf16.mxu0 0
    %285 = vmatpush1.bf16.msra.mxu0 0
    %286 = vmatprep.subr.bf16.mxu0 0
    %287 = vmatpush1.bf16.msra.mxu0 0
    %288 = vmatprep.subr.bf16.mxu0 0
    %289 = vmatpush1.bf16.msra.mxu0 0
    %290 = vmatprep.subr.bf16.mxu0 0
    %291 = vmatpush1.bf16.msra.mxu0 0
    %292 = vmatprep.subr.bf16.mxu0 0
    %293 = vmatpush1.bf16.msra.mxu0 0
    %294 = vmatprep.subr.bf16.mxu0 0
    %295 = vmatpush1.bf16.msra.mxu0 0
    %296 = vmatprep.subr.bf16.mxu0 0
    %297 = vmatpush1.bf16.msra.mxu0 0
    %298 = vmatprep.subr.bf16.mxu0 0
    %299 = vmatpush1.bf16.msra.mxu0 0
    %300 = vmatprep.subr.bf16.mxu0 0
    %301 = vmatpush1.bf16.msra.mxu0 0
    %302 = vmatprep.subr.bf16.mxu0 0
    %303 = vmatpush1.bf16.msra.mxu0 0
    %304 = vmatprep.mubr.bf16.mxu0 0
    %305 = vmatmul.mubr.bf16.gmra.mrb[0].mxu0 %v188
    %v306 = vpop.f32.mrb[0].mxu0
    %v307 = vadd.f32 0.0, %v306
    %v308 = vpop.f32.mrb[0].mxu0
    %v309 = vadd.f32 0.0, %v308
    %v310 = vpop.f32.mrb[0].mxu0
    %v311 = vpop.f32.mrb[0].mxu0
    %312 = vdwg.mxu0
    %313 = vmatprep.subr.bf16.mxu0 %v162
    %314 = vmatpush1.bf16.msra.mxu0 %v161
    %315 = vmatprep.subr.bf16.mxu0 %v170
    %316 = vmatpush1.bf16.msra.mxu0 %v169
    %317 = vmatprep.subr.bf16.mxu0 0
    %318 = vmatpush1.bf16.msra.mxu0 0
    %319 = vmatprep.subr.bf16.mxu0 0
    %320 = vmatpush1.bf16.msra.mxu0 0
    %321 = vmatprep.subr.bf16.mxu0 0
    %322 = vmatpush1.bf16.msra.mxu0 0
    %323 = vmatprep.subr.bf16.mxu0 0
    %324 = vmatpush1.bf16.msra.mxu0 0
    %325 = vmatprep.subr.bf16.mxu0 0
    %326 = vmatpush1.bf16.msra.mxu0 0
    %327 = vmatprep.subr.bf16.mxu0 0
    %328 = vmatpush1.bf16.msra.mxu0 0
    %329 = vmatprep.subr.bf16.mxu0 0
    %330 = vmatpush1.bf16.msra.mxu0 0
    %331 = vmatprep.subr.bf16.mxu0 0
    %332 = vmatpush1.bf16.msra.mxu0 0
    %333 = vmatprep.subr.bf16.mxu0 0
    %334 = vmatpush1.bf16.msra.mxu0 0
    %335 = vmatprep.subr.bf16.mxu0 0
    %336 = vmatpush1.bf16.msra.mxu0 0
    %337 = vmatprep.subr.bf16.mxu0 0
    %338 = vmatpush1.bf16.msra.mxu0 0
    %339 = vmatprep.subr.bf16.mxu0 0
    %340 = vmatpush1.bf16.msra.mxu0 0
    %341 = vmatprep.subr.bf16.mxu0 0
    %342 = vmatpush1.bf16.msra.mxu0 0
    %343 = vmatprep.subr.bf16.mxu0 0
    %344 = vmatpush1.bf16.msra.mxu0 0
    %345 = vmatprep.mubr.bf16.mxu0 0
    %346 = vmatmul.mubr.bf16.gmra.mrb[0].mxu0 %v188
    %v347 = vpop.f32.mrb[0].mxu0
    %v348 = vadd.f32 0.0, %v347
    %v349 = vpop.f32.mrb[0].mxu0
    %v350 = vadd.f32 0.0, %v349
    %v351 = vpop.f32.mrb[0].mxu0
    %v352 = vpop.f32.mrb[0].mxu0
    %353 = vdwg.mxu0
    %v354 = vpack.c.bf16 %v225, %v225
    %v355 = vpack.c.bf16 %v227, %v227
    %v356 = vpack.c.bf16 %v266, %v266
    %v357 = vpack.c.bf16 %v268, %v268
    %v358 = vpack.c.bf16 %v307, %v307
    %v359 = vpack.c.bf16 %v309, %v309
    %v360 = vpack.c.bf16 %v348, %v348
    %v361 = vpack.c.bf16 %v350, %v350
    %v362 = vld [vmem:[%s2] sm:$0xf]
    %v363 = vld [vmem:[%s2 + $0x4] sm:$0xf]
    %v364 = vld [vmem:[%s2 + $0x8] sm:$0xf]
    %v365 = vld [vmem:[%s2 + $0xc] sm:$0xf]
    %v366 = vld [vmem:[%s2 + $0x10] sm:$0xf]
    %v367 = vld [vmem:[%s2 + $0x14] sm:$0xf]
    %v368 = vld [vmem:[%s2 + $0x18] sm:$0xf]
    %v369 = vld [vmem:[%s2 + $0x1c] sm:$0xf]
    %v370 = vld [vmem:[%s2 + $0x20] sm:$0xf]
    %v371 = vld [vmem:[%s2 + $0x24] sm:$0xf]
    %v372 = vld [vmem:[%s2 + $0x28] sm:$0xf]
    %v373 = vld [vmem:[%s2 + $0x2c] sm:$0xf]
    %v374 = vld [vmem:[%s2 + $0x30] sm:$0xf]
    %v375 = vld [vmem:[%s2 + $0x34] sm:$0xf]
    %v376 = vld [vmem:[%s2 + $0x38] sm:$0xf]
    %v377 = vld [vmem:[%s2 + $0x3c] sm:$0xf]
    %v378 = vld [vmem:[%s2 + $0x40] sm:$0xf]
    %v379 = vld [vmem:[%s2 + $0x44] sm:$0xf]
    %v380 = vld [vmem:[%s2 + $0x48] sm:$0xf]
    %v381 = vld [vmem:[%s2 + $0x4c] sm:$0xf]
    %v382 = vld [vmem:[%s2 + $0x50] sm:$0xf]
    %v383 = vld [vmem:[%s2 + $0x54] sm:$0xf]
    %v384 = vld [vmem:[%s2 + $0x58] sm:$0xf]
    %v385 = vld [vmem:[%s2 + $0x5c] sm:$0xf]
    %v386 = vld [vmem:[%s2 + $0x60] sm:$0xf]
    %v387 = vld [vmem:[%s2 + $0x64] sm:$0xf]
    %v388 = vld [vmem:[%s2 + $0x68] sm:$0xf]
    %v389 = vld [vmem:[%s2 + $0x6c] sm:$0xf]
    %v390 = vld [vmem:[%s2 + $0x70] sm:$0xf]
    %v391 = vld [vmem:[%s2 + $0x74] sm:$0xf]
    %v392 = vld [vmem:[%s2 + $0x78] sm:$0xf]
    %v393 = vld [vmem:[%s2 + $0x7c] sm:$0xf]
    %v394 = vld [vmem:[%s2 + $0x80] sm:$0xf]
    %v395 = vld [vmem:[%s2 + $0x84] sm:$0xf]
    %v396 = vld [vmem:[%s2 + $0x88] sm:$0xf]
    %v397 = vld [vmem:[%s2 + $0x8c] sm:$0xf]
    %v398 = vld [vmem:[%s2 + $0x90] sm:$0xf]
    %v399 = vld [vmem:[%s2 + $0x94] sm:$0xf]
    %v400 = vld [vmem:[%s2 + $0x98] sm:$0xf]
    %v401 = vld [vmem:[%s2 + $0x9c] sm:$0xf]
    %v402 = vld [vmem:[%s2 + $0xa0] sm:$0xf]
    %v403 = vld [vmem:[%s2 + $0xa4] sm:$0xf]
    %v404 = vld [vmem:[%s2 + $0xa8] sm:$0xf]
    %v405 = vld [vmem:[%s2 + $0xac] sm:$0xf]
    %v406 = vld [vmem:[%s2 + $0xb0] sm:$0xf]
    %v407 = vld [vmem:[%s2 + $0xb4] sm:$0xf]
    %v408 = vld [vmem:[%s2 + $0xb8] sm:$0xf]
    %v409 = vld [vmem:[%s2 + $0xbc] sm:$0xf]
    %v410 = vld [vmem:[%s2 + $0xc0] sm:$0xf]
    %v411 = vld [vmem:[%s2 + $0xc4] sm:$0xf]
    %v412 = vld [vmem:[%s2 + $0xc8] sm:$0xf]
    %v413 = vld [vmem:[%s2 + $0xcc] sm:$0xf]
    %v414 = vld [vmem:[%s2 + $0xd0] sm:$0xf]
    %v415 = vld [vmem:[%s2 + $0xd4] sm:$0xf]
    %v416 = vld [vmem:[%s2 + $0xd8] sm:$0xf]
    %v417 = vld [vmem:[%s2 + $0xdc] sm:$0xf]
    %v418 = vld [vmem:[%s2 + $0xe0] sm:$0xf]
    %v419 = vld [vmem:[%s2 + $0xe4] sm:$0xf]
    %v420 = vld [vmem:[%s2 + $0xe8] sm:$0xf]
    %v421 = vld [vmem:[%s2 + $0xec] sm:$0xf]
    %v422 = vld [vmem:[%s2 + $0xf0] sm:$0xf]
    %v423 = vld [vmem:[%s2 + $0xf4] sm:$0xf]
    %v424 = vld [vmem:[%s2 + $0xf8] sm:$0xf]
    %v425 = vld [vmem:[%s2 + $0xfc] sm:$0xf]
    %v426 = vld [vmem:[%s2 + $0x100] sm:$0xf]
    %v427 = vld [vmem:[%s2 + $0x104] sm:$0xf]
    %v428 = vld [vmem:[%s2 + $0x108] sm:$0xf]
    %v429 = vld [vmem:[%s2 + $0x10c] sm:$0xf]
    %v430 = vld [vmem:[%s2 + $0x110] sm:$0xf]
    %v431 = vld [vmem:[%s2 + $0x114] sm:$0xf]
    %v432 = vld [vmem:[%s2 + $0x118] sm:$0xf]
    %v433 = vld [vmem:[%s2 + $0x11c] sm:$0xf]
    %v434 = vld [vmem:[%s2 + $0x120] sm:$0xf]
    %v435 = vld [vmem:[%s2 + $0x124] sm:$0xf]
    %v436 = vld [vmem:[%s2 + $0x128] sm:$0xf]
    %v437 = vld [vmem:[%s2 + $0x12c] sm:$0xf]
    %v438 = vld [vmem:[%s2 + $0x130] sm:$0xf]
    %v439 = vld [vmem:[%s2 + $0x134] sm:$0xf]
    %v440 = vld [vmem:[%s2 + $0x138] sm:$0xf]
    %v441 = vld [vmem:[%s2 + $0x13c] sm:$0xf]
    %v442 = vld [vmem:[%s2 + $0x140] sm:$0xf]
    %v443 = vld [vmem:[%s2 + $0x144] sm:$0xf]
    %v444 = vld [vmem:[%s2 + $0x148] sm:$0xf]
    %v445 = vld [vmem:[%s2 + $0x14c] sm:$0xf]
    %v446 = vld [vmem:[%s2 + $0x150] sm:$0xf]
    %v447 = vld [vmem:[%s2 + $0x154] sm:$0xf]
    %v448 = vld [vmem:[%s2 + $0x158] sm:$0xf]
    %v449 = vld [vmem:[%s2 + $0x15c] sm:$0xf]
    %v450 = vld [vmem:[%s2 + $0x160] sm:$0xf]
    %v451 = vld [vmem:[%s2 + $0x164] sm:$0xf]
    %v452 = vld [vmem:[%s2 + $0x168] sm:$0xf]
    %v453 = vld [vmem:[%s2 + $0x16c] sm:$0xf]
    %v454 = vld [vmem:[%s2 + $0x170] sm:$0xf]
    %v455 = vld [vmem:[%s2 + $0x174] sm:$0xf]
    %v456 = vld [vmem:[%s2 + $0x178] sm:$0xf]
    %v457 = vld [vmem:[%s2 + $0x17c] sm:$0xf]
    %v458 = vld [vmem:[%s2 + $0x180] sm:$0xf]
    %v459 = vld [vmem:[%s2 + $0x184] sm:$0xf]
    %v460 = vld [vmem:[%s2 + $0x188] sm:$0xf]
    %v461 = vld [vmem:[%s2 + $0x18c] sm:$0xf]
    %v462 = vld [vmem:[%s2 + $0x190] sm:$0xf]
    %v463 = vld [vmem:[%s2 + $0x194] sm:$0xf]
    %v464 = vld [vmem:[%s2 + $0x198] sm:$0xf]
    %v465 = vld [vmem:[%s2 + $0x19c] sm:$0xf]
    %v466 = vld [vmem:[%s2 + $0x1a0] sm:$0xf]
    %v467 = vld [vmem:[%s2 + $0x1a4] sm:$0xf]
    %v468 = vld [vmem:[%s2 + $0x1a8] sm:$0xf]
    %v469 = vld [vmem:[%s2 + $0x1ac] sm:$0xf]
    %v470 = vld [vmem:[%s2 + $0x1b0] sm:$0xf]
    %v471 = vld [vmem:[%s2 + $0x1b4] sm:$0xf]
    %v472 = vld [vmem:[%s2 + $0x1b8] sm:$0xf]
    %v473 = vld [vmem:[%s2 + $0x1bc] sm:$0xf]
    %v474 = vld [vmem:[%s2 + $0x1c0] sm:$0xf]
    %v475 = vld [vmem:[%s2 + $0x1c4] sm:$0xf]
    %v476 = vld [vmem:[%s2 + $0x1c8] sm:$0xf]
    %v477 = vld [vmem:[%s2 + $0x1cc] sm:$0xf]
    %v478 = vld [vmem:[%s2 + $0x1d0] sm:$0xf]
    %v479 = vld [vmem:[%s2 + $0x1d4] sm:$0xf]
    %v480 = vld [vmem:[%s2 + $0x1d8] sm:$0xf]
    %v481 = vld [vmem:[%s2 + $0x1dc] sm:$0xf]
    %v482 = vld [vmem:[%s2 + $0x1e0] sm:$0xf]
    %v483 = vld [vmem:[%s2 + $0x1e4] sm:$0xf]
    %v484 = vld [vmem:[%s2 + $0x1e8] sm:$0xf]
    %v485 = vld [vmem:[%s2 + $0x1ec] sm:$0xf]
    %v486 = vld [vmem:[%s2 + $0x1f0] sm:$0xf]
    %v487 = vld [vmem:[%s2 + $0x1f4] sm:$0xf]
    %v488 = vld [vmem:[%s2 + $0x1f8] sm:$0xf]
    %v489 = vld [vmem:[%s2 + $0x1fc] sm:$0xf]
    %v618 = vunpack.c.l.b16 %v362
    %v619 = vunpack.c.l.b16 %v363
    %v620 = vunpack.c.l.b16 %v364
    %v621 = vunpack.c.l.b16 %v365
    %v622 = vunpack.c.l.b16 %v366
    %v623 = vunpack.c.l.b16 %v367
    %v624 = vunpack.c.l.b16 %v368
    %v625 = vunpack.c.l.b16 %v369
    %v626 = vunpack.c.l.b16 %v370
    %v627 = vunpack.c.l.b16 %v371
    %v628 = vunpack.c.l.b16 %v372
    %v629 = vunpack.c.l.b16 %v373
    %v630 = vunpack.c.l.b16 %v374
    %v631 = vunpack.c.l.b16 %v375
    %v632 = vunpack.c.l.b16 %v376
    %v633 = vunpack.c.l.b16 %v377
    %v634 = vunpack.c.l.b16 %v378
    %v635 = vunpack.c.l.b16 %v379
    %v636 = vunpack.c.l.b16 %v380
    %v637 = vunpack.c.l.b16 %v381
    %v638 = vunpack.c.l.b16 %v382
    %v639 = vunpack.c.l.b16 %v383
    %v640 = vunpack.c.l.b16 %v384
    %v641 = vunpack.c.l.b16 %v385
    %v642 = vunpack.c.l.b16 %v386
    %v643 = vunpack.c.l.b16 %v387
    %v644 = vunpack.c.l.b16 %v388
    %v645 = vunpack.c.l.b16 %v389
    %v646 = vunpack.c.l.b16 %v390
    %v647 = vunpack.c.l.b16 %v391
    %v648 = vunpack.c.l.b16 %v392
    %v649 = vunpack.c.l.b16 %v393
    %v650 = vunpack.c.l.b16 %v394
    %v651 = vunpack.c.l.b16 %v395
    %v652 = vunpack.c.l.b16 %v396
    %v653 = vunpack.c.l.b16 %v397
    %v654 = vunpack.c.l.b16 %v398
    %v655 = vunpack.c.l.b16 %v399
    %v656 = vunpack.c.l.b16 %v400
    %v657 = vunpack.c.l.b16 %v401
    %v658 = vunpack.c.l.b16 %v402
    %v659 = vunpack.c.l.b16 %v403
    %v660 = vunpack.c.l.b16 %v404
    %v661 = vunpack.c.l.b16 %v405
    %v662 = vunpack.c.l.b16 %v406
    %v663 = vunpack.c.l.b16 %v407
    %v664 = vunpack.c.l.b16 %v408
    %v665 = vunpack.c.l.b16 %v409
    %v666 = vunpack.c.l.b16 %v410
    %v667 = vunpack.c.l.b16 %v411
    %v668 = vunpack.c.l.b16 %v412
    %v669 = vunpack.c.l.b16 %v413
    %v670 = vunpack.c.l.b16 %v414
    %v671 = vunpack.c.l.b16 %v415
    %v672 = vunpack.c.l.b16 %v416
    %v673 = vunpack.c.l.b16 %v417
    %v674 = vunpack.c.l.b16 %v418
    %v675 = vunpack.c.l.b16 %v419
    %v676 = vunpack.c.l.b16 %v420
    %v677 = vunpack.c.l.b16 %v421
    %v678 = vunpack.c.l.b16 %v422
    %v679 = vunpack.c.l.b16 %v423
    %v680 = vunpack.c.l.b16 %v424
    %v681 = vunpack.c.l.b16 %v425
    %v682 = vunpack.c.l.b16 %v426
    %v683 = vunpack.c.l.b16 %v427
    %v684 = vunpack.c.l.b16 %v428
    %v685 = vunpack.c.l.b16 %v429
    %v686 = vunpack.c.l.b16 %v430
    %v687 = vunpack.c.l.b16 %v431
    %v688 = vunpack.c.l.b16 %v432
    %v689 = vunpack.c.l.b16 %v433
    %v690 = vunpack.c.l.b16 %v434
    %v691 = vunpack.c.l.b16 %v435
    %v692 = vunpack.c.l.b16 %v436
    %v693 = vunpack.c.l.b16 %v437
    %v694 = vunpack.c.l.b16 %v438
    %v695 = vunpack.c.l.b16 %v439
    %v696 = vunpack.c.l.b16 %v440
    %v697 = vunpack.c.l.b16 %v441
    %v698 = vunpack.c.l.b16 %v442
    %v699 = vunpack.c.l.b16 %v443
    %v700 = vunpack.c.l.b16 %v444
    %v701 = vunpack.c.l.b16 %v445
    %v702 = vunpack.c.l.b16 %v446
    %v703 = vunpack.c.l.b16 %v447
    %v704 = vunpack.c.l.b16 %v448
    %v705 = vunpack.c.l.b16 %v449
    %v706 = vunpack.c.l.b16 %v450
    %v707 = vunpack.c.l.b16 %v451
    %v708 = vunpack.c.l.b16 %v452
    %v709 = vunpack.c.l.b16 %v453
    %v710 = vunpack.c.l.b16 %v454
    %v711 = vunpack.c.l.b16 %v455
    %v712 = vunpack.c.l.b16 %v456
    %v713 = vunpack.c.l.b16 %v457
    %v714 = vunpack.c.l.b16 %v458
    %v715 = vunpack.c.l.b16 %v459
    %v716 = vunpack.c.l.b16 %v460
    %v717 = vunpack.c.l.b16 %v461
    %v718 = vunpack.c.l.b16 %v462
    %v719 = vunpack.c.l.b16 %v463
    %v720 = vunpack.c.l.b16 %v464
    %v721 = vunpack.c.l.b16 %v465
    %v722 = vunpack.c.l.b16 %v466
    %v723 = vunpack.c.l.b16 %v467
    %v724 = vunpack.c.l.b16 %v468
    %v725 = vunpack.c.l.b16 %v469
    %v726 = vunpack.c.l.b16 %v470
    %v727 = vunpack.c.l.b16 %v471
    %v728 = vunpack.c.l.b16 %v472
    %v729 = vunpack.c.l.b16 %v473
    %v730 = vunpack.c.l.b16 %v474
    %v731 = vunpack.c.l.b16 %v475
    %v732 = vunpack.c.l.b16 %v476
    %v733 = vunpack.c.l.b16 %v477
    %v734 = vunpack.c.l.b16 %v478
    %v735 = vunpack.c.l.b16 %v479
    %v736 = vunpack.c.l.b16 %v480
    %v737 = vunpack.c.l.b16 %v481
    %v738 = vunpack.c.l.b16 %v482
    %v739 = vunpack.c.l.b16 %v483
    %v740 = vunpack.c.l.b16 %v484
    %v741 = vunpack.c.l.b16 %v485
    %v742 = vunpack.c.l.b16 %v486
    %v743 = vunpack.c.l.b16 %v487
    %v744 = vunpack.c.l.b16 %v488
    %v745 = vunpack.c.l.b16 %v489
    %v746 = vpack.c.b16 %v619, %v618
    %v747 = vpack.c.b16 %v621, %v620
    %v748 = vpack.c.b16 %v623, %v622
    %v749 = vpack.c.b16 %v625, %v624
    %v750 = vpack.c.b16 %v627, %v626
    %v751 = vpack.c.b16 %v629, %v628
    %v752 = vpack.c.b16 %v631, %v630
    %v753 = vpack.c.b16 %v633, %v632
    %v754 = vpack.c.b16 %v635, %v634
    %v755 = vpack.c.b16 %v637, %v636
    %v756 = vpack.c.b16 %v639, %v638
    %v757 = vpack.c.b16 %v641, %v640
    %v758 = vpack.c.b16 %v643, %v642
    %v759 = vpack.c.b16 %v645, %v644
    %v760 = vpack.c.b16 %v647, %v646
    %v761 = vpack.c.b16 %v649, %v648
    %v762 = vpack.c.b16 %v651, %v650
    %v763 = vpack.c.b16 %v653, %v652
    %v764 = vpack.c.b16 %v655, %v654
    %v765 = vpack.c.b16 %v657, %v656
    %v766 = vpack.c.b16 %v659, %v658
    %v767 = vpack.c.b16 %v661, %v660
    %v768 = vpack.c.b16 %v663, %v662
    %v769 = vpack.c.b16 %v665, %v664
    %v770 = vpack.c.b16 %v667, %v666
    %v771 = vpack.c.b16 %v669, %v668
    %v772 = vpack.c.b16 %v671, %v670
    %v773 = vpack.c.b16 %v673, %v672
    %v774 = vpack.c.b16 %v675, %v674
    %v775 = vpack.c.b16 %v677, %v676
    %v776 = vpack.c.b16 %v679, %v678
    %v777 = vpack.c.b16 %v681, %v680
    %v778 = vpack.c.b16 %v683, %v682
    %v779 = vpack.c.b16 %v685, %v684
    %v780 = vpack.c.b16 %v687, %v686
    %v781 = vpack.c.b16 %v689, %v688
    %v782 = vpack.c.b16 %v691, %v690
    %v783 = vpack.c.b16 %v693, %v692
    %v784 = vpack.c.b16 %v695, %v694
    %v785 = vpack.c.b16 %v697, %v696
    %v786 = vpack.c.b16 %v699, %v698
    %v787 = vpack.c.b16 %v701, %v700
    %v788 = vpack.c.b16 %v703, %v702
    %v789 = vpack.c.b16 %v705, %v704
    %v790 = vpack.c.b16 %v707, %v706
    %v791 = vpack.c.b16 %v709, %v708
    %v792 = vpack.c.b16 %v711, %v710
    %v793 = vpack.c.b16 %v713, %v712
    %v794 = vpack.c.b16 %v715, %v714
    %v795 = vpack.c.b16 %v717, %v716
    %v796 = vpack.c.b16 %v719, %v718
    %v797 = vpack.c.b16 %v721, %v720
    %v798 = vpack.c.b16 %v723, %v722
    %v799 = vpack.c.b16 %v725, %v724
    %v800 = vpack.c.b16 %v727, %v726
    %v801 = vpack.c.b16 %v729, %v728
    %v802 = vpack.c.b16 %v731, %v730
    %v803 = vpack.c.b16 %v733, %v732
    %v804 = vpack.c.b16 %v735, %v734
    %v805 = vpack.c.b16 %v737, %v736
    %v806 = vpack.c.b16 %v739, %v738
    %v807 = vpack.c.b16 %v741, %v740
    %v808 = vpack.c.b16 %v743, %v742
    %v809 = vpack.c.b16 %v745, %v744
    %874 = vmatprep.subr.bf16.mxu0 0
    %875 = vmatpush1.bf16.msra.mxu0 %v746
    %876 = vmatprep.subr.bf16.mxu0 0
    %877 = vmatpush1.bf16.msra.mxu0 %v747
    %878 = vmatprep.subr.bf16.mxu0 0
    %879 = vmatpush1.bf16.msra.mxu0 %v748
    %880 = vmatprep.subr.bf16.mxu0 0
    %881 = vmatpush1.bf16.msra.mxu0 %v749
    %882 = vmatprep.subr.bf16.mxu0 0
    %883 = vmatpush1.bf16.msra.mxu0 %v750
    %884 = vmatprep.subr.bf16.mxu0 0
    %885 = vmatpush1.bf16.msra.mxu0 %v751
    %886 = vmatprep.subr.bf16.mxu0 0
    %887 = vmatpush1.bf16.msra.mxu0 %v752
    %888 = vmatprep.subr.bf16.mxu0 0
    %889 = vmatpush1.bf16.msra.mxu0 %v753
    %890 = vmatprep.subr.bf16.mxu0 0
    %891 = vmatpush1.bf16.msra.mxu0 %v754
    %892 = vmatprep.subr.bf16.mxu0 0
    %893 = vmatpush1.bf16.msra.mxu0 %v755
    %894 = vmatprep.subr.bf16.mxu0 0
    %895 = vmatpush1.bf16.msra.mxu0 %v756
    %896 = vmatprep.subr.bf16.mxu0 0
    %897 = vmatpush1.bf16.msra.mxu0 %v757
    %898 = vmatprep.subr.bf16.mxu0 0
    %899 = vmatpush1.bf16.msra.mxu0 %v758
    %900 = vmatprep.subr.bf16.mxu0 0
    %901 = vmatpush1.bf16.msra.mxu0 %v759
    %902 = vmatprep.subr.bf16.mxu0 0
    %903 = vmatpush1.bf16.msra.mxu0 %v760
    %904 = vmatprep.subr.bf16.mxu0 0
    %905 = vmatpush1.bf16.msra.mxu0 %v761
    %906 = vmatprep.mubr.bf16.mxu0 %v355
    %907 = vmatmul.mubr.bf16.gmra.mrb[0].mxu0 %v354
    %v908 = vpop.f32.mrb[0].mxu0
    %v909 = vadd.f32 0.0, %v908
    %v910 = vpop.f32.mrb[0].mxu0
    %v911 = vpop.f32.mrb[0].mxu0
    %v912 = vpop.f32.mrb[0].mxu0
    %913 = vdwg.mxu0
    %914 = vmatprep.subr.bf16.mxu0 0
    %915 = vmatpush1.bf16.msra.mxu0 %v762
    %916 = vmatprep.subr.bf16.mxu0 0
    %917 = vmatpush1.bf16.msra.mxu0 %v763
    %918 = vmatprep.subr.bf16.mxu0 0
    %919 = vmatpush1.bf16.msra.mxu0 %v764
    %920 = vmatprep.subr.bf16.mxu0 0
    %921 = vmatpush1.bf16.msra.mxu0 %v765
    %922 = vmatprep.subr.bf16.mxu0 0
    %923 = vmatpush1.bf16.msra.mxu0 %v766
    %924 = vmatprep.subr.bf16.mxu0 0
    %925 = vmatpush1.bf16.msra.mxu0 %v767
    %926 = vmatprep.subr.bf16.mxu0 0
    %927 = vmatpush1.bf16.msra.mxu0 %v768
    %928 = vmatprep.subr.bf16.mxu0 0
    %929 = vmatpush1.bf16.msra.mxu0 %v769
    %930 = vmatprep.subr.bf16.mxu0 0
    %931 = vmatpush1.bf16.msra.mxu0 %v770
    %932 = vmatprep.subr.bf16.mxu0 0
    %933 = vmatpush1.bf16.msra.mxu0 %v771
    %934 = vmatprep.subr.bf16.mxu0 0
    %935 = vmatpush1.bf16.msra.mxu0 %v772
    %936 = vmatprep.subr.bf16.mxu0 0
    %937 = vmatpush1.bf16.msra.mxu0 %v773
    %938 = vmatprep.subr.bf16.mxu0 0
    %939 = vmatpush1.bf16.msra.mxu0 %v774
    %940 = vmatprep.subr.bf16.mxu0 0
    %941 = vmatpush1.bf16.msra.mxu0 %v775
    %942 = vmatprep.subr.bf16.mxu0 0
    %943 = vmatpush1.bf16.msra.mxu0 %v776
    %944 = vmatprep.subr.bf16.mxu0 0
    %945 = vmatpush1.bf16.msra.mxu0 %v777
    %946 = vmatprep.mubr.bf16.mxu0 %v357
    %947 = vmatmul.mubr.bf16.gmra.mrb[0].mxu0 %v356
    %v948 = vpop.f32.mrb[0].mxu0
    %v949 = vadd.f32 %v909, %v948
    %v950 = vpop.f32.mrb[0].mxu0
    %v951 = vpop.f32.mrb[0].mxu0
    %v952 = vpop.f32.mrb[0].mxu0
    %953 = vdwg.mxu0
    %954 = vmatprep.subr.bf16.mxu0 0
    %955 = vmatpush1.bf16.msra.mxu0 %v778
    %956 = vmatprep.subr.bf16.mxu0 0
    %957 = vmatpush1.bf16.msra.mxu0 %v779
    %958 = vmatprep.subr.bf16.mxu0 0
    %959 = vmatpush1.bf16.msra.mxu0 %v780
    %960 = vmatprep.subr.bf16.mxu0 0
    %961 = vmatpush1.bf16.msra.mxu0 %v781
    %962 = vmatprep.subr.bf16.mxu0 0
    %963 = vmatpush1.bf16.msra.mxu0 %v782
    %964 = vmatprep.subr.bf16.mxu0 0
    %965 = vmatpush1.bf16.msra.mxu0 %v783
    %966 = vmatprep.subr.bf16.mxu0 0
    %967 = vmatpush1.bf16.msra.mxu0 %v784
    %968 = vmatprep.subr.bf16.mxu0 0
    %969 = vmatpush1.bf16.msra.mxu0 %v785
    %970 = vmatprep.subr.bf16.mxu0 0
    %971 = vmatpush1.bf16.msra.mxu0 %v786
    %972 = vmatprep.subr.bf16.mxu0 0
    %973 = vmatpush1.bf16.msra.mxu0 %v787
    %974 = vmatprep.subr.bf16.mxu0 0
    %975 = vmatpush1.bf16.msra.mxu0 %v788
    %976 = vmatprep.subr.bf16.mxu0 0
    %977 = vmatpush1.bf16.msra.mxu0 %v789
    %978 = vmatprep.subr.bf16.mxu0 0
    %979 = vmatpush1.bf16.msra.mxu0 %v790
    %980 = vmatprep.subr.bf16.mxu0 0
    %981 = vmatpush1.bf16.msra.mxu0 %v791
    %982 = vmatprep.subr.bf16.mxu0 0
    %983 = vmatpush1.bf16.msra.mxu0 %v792
    %984 = vmatprep.subr.bf16.mxu0 0
    %985 = vmatpush1.bf16.msra.mxu0 %v793
    %986 = vmatprep.mubr.bf16.mxu0 %v359
    %987 = vmatmul.mubr.bf16.gmra.mrb[0].mxu0 %v358
    %v988 = vpop.f32.mrb[0].mxu0
    %v989 = vadd.f32 %v949, %v988
    %v990 = vpop.f32.mrb[0].mxu0
    %v991 = vpop.f32.mrb[0].mxu0
    %v992 = vpop.f32.mrb[0].mxu0
    %993 = vdwg.mxu0
    %994 = vmatprep.subr.bf16.mxu0 0
    %995 = vmatpush1.bf16.msra.mxu0 %v794
    %996 = vmatprep.subr.bf16.mxu0 0
    %997 = vmatpush1.bf16.msra.mxu0 %v795
    %998 = vmatprep.subr.bf16.mxu0 0
    %999 = vmatpush1.bf16.msra.mxu0 %v796
    %1000 = vmatprep.subr.bf16.mxu0 0
    %1001 = vmatpush1.bf16.msra.mxu0 %v797
    %1002 = vmatprep.subr.bf16.mxu0 0
    %1003 = vmatpush1.bf16.msra.mxu0 %v798
    %1004 = vmatprep.subr.bf16.mxu0 0
    %1005 = vmatpush1.bf16.msra.mxu0 %v799
    %1006 = vmatprep.subr.bf16.mxu0 0
    %1007 = vmatpush1.bf16.msra.mxu0 %v800
    %1008 = vmatprep.subr.bf16.mxu0 0
    %1009 = vmatpush1.bf16.msra.mxu0 %v801
    %1010 = vmatprep.subr.bf16.mxu0 0
    %1011 = vmatpush1.bf16.msra.mxu0 %v802
    %1012 = vmatprep.subr.bf16.mxu0 0
    %1013 = vmatpush1.bf16.msra.mxu0 %v803
    %1014 = vmatprep.subr.bf16.mxu0 0
    %1015 = vmatpush1.bf16.msra.mxu0 %v804
    %1016 = vmatprep.subr.bf16.mxu0 0
    %1017 = vmatpush1.bf16.msra.mxu0 %v805
    %1018 = vmatprep.subr.bf16.mxu0 0
    %1019 = vmatpush1.bf16.msra.mxu0 %v806
    %1020 = vmatprep.subr.bf16.mxu0 0
    %1021 = vmatpush1.bf16.msra.mxu0 %v807
    %1022 = vmatprep.subr.bf16.mxu0 0
    %1023 = vmatpush1.bf16.msra.mxu0 %v808
    %1024 = vmatprep.subr.bf16.mxu0 0
    %1025 = vmatpush1.bf16.msra.mxu0 %v809
    %1026 = vmatprep.mubr.bf16.mxu0 %v361
    %1027 = vmatmul.mubr.bf16.gmra.mrb[0].mxu0 %v360
    %v1028 = vpop.f32.mrb[0].mxu0
    %v1029 = vadd.f32 %v989, %v1028
    %v1030 = vpop.f32.mrb[0].mxu0
    %v1031 = vpop.f32.mrb[0].mxu0
    %v1032 = vpop.f32.mrb[0].mxu0
    %1033 = vdwg.mxu0
    %v1034 = vpack.c.bf16 %v1029, %v1029
    %v1035 = vld [vmem:[%s15] sm:$0xff]
    %v1036 = vld [vmem:[%s16] sm:$0xff]
    %v1037 = vld [vmem:[%s17] sm:$0xf]
    %v1038 = vld [vmem:[%s17 + $0x4] sm:$0xf]
    %v1039 = vld [vmem:[%s17 + $0x8] sm:$0xf]
    %v1040 = vld [vmem:[%s17 + $0xc] sm:$0xf]
    %v1041 = vld [vmem:[%s17 + $0x10] sm:$0xf]
    %v1042 = vld [vmem:[%s17 + $0x14] sm:$0xf]
    %v1043 = vld [vmem:[%s17 + $0x18] sm:$0xf]
    %v1044 = vld [vmem:[%s17 + $0x1c] sm:$0xf]
    %v1045 = vld [vmem:[%s18] sm:$0xff]
    %v1046 = vld [vmem:[%s19] sm:$0xff]
    %vm1047 = vcmask 523264
    %v1048 = vsel %vm1047, %v1029, 0.0
    %1049 = vadd.xlane.f32.xlu0 %v1048
    %v1050 = vpop.xlane.xlu0 %1049
    %v1051 = vrcp.pop 64.0
    %v1052 = vmul.f32 %v1050, %v1051
    %v1053 = vsub.f32 %v1029, %v1052
    %v1054 = vmul.f32 %v1053, %v1053
    %v1055 = vsel %vm1047, %v1054, 0.0
    %1056 = vadd.xlane.f32.xlu0 %v1055
    %v1057 = vpop.xlane.xlu0 %1056
    %v1058 = vmul.f32 %v1057, %v1051
    %v1059 = vadd.f32 %v1058, 1e-05
    %v1060 = vrsqrt.pop %v1059
    %v1061 = vmul.f32 %v1053, %v1060
    %v1062 = vpack.c.bf16 %v1061, %v1061
    %v1063 = vld [vmem:[%s5] sm:$0xff]
    %v1064 = vld [vmem:[%s5 + $0x8] sm:$0xff]
    %v1065 = vld [vmem:[%s5 + $0x10] sm:$0xff]
    %v1066 = vld [vmem:[%s5 + $0x18] sm:$0xff]
    %v1067 = vld [vmem:[%s5 + $0x20] sm:$0xff]
    %v1068 = vld [vmem:[%s5 + $0x28] sm:$0xff]
    %v1069 = vld [vmem:[%s5 + $0x30] sm:$0xff]
    %v1070 = vld [vmem:[%s5 + $0x38] sm:$0xff]
    %v1071 = vld [vmem:[%s6] sm:$0x3]
    %v1073 = vlaneseq
    %v1074 = vshrl.u32 %v1073, 7
    %v1075 = vsub.s32 0, %v1074
    %v1076 = vrot.slane %v1071, %v1075
    %v1077 = vlaneseq
    %v1078 = vshrl.u32 %v1077, 7
    %v1079 = vsub.s32 1, %v1078
    %v1080 = vrot.slane %v1071, %v1079
    %v1091 = vunpack.c.l.b16 %v1063
    %v1092 = vunpack.c.h.b16 %v1063
    %v1093 = vunpack.c.l.b16 %v1064
    %v1094 = vunpack.c.h.b16 %v1064
    %v1095 = vunpack.c.l.b16 %v1065
    %v1096 = vunpack.c.h.b16 %v1065
    %v1097 = vunpack.c.l.b16 %v1066
    %v1098 = vunpack.c.h.b16 %v1066
    %v1099 = vunpack.c.l.b16 %v1067
    %v1100 = vunpack.c.h.b16 %v1067
    %v1101 = vunpack.c.l.b16 %v1068
    %v1102 = vunpack.c.h.b16 %v1068
    %v1103 = vunpack.c.l.b16 %v1069
    %v1104 = vunpack.c.h.b16 %v1069
    %v1105 = vunpack.c.l.b16 %v1070
    %v1106 = vunpack.c.h.b16 %v1070
    %v1107 = vpack.c.b16 %v1093, %v1091
    %v1108 = vpack.c.b16 %v1094, %v1092
    %v1109 = vpack.c.b16 %v1097, %v1095
    %v1110 = vpack.c.b16 %v1098, %v1096
    %v1111 = vpack.c.b16 %v1101, %v1099
    %v1112 = vpack.c.b16 %v1102, %v1100
    %v1113 = vpack.c.b16 %v1105, %v1103
    %v1114 = vpack.c.b16 %v1106, %v1104
    %v1124 = vsel %vm1047, %v1062, 0
    %1126 = vmatprep.subr.bf16.mxu0 %v1108
    %1127 = vmatpush1.bf16.msra.mxu0 %v1107
    %1128 = vmatprep.subr.bf16.mxu0 %v1110
    %1129 = vmatpush1.bf16.msra.mxu0 %v1109
    %1130 = vmatprep.subr.bf16.mxu0 %v1112
    %1131 = vmatpush1.bf16.msra.mxu0 %v1111
    %1132 = vmatprep.subr.bf16.mxu0 %v1114
    %1133 = vmatpush1.bf16.msra.mxu0 %v1113
    %1134 = vmatprep.subr.bf16.mxu0 0
    %1135 = vmatpush1.bf16.msra.mxu0 0
    %1136 = vmatprep.subr.bf16.mxu0 0
    %1137 = vmatpush1.bf16.msra.mxu0 0
    %1138 = vmatprep.subr.bf16.mxu0 0
    %1139 = vmatpush1.bf16.msra.mxu0 0
    %1140 = vmatprep.subr.bf16.mxu0 0
    %1141 = vmatpush1.bf16.msra.mxu0 0
    %1142 = vmatprep.subr.bf16.mxu0 0
    %1143 = vmatpush1.bf16.msra.mxu0 0
    %1144 = vmatprep.subr.bf16.mxu0 0
    %1145 = vmatpush1.bf16.msra.mxu0 0
    %1146 = vmatprep.subr.bf16.mxu0 0
    %1147 = vmatpush1.bf16.msra.mxu0 0
    %1148 = vmatprep.subr.bf16.mxu0 0
    %1149 = vmatpush1.bf16.msra.mxu0 0
    %1150 = vmatprep.subr.bf16.mxu0 0
    %1151 = vmatpush1.bf16.msra.mxu0 0
    %1152 = vmatprep.subr.bf16.mxu0 0
    %1153 = vmatpush1.bf16.msra.mxu0 0
    %1154 = vmatprep.subr.bf16.mxu0 0
    %1155 = vmatpush1.bf16.msra.mxu0 0
    %1156 = vmatprep.subr.bf16.mxu0 0
    %1157 = vmatpush1.bf16.msra.mxu0 0
    %1158 = vmatprep.mubr.bf16.mxu0 0
    %1159 = vmatmul.mubr.bf16.gmra.mrb[0].mxu0 %v1124
    %v1160 = vpop.f32.mrb[0].mxu0
    %v1161 = vadd.f32 %v1076, %v1160
    %v1162 = vpop.f32.mrb[0].mxu0
    %v1163 = vadd.f32 %v1080, %v1162
    %v1164 = vpop.f32.mrb[0].mxu0
    %v1165 = vpop.f32.mrb[0].mxu0
    %1166 = vdwg.mxu0
    %v1167 = vmul.f32 %v1161, %v1035
    %v1168 = vpack.c.bf16 %v1161, %v1161
    %v1177 = vunpack.c.l.b16 %v1037
    %v1178 = vunpack.c.l.b16 %v1038
    %v1179 = vunpack.c.l.b16 %v1039
    %v1180 = vunpack.c.l.b16 %v1040
    %v1181 = vunpack.c.l.b16 %v1041
    %v1182 = vunpack.c.l.b16 %v1042
    %v1183 = vunpack.c.l.b16 %v1043
    %v1184 = vunpack.c.l.b16 %v1044
    %v1185 = vpack.c.b16 %v1178, %v1177
    %v1186 = vpack.c.b16 %v1180, %v1179
    %v1187 = vpack.c.b16 %v1182, %v1181
    %v1188 = vpack.c.b16 %v1184, %v1183
    %v1194 = vsel %vm1047, %v1168, 0
    %1196 = vmatprep.subr.bf16.mxu0 0
    %1197 = vmatpush1.bf16.msra.mxu0 %v1185
    %1198 = vmatprep.subr.bf16.mxu0 0
    %1199 = vmatpush1.bf16.msra.mxu0 %v1186
    %1200 = vmatprep.subr.bf16.mxu0 0
    %1201 = vmatpush1.bf16.msra.mxu0 %v1187
    %1202 = vmatprep.subr.bf16.mxu0 0
    %1203 = vmatpush1.bf16.msra.mxu0 %v1188
    %1204 = vmatprep.subr.bf16.mxu0 0
    %1205 = vmatpush1.bf16.msra.mxu0 0
    %1206 = vmatprep.subr.bf16.mxu0 0
    %1207 = vmatpush1.bf16.msra.mxu0 0
    %1208 = vmatprep.subr.bf16.mxu0 0
    %1209 = vmatpush1.bf16.msra.mxu0 0
    %1210 = vmatprep.subr.bf16.mxu0 0
    %1211 = vmatpush1.bf16.msra.mxu0 0
    %1212 = vmatprep.subr.bf16.mxu0 0
    %1213 = vmatpush1.bf16.msra.mxu0 0
    %1214 = vmatprep.subr.bf16.mxu0 0
    %1215 = vmatpush1.bf16.msra.mxu0 0
    %1216 = vmatprep.subr.bf16.mxu0 0
    %1217 = vmatpush1.bf16.msra.mxu0 0
    %1218 = vmatprep.subr.bf16.mxu0 0
    %1219 = vmatpush1.bf16.msra.mxu0 0
    %1220 = vmatprep.subr.bf16.mxu0 0
    %1221 = vmatpush1.bf16.msra.mxu0 0
    %1222 = vmatprep.subr.bf16.mxu0 0
    %1223 = vmatpush1.bf16.msra.mxu0 0
    %1224 = vmatprep.subr.bf16.mxu0 0
    %1225 = vmatpush1.bf16.msra.mxu0 0
    %1226 = vmatprep.subr.bf16.mxu0 0
    %1227 = vmatpush1.bf16.msra.mxu0 0
    %1228 = vmatprep.mubr.bf16.mxu0 0
    %1229 = vmatmul.mubr.bf16.gmra.mrb[0].mxu0 %v1194
    %v1230 = vpop.f32.mrb[0].mxu0
    %v1231 = vadd.f32 0.0, %v1230
    %v1232 = vpop.f32.mrb[0].mxu0
    %v1233 = vpop.f32.mrb[0].mxu0
    %v1234 = vpop.f32.mrb[0].mxu0
    %1235 = vdwg.mxu0
    %v1236 = vmul.f32 %v1231, %v1036
    %v1237 = vadd.f32 %v1167, %v1236
    %1239 = vrot.lane.b32.xlu0 %v1035, 64
    %v1240 = vpop.permute.xlu0 %1239
    %v1242 = vmul.f32 %v1161, %v1240
    %1244 = vrot.lane.b32.xlu0 %v1168, 64
    %v1245 = vpop.permute.xlu0 %1244
    %v1247 = vsel %vm1047, %v1245, 0
    %1249 = vmatprep.subr.bf16.mxu0 0
    %1250 = vmatpush1.bf16.msra.mxu0 %v1185
    %1251 = vmatprep.subr.bf16.mxu0 0
    %1252 = vmatpush1.bf16.msra.mxu0 %v1186
    %1253 = vmatprep.subr.bf16.mxu0 0
    %1254 = vmatpush1.bf16.msra.mxu0 %v1187
    %1255 = vmatprep.subr.bf16.mxu0 0
    %1256 = vmatpush1.bf16.msra.mxu0 %v1188
    %1257 = vmatprep.subr.bf16.mxu0 0
    %1258 = vmatpush1.bf16.msra.mxu0 0
    %1259 = vmatprep.subr.bf16.mxu0 0
    %1260 = vmatpush1.bf16.msra.mxu0 0
    %1261 = vmatprep.subr.bf16.mxu0 0
    %1262 = vmatpush1.bf16.msra.mxu0 0
    %1263 = vmatprep.subr.bf16.mxu0 0
    %1264 = vmatpush1.bf16.msra.mxu0 0
    %1265 = vmatprep.subr.bf16.mxu0 0
    %1266 = vmatpush1.bf16.msra.mxu0 0
    %1267 = vmatprep.subr.bf16.mxu0 0
    %1268 = vmatpush1.bf16.msra.mxu0 0
    %1269 = vmatprep.subr.bf16.mxu0 0
    %1270 = vmatpush1.bf16.msra.mxu0 0
    %1271 = vmatprep.subr.bf16.mxu0 0
    %1272 = vmatpush1.bf16.msra.mxu0 0
    %1273 = vmatprep.subr.bf16.mxu0 0
    %1274 = vmatpush1.bf16.msra.mxu0 0
    %1275 = vmatprep.subr.bf16.mxu0 0
    %1276 = vmatpush1.bf16.msra.mxu0 0
    %1277 = vmatprep.subr.bf16.mxu0 0
    %1278 = vmatpush1.bf16.msra.mxu0 0
    %1279 = vmatprep.subr.bf16.mxu0 0
    %1280 = vmatpush1.bf16.msra.mxu0 0
    %1281 = vmatprep.mubr.bf16.mxu0 0
    %1282 = vmatmul.mubr.bf16.gmra.mrb[0].mxu0 %v1247
    %v1283 = vpop.f32.mrb[0].mxu0
    %v1284 = vadd.f32 0.0, %v1283
    %v1285 = vpop.f32.mrb[0].mxu0
    %v1286 = vpop.f32.mrb[0].mxu0
    %v1287 = vpop.f32.mrb[0].mxu0
    %1288 = vdwg.mxu0
    %v1289 = vmul.f32 %v1284, %v1036
    %1291 = vrot.lane.b32.xlu0 %v1289, 64
    %v1292 = vpop.permute.xlu0 %1291
    %v1294 = vadd.f32 %v1242, %v1292
    %v1295 = vpack.c.bf16 %v1237, %v1237
    %v1296 = vpack.c.bf16 %v1294, %v1294
    %v1297 = vpack.c.bf16 %v1163, %v1163
    %v1298 = vld [vmem:[%s3] sm:$0xf]
    %v1299 = vld [vmem:[%s3 + $0x4] sm:$0xf]
    %v1302 = vunpack.c.l.b16 %v1298
    %v1303 = vunpack.c.l.b16 %v1299
    %v1304 = vpack.c.b16 %v1303, %v1302
    %vm1306 = vcmask 130048
    %v1308 = vsel %vm1306, %v1295, 0
    %1310 = vmatprep.subr.bf16.mxu0 0
    %1311 = vmatpush1.bf16.msra.mxu0 %v1304
    %1312 = vmatprep.subr.bf16.mxu0 0
    %1313 = vmatpush1.bf16.msra.mxu0 0
    %1314 = vmatprep.subr.bf16.mxu0 0
    %1315 = vmatpush1.bf16.msra.mxu0 0
    %1316 = vmatprep.subr.bf16.mxu0 0
    %1317 = vmatpush1.bf16.msra.mxu0 0
    %1318 = vmatprep.subr.bf16.mxu0 0
    %1319 = vmatpush1.bf16.msra.mxu0 0
    %1320 = vmatprep.subr.bf16.mxu0 0
    %1321 = vmatpush1.bf16.msra.mxu0 0
    %1322 = vmatprep.subr.bf16.mxu0 0
    %1323 = vmatpush1.bf16.msra.mxu0 0
    %1324 = vmatprep.subr.bf16.mxu0 0
    %1325 = vmatpush1.bf16.msra.mxu0 0
    %1326 = vmatprep.subr.bf16.mxu0 0
    %1327 = vmatpush1.bf16.msra.mxu0 0
    %1328 = vmatprep.subr.bf16.mxu0 0
    %1329 = vmatpush1.bf16.msra.mxu0 0
    %1330 = vmatprep.subr.bf16.mxu0 0
    %1331 = vmatpush1.bf16.msra.mxu0 0
    %1332 = vmatprep.subr.bf16.mxu0 0
    %1333 = vmatpush1.bf16.msra.mxu0 0
    %1334 = vmatprep.subr.bf16.mxu0 0
    %1335 = vmatpush1.bf16.msra.mxu0 0
    %1336 = vmatprep.subr.bf16.mxu0 0
    %1337 = vmatpush1.bf16.msra.mxu0 0
    %1338 = vmatprep.subr.bf16.mxu0 0
    %1339 = vmatpush1.bf16.msra.mxu0 0
    %1340 = vmatprep.subr.bf16.mxu0 0
    %1341 = vmatpush1.bf16.msra.mxu0 0
    %1342 = vmatprep.mubr.bf16.mxu0 0
    %1343 = vmatmul.mubr.bf16.gmra.mrb[0].mxu0 %v1308
    %v1344 = vpop.f32.mrb[0].mxu0
    %v1345 = vadd.f32 0.0, %v1344
    %v1346 = vpop.f32.mrb[0].mxu0
    %v1347 = vpop.f32.mrb[0].mxu0
    %v1348 = vpop.f32.mrb[0].mxu0
    %1349 = vdwg.mxu0
    %v1351 = vsel %vm1306, %v1034, 0
    %1353 = vmatprep.subr.bf16.mxu0 0
    %1354 = vmatpush1.bf16.xpose.msra.mxu0 %v1351
    %1355 = vmatprep.subr.bf16.mxu0 0
    %1356 = vmatpush1.bf16.xpose.msra.mxu0 0
    %1357 = vmatprep.subr.bf16.mxu0 0
    %1358 = vmatpush1.bf16.xpose.msra.mxu0 0
    %1359 = vmatprep.subr.bf16.mxu0 0
    %1360 = vmatpush1.bf16.xpose.msra.mxu0 0
    %1361 = vmatprep.subr.bf16.mxu0 0
    %1362 = vmatpush1.bf16.xpose.msra.mxu0 0
    %1363 = vmatprep.subr.bf16.mxu0 0
    %1364 = vmatpush1.bf16.xpose.msra.mxu0 0
    %1365 = vmatprep.subr.bf16.mxu0 0
    %1366 = vmatpush1.bf16.xpose.msra.mxu0 0
    %1367 = vmatprep.subr.bf16.mxu0 0
    %1368 = vmatpush1.bf16.xpose.msra.mxu0 0
    %1369 = vmatprep.subr.bf16.mxu0 0
    %1370 = vmatpush1.bf16.xpose.msra.mxu0 0
    %1371 = vmatprep.subr.bf16.mxu0 0
    %1372 = vmatpush1.bf16.xpose.msra.mxu0 0
    %1373 = vmatprep.subr.bf16.mxu0 0
    %1374 = vmatpush1.bf16.xpose.msra.mxu0 0
    %1375 = vmatprep.subr.bf16.mxu0 0
    %1376 = vmatpush1.bf16.xpose.msra.mxu0 0
    %1377 = vmatprep.subr.bf16.mxu0 0
    %1378 = vmatpush1.bf16.xpose.msra.mxu0 0
    %1379 = vmatprep.subr.bf16.mxu0 0
    %1380 = vmatpush1.bf16.xpose.msra.mxu0 0
    %1381 = vmatprep.subr.bf16.mxu0 0
    %1382 = vmatpush1.bf16.xpose.msra.mxu0 0
    %1383 = vmatprep.subr.bf16.mxu0 0
    %1384 = vmatpush1.bf16.xpose.msra.mxu0 0
    %1385 = vmatprep.mubr.bf16.mxu0 0
    %1386 = vmatmul.mubr.bf16.gmra.mrb[0].mxu0 %v1308
    %v1387 = vpop.f32.mrb[0].mxu0
    %v1388 = vadd.f32 %v1045, %v1387
    %v1389 = vpop.f32.mrb[0].mxu0
    %v1390 = vpop.f32.mrb[0].mxu0
    %v1391 = vpop.f32.mrb[0].mxu0
    %1392 = vdwg.mxu0
    %1394 = vrot.lane.b32.xlu0 %v1296, 64
    %v1395 = vpop.permute.xlu0 %1394
    %v1397 = vsel %vm1306, %v1395, 0
    %1399 = vmatprep.subr.bf16.mxu0 0
    %1400 = vmatpush1.bf16.xpose.msra.mxu0 %v1397
    %1401 = vmatprep.subr.bf16.mxu0 0
    %1402 = vmatpush1.bf16.xpose.msra.mxu0 0
    %1403 = vmatprep.subr.bf16.mxu0 0
    %1404 = vmatpush1.bf16.xpose.msra.mxu0 0
    %1405 = vmatprep.subr.bf16.mxu0 0
    %1406 = vmatpush1.bf16.xpose.msra.mxu0 0
    %1407 = vmatprep.subr.bf16.mxu0 0
    %1408 = vmatpush1.bf16.xpose.msra.mxu0 0
    %1409 = vmatprep.subr.bf16.mxu0 0
    %1410 = vmatpush1.bf16.xpose.msra.mxu0 0
    %1411 = vmatprep.subr.bf16.mxu0 0
    %1412 = vmatpush1.bf16.xpose.msra.mxu0 0
    %1413 = vmatprep.subr.bf16.mxu0 0
    %1414 = vmatpush1.bf16.xpose.msra.mxu0 0
    %1415 = vmatprep.subr.bf16.mxu0 0
    %1416 = vmatpush1.bf16.xpose.msra.mxu0 0
    %1417 = vmatprep.subr.bf16.mxu0 0
    %1418 = vmatpush1.bf16.xpose.msra.mxu0 0
    %1419 = vmatprep.subr.bf16.mxu0 0
    %1420 = vmatpush1.bf16.xpose.msra.mxu0 0
    %1421 = vmatprep.subr.bf16.mxu0 0
    %1422 = vmatpush1.bf16.xpose.msra.mxu0 0
    %1423 = vmatprep.subr.bf16.mxu0 0
    %1424 = vmatpush1.bf16.xpose.msra.mxu0 0
    %1425 = vmatprep.subr.bf16.mxu0 0
    %1426 = vmatpush1.bf16.xpose.msra.mxu0 0
    %1427 = vmatprep.subr.bf16.mxu0 0
    %1428 = vmatpush1.bf16.xpose.msra.mxu0 0
    %1429 = vmatprep.subr.bf16.mxu0 0
    %1430 = vmatpush1.bf16.xpose.msra.mxu0 0
    %1431 = vmatprep.mubr.bf16.mxu0 0
    %1432 = vmatmul.mubr.bf16.gmra.mrb[0].mxu0 %v1308
    %v1433 = vpop.f32.mrb[0].mxu0
    %v1434 = vadd.f32 %v1046, %v1433
    %v1435 = vpop.f32.mrb[0].mxu0
    %v1436 = vpop.f32.mrb[0].mxu0
    %v1437 = vpop.f32.mrb[0].mxu0
    %1438 = vdwg.mxu0
    %vm1439 = vcmask 31744
    %v1440 = vsel %vm1439, %v1345, -inf
    %1441 = vmax.xlane.f32.xlu0 %v1440
    %v1442 = vpop.xlane.xlu0 %1441
    %vm1443 = vcmask 64512
    %v1444 = vsel %vm1443, %v1388, -inf
    %1445 = vmax.xlane.f32.xlu0 %v1444
    %v1446 = vpop.xlane.xlu0 %1445
    %v1447 = vsel %vm1443, %v1434, -inf
    %1448 = vmax.xlane.f32.xlu0 %v1447
    %v1449 = vpop.xlane.xlu0 %1448
    %v1450 = vmax.f32 %v1446, %v1449
    %v1451 = vmax.f32 %v1442, %v1450
    %v1452 = vsub.f32 %v1345, %v1451
    %v1453 = vmul.f32 %v1452, 1.442695
    %v1454 = vpow.pop %v1453
    %v1455 = vsub.f32 %v1388, %v1451
    %v1456 = vmul.f32 %v1455, 1.442695
    %v1457 = vpow.pop %v1456
    %v1458 = vsub.f32 %v1434, %v1451
    %v1459 = vmul.f32 %v1458, 1.442695
    %v1460 = vpow.pop %v1459
    %v1461 = vsel %vm1439, %v1454, 0.0
    %1462 = vadd.xlane.f32.xlu0 %v1461
    %v1463 = vpop.xlane.xlu0 %1462
    %v1464 = vsel %vm1443, %v1457, 0.0
    %1465 = vadd.xlane.f32.xlu0 %v1464
    %v1466 = vpop.xlane.xlu0 %1465
    %v1467 = vadd.f32 %v1463, %v1466
    %v1468 = vsel %vm1443, %v1460, 0.0
    %1469 = vadd.xlane.f32.xlu0 %v1468
    %v1470 = vpop.xlane.xlu0 %1469
    %v1471 = vadd.f32 %v1467, %v1470
    %v1472 = vpack.c.bf16 %v1454, %v1454
    %v1473 = vld [vmem:[%s4] sm:$0x3]
    %v1474 = vpack.c.bf16 %v1457, %v1457
    %v1476 = vsel %vm1443, %v1474, 0
    %vm1478 = vcmask 1043456
    %v1479 = vsel %vm1478, %v1034, 0
    %1481 = vmatprep.subr.bf16.mxu0 0
    %1482 = vmatpush1.bf16.msra.mxu0 %v1479
    %1483 = vmatprep.subr.bf16.mxu0 0
    %1484 = vmatpush1.bf16.msra.mxu0 0
    %1485 = vmatprep.subr.bf16.mxu0 0
    %1486 = vmatpush1.bf16.msra.mxu0 0
    %1487 = vmatprep.subr.bf16.mxu0 0
    %1488 = vmatpush1.bf16.msra.mxu0 0
    %1489 = vmatprep.subr.bf16.mxu0 0
    %1490 = vmatpush1.bf16.msra.mxu0 0
    %1491 = vmatprep.subr.bf16.mxu0 0
    %1492 = vmatpush1.bf16.msra.mxu0 0
    %1493 = vmatprep.subr.bf16.mxu0 0
    %1494 = vmatpush1.bf16.msra.mxu0 0
    %1495 = vmatprep.subr.bf16.mxu0 0
    %1496 = vmatpush1.bf16.msra.mxu0 0
    %1497 = vmatprep.subr.bf16.mxu0 0
    %1498 = vmatpush1.bf16.msra.mxu0 0
    %1499 = vmatprep.subr.bf16.mxu0 0
    %1500 = vmatpush1.bf16.msra.mxu0 0
    %1501 = vmatprep.subr.bf16.mxu0 0
    %1502 = vmatpush1.bf16.msra.mxu0 0
    %1503 = vmatprep.subr.bf16.mxu0 0
    %1504 = vmatpush1.bf16.msra.mxu0 0
    %1505 = vmatprep.subr.bf16.mxu0 0
    %1506 = vmatpush1.bf16.msra.mxu0 0
    %1507 = vmatprep.subr.bf16.mxu0 0
    %1508 = vmatpush1.bf16.msra.mxu0 0
    %1509 = vmatprep.subr.bf16.mxu0 0
    %1510 = vmatpush1.bf16.msra.mxu0 0
    %1511 = vmatprep.subr.bf16.mxu0 0
    %1512 = vmatpush1.bf16.msra.mxu0 0
    %1513 = vmatprep.mubr.bf16.mxu0 0
    %1514 = vmatmul.mubr.bf16.gmra.mrb[0].mxu0 %v1476
    %v1515 = vpop.f32.mrb[0].mxu0
    %v1516 = vadd.f32 0.0, %v1515
    %v1517 = vpop.f32.mrb[0].mxu0
    %v1518 = vpop.f32.mrb[0].mxu0
    %v1519 = vpop.f32.mrb[0].mxu0
    %1520 = vdwg.mxu0
    %v1522 = vsel %vm1439, %v1472, 0
    %vm1524 = vcmask 1041408
    %v1526 = vsel %vm1524, %v1473, 0
    %1528 = vmatprep.subr.bf16.mxu0 0
    %1529 = vmatpush1.bf16.msra.mxu0 %v1526
    %1530 = vmatprep.subr.bf16.mxu0 0
    %1531 = vmatpush1.bf16.msra.mxu0 0
    %1532 = vmatprep.subr.bf16.mxu0 0
    %1533 = vmatpush1.bf16.msra.mxu0 0
    %1534 = vmatprep.subr.bf16.mxu0 0
    %1535 = vmatpush1.bf16.msra.mxu0 0
    %1536 = vmatprep.subr.bf16.mxu0 0
    %1537 = vmatpush1.bf16.msra.mxu0 0
    %1538 = vmatprep.subr.bf16.mxu0 0
    %1539 = vmatpush1.bf16.msra.mxu0 0
    %1540 = vmatprep.subr.bf16.mxu0 0
    %1541 = vmatpush1.bf16.msra.mxu0 0
    %1542 = vmatprep.subr.bf16.mxu0 0
    %1543 = vmatpush1.bf16.msra.mxu0 0
    %1544 = vmatprep.subr.bf16.mxu0 0
    %1545 = vmatpush1.bf16.msra.mxu0 0
    %1546 = vmatprep.subr.bf16.mxu0 0
    %1547 = vmatpush1.bf16.msra.mxu0 0
    %1548 = vmatprep.subr.bf16.mxu0 0
    %1549 = vmatpush1.bf16.msra.mxu0 0
    %1550 = vmatprep.subr.bf16.mxu0 0
    %1551 = vmatpush1.bf16.msra.mxu0 0
    %1552 = vmatprep.subr.bf16.mxu0 0
    %1553 = vmatpush1.bf16.msra.mxu0 0
    %1554 = vmatprep.subr.bf16.mxu0 0
    %1555 = vmatpush1.bf16.msra.mxu0 0
    %1556 = vmatprep.subr.bf16.mxu0 0
    %1557 = vmatpush1.bf16.msra.mxu0 0
    %1558 = vmatprep.subr.bf16.mxu0 0
    %1559 = vmatpush1.bf16.msra.mxu0 0
    %1560 = vmatprep.mubr.bf16.mxu0 0
    %1561 = vmatmul.mubr.bf16.gmra.mrb[0].mxu0 %v1522
    %v1562 = vpop.f32.mrb[0].mxu0
    %v1563 = vadd.f32 %v1516, %v1562
    %v1564 = vpop.f32.mrb[0].mxu0
    %v1565 = vpop.f32.mrb[0].mxu0
    %v1566 = vpop.f32.mrb[0].mxu0
    %1567 = vdwg.mxu0
    %v1568 = vpack.c.bf16 %v1460, %v1460
    %v1570 = vsel %vm1443, %v1568, 0
    %v1573 = vsel %vm1478, %v1297, 0
    %1575 = vmatprep.subr.bf16.mxu0 0
    %1576 = vmatpush1.bf16.msra.mxu0 %v1573
    %1577 = vmatprep.subr.bf16.mxu0 0
    %1578 = vmatpush1.bf16.msra.mxu0 0
    %1579 = vmatprep.subr.bf16.mxu0 0
    %1580 = vmatpush1.bf16.msra.mxu0 0
    %1581 = vmatprep.subr.bf16.mxu0 0
    %1582 = vmatpush1.bf16.msra.mxu0 0
    %1583 = vmatprep.subr.bf16.mxu0 0
    %1584 = vmatpush1.bf16.msra.mxu0 0
    %1585 = vmatprep.subr.bf16.mxu0 0
    %1586 = vmatpush1.bf16.msra.mxu0 0
    %1587 = vmatprep.subr.bf16.mxu0 0
    %1588 = vmatpush1.bf16.msra.mxu0 0
    %1589 = vmatprep.subr.bf16.mxu0 0
    %1590 = vmatpush1.bf16.msra.mxu0 0
    %1591 = vmatprep.subr.bf16.mxu0 0
    %1592 = vmatpush1.bf16.msra.mxu0 0
    %1593 = vmatprep.subr.bf16.mxu0 0
    %1594 = vmatpush1.bf16.msra.mxu0 0
    %1595 = vmatprep.subr.bf16.mxu0 0
    %1596 = vmatpush1.bf16.msra.mxu0 0
    %1597 = vmatprep.subr.bf16.mxu0 0
    %1598 = vmatpush1.bf16.msra.mxu0 0
    %1599 = vmatprep.subr.bf16.mxu0 0
    %1600 = vmatpush1.bf16.msra.mxu0 0
    %1601 = vmatprep.subr.bf16.mxu0 0
    %1602 = vmatpush1.bf16.msra.mxu0 0
    %1603 = vmatprep.subr.bf16.mxu0 0
    %1604 = vmatpush1.bf16.msra.mxu0 0
    %1605 = vmatprep.subr.bf16.mxu0 0
    %1606 = vmatpush1.bf16.msra.mxu0 0
    %1607 = vmatprep.mubr.bf16.mxu0 0
    %1608 = vmatmul.mubr.bf16.gmra.mrb[0].mxu0 %v1570
    %v1609 = vpop.f32.mrb[0].mxu0
    %v1610 = vadd.f32 0.0, %v1609
    %v1611 = vpop.f32.mrb[0].mxu0
    %v1612 = vpop.f32.mrb[0].mxu0
    %v1613 = vpop.f32.mrb[0].mxu0
    %1614 = vdwg.mxu0
    %v1615 = vadd.f32 %v1563, %v1610
    %v1616 = vrcp.pop %v1471
    %v1617 = vmul.f32 %v1615, %v1616
    %s1618 = scalar_lea.vmem %s3, 8
    %v1619 = vld [vmem:[%s1618] sm:$0xf]
    %v1620 = vld [vmem:[%s1618 + $0x4] sm:$0xf]
    %1622 = vrot.lane.b32.xlu0 %v1295, 112
    %v1623 = vpop.permute.xlu0 %1622
    %v1626 = vunpack.c.l.b16 %v1619
    %v1627 = vunpack.c.l.b16 %v1620
    %v1628 = vpack.c.b16 %v1627, %v1626
    %v1631 = vsel %vm1306, %v1623, 0
    %1633 = vmatprep.subr.bf16.mxu0 0
    %1634 = vmatpush1.bf16.msra.mxu0 %v1628
    %1635 = vmatprep.subr.bf16.mxu0 0
    %1636 = vmatpush1.bf16.msra.mxu0 0
    %1637 = vmatprep.subr.bf16.mxu0 0
    %1638 = vmatpush1.bf16.msra.mxu0 0
    %1639 = vmatprep.subr.bf16.mxu0 0
    %1640 = vmatpush1.bf16.msra.mxu0 0
    %1641 = vmatprep.subr.bf16.mxu0 0
    %1642 = vmatpush1.bf16.msra.mxu0 0
    %1643 = vmatprep.subr.bf16.mxu0 0
    %1644 = vmatpush1.bf16.msra.mxu0 0
    %1645 = vmatprep.subr.bf16.mxu0 0
    %1646 = vmatpush1.bf16.msra.mxu0 0
    %1647 = vmatprep.subr.bf16.mxu0 0
    %1648 = vmatpush1.bf16.msra.mxu0 0
    %1649 = vmatprep.subr.bf16.mxu0 0
    %1650 = vmatpush1.bf16.msra.mxu0 0
    %1651 = vmatprep.subr.bf16.mxu0 0
    %1652 = vmatpush1.bf16.msra.mxu0 0
    %1653 = vmatprep.subr.bf16.mxu0 0
    %1654 = vmatpush1.bf16.msra.mxu0 0
    %1655 = vmatprep.subr.bf16.mxu0 0
    %1656 = vmatpush1.bf16.msra.mxu0 0
    %1657 = vmatprep.subr.bf16.mxu0 0
    %1658 = vmatpush1.bf16.msra.mxu0 0
    %1659 = vmatprep.subr.bf16.mxu0 0
    %1660 = vmatpush1.bf16.msra.mxu0 0
    %1661 = vmatprep.subr.bf16.mxu0 0
    %1662 = vmatpush1.bf16.msra.mxu0 0
    %1663 = vmatprep.subr.bf16.mxu0 0
    %1664 = vmatpush1.bf16.msra.mxu0 0
    %1665 = vmatprep.mubr.bf16.mxu0 0
    %1666 = vmatmul.mubr.bf16.gmra.mrb[0].mxu0 %v1631
    %v1667 = vpop.f32.mrb[0].mxu0
    %v1668 = vadd.f32 0.0, %v1667
    %v1669 = vpop.f32.mrb[0].mxu0
    %v1670 = vpop.f32.mrb[0].mxu0
    %v1671 = vpop.f32.mrb[0].mxu0
    %1672 = vdwg.mxu0
    %1674 = vrot.lane.b32.xlu0 %v1034, 112
    %v1675 = vpop.permute.xlu0 %1674
    %v1677 = vsel %vm1306, %v1675, 0
    %1679 = vmatprep.subr.bf16.mxu0 0
    %1680 = vmatpush1.bf16.xpose.msra.mxu0 %v1677
    %1681 = vmatprep.subr.bf16.mxu0 0
    %1682 = vmatpush1.bf16.xpose.msra.mxu0 0
    %1683 = vmatprep.subr.bf16.mxu0 0
    %1684 = vmatpush1.bf16.xpose.msra.mxu0 0
    %1685 = vmatprep.subr.bf16.mxu0 0
    %1686 = vmatpush1.bf16.xpose.msra.mxu0 0
    %1687 = vmatprep.subr.bf16.mxu0 0
    %1688 = vmatpush1.bf16.xpose.msra.mxu0 0
    %1689 = vmatprep.subr.bf16.mxu0 0
    %1690 = vmatpush1.bf16.xpose.msra.mxu0 0
    %1691 = vmatprep.subr.bf16.mxu0 0
    %1692 = vmatpush1.bf16.xpose.msra.mxu0 0
    %1693 = vmatprep.subr.bf16.mxu0 0
    %1694 = vmatpush1.bf16.xpose.msra.mxu0 0
    %1695 = vmatprep.subr.bf16.mxu0 0
    %1696 = vmatpush1.bf16.xpose.msra.mxu0 0
    %1697 = vmatprep.subr.bf16.mxu0 0
    %1698 = vmatpush1.bf16.xpose.msra.mxu0 0
    %1699 = vmatprep.subr.bf16.mxu0 0
    %1700 = vmatpush1.bf16.xpose.msra.mxu0 0
    %1701 = vmatprep.subr.bf16.mxu0 0
    %1702 = vmatpush1.bf16.xpose.msra.mxu0 0
    %1703 = vmatprep.subr.bf16.mxu0 0
    %1704 = vmatpush1.bf16.xpose.msra.mxu0 0
    %1705 = vmatprep.subr.bf16.mxu0 0
    %1706 = vmatpush1.bf16.xpose.msra.mxu0 0
    %1707 = vmatprep.subr.bf16.mxu0 0
    %1708 = vmatpush1.bf16.xpose.msra.mxu0 0
    %1709 = vmatprep.subr.bf16.mxu0 0
    %1710 = vmatpush1.bf16.xpose.msra.mxu0 0
    %1711 = vmatprep.mubr.bf16.mxu0 0
    %1712 = vmatmul.mubr.bf16.gmra.mrb[0].mxu0 %v1631
    %v1713 = vpop.f32.mrb[0].mxu0
    %v1714 = vadd.f32 %v1045, %v1713
    %v1715 = vpop.f32.mrb[0].mxu0
    %v1716 = vpop.f32.mrb[0].mxu0
    %v1717 = vpop.f32.mrb[0].mxu0
    %1718 = vdwg.mxu0
    %1719 = vrot.lane.b32.xlu0 %v1296, 48
    %v1720 = vpop.permute.xlu0 %1719
    %v1722 = vsel %vm1306, %v1720, 0
    %1724 = vmatprep.subr.bf16.mxu0 0
    %1725 = vmatpush1.bf16.xpose.msra.mxu0 %v1722
    %1726 = vmatprep.subr.bf16.mxu0 0
    %1727 = vmatpush1.bf16.xpose.msra.mxu0 0
    %1728 = vmatprep.subr.bf16.mxu0 0
    %1729 = vmatpush1.bf16.xpose.msra.mxu0 0
    %1730 = vmatprep.subr.bf16.mxu0 0
    %1731 = vmatpush1.bf16.xpose.msra.mxu0 0
    %1732 = vmatprep.subr.bf16.mxu0 0
    %1733 = vmatpush1.bf16.xpose.msra.mxu0 0
    %1734 = vmatprep.subr.bf16.mxu0 0
    %1735 = vmatpush1.bf16.xpose.msra.mxu0 0
    %1736 = vmatprep.subr.bf16.mxu0 0
    %1737 = vmatpush1.bf16.xpose.msra.mxu0 0
    %1738 = vmatprep.subr.bf16.mxu0 0
    %1739 = vmatpush1.bf16.xpose.msra.mxu0 0
    %1740 = vmatprep.subr.bf16.mxu0 0
    %1741 = vmatpush1.bf16.xpose.msra.mxu0 0
    %1742 = vmatprep.subr.bf16.mxu0 0
    %1743 = vmatpush1.bf16.xpose.msra.mxu0 0
    %1744 = vmatprep.subr.bf16.mxu0 0
    %1745 = vmatpush1.bf16.xpose.msra.mxu0 0
    %1746 = vmatprep.subr.bf16.mxu0 0
    %1747 = vmatpush1.bf16.xpose.msra.mxu0 0
    %1748 = vmatprep.subr.bf16.mxu0 0
    %1749 = vmatpush1.bf16.xpose.msra.mxu0 0
    %1750 = vmatprep.subr.bf16.mxu0 0
    %1751 = vmatpush1.bf16.xpose.msra.mxu0 0
    %1752 = vmatprep.subr.bf16.mxu0 0
    %1753 = vmatpush1.bf16.xpose.msra.mxu0 0
    %1754 = vmatprep.subr.bf16.mxu0 0
    %1755 = vmatpush1.bf16.xpose.msra.mxu0 0
    %1756 = vmatprep.mubr.bf16.mxu0 0
    %1757 = vmatmul.mubr.bf16.gmra.mrb[0].mxu0 %v1631
    %v1758 = vpop.f32.mrb[0].mxu0
    %v1759 = vadd.f32 %v1046, %v1758
    %v1760 = vpop.f32.mrb[0].mxu0
    %v1761 = vpop.f32.mrb[0].mxu0
    %v1762 = vpop.f32.mrb[0].mxu0
    %1763 = vdwg.mxu0
    %v1764 = vsel %vm1439, %v1668, -inf
    %1765 = vmax.xlane.f32.xlu0 %v1764
    %v1766 = vpop.xlane.xlu0 %1765
    %v1767 = vsel %vm1443, %v1714, -inf
    %1768 = vmax.xlane.f32.xlu0 %v1767
    %v1769 = vpop.xlane.xlu0 %1768
    %v1770 = vsel %vm1443, %v1759, -inf
    %1771 = vmax.xlane.f32.xlu0 %v1770
    %v1772 = vpop.xlane.xlu0 %1771
    %v1773 = vmax.f32 %v1769, %v1772
    %v1774 = vmax.f32 %v1766, %v1773
    %v1775 = vsub.f32 %v1668, %v1774
    %v1776 = vmul.f32 %v1775, 1.442695
    %v1777 = vpow.pop %v1776
    %v1778 = vsub.f32 %v1714, %v1774
    %v1779 = vmul.f32 %v1778, 1.442695
    %v1780 = vpow.pop %v1779
    %v1781 = vsub.f32 %v1759, %v1774
    %v1782 = vmul.f32 %v1781, 1.442695
    %v1783 = vpow.pop %v1782
    %v1784 = vsel %vm1439, %v1777, 0.0
    %1785 = vadd.xlane.f32.xlu0 %v1784
    %v1786 = vpop.xlane.xlu0 %1785
    %v1787 = vsel %vm1443, %v1780, 0.0
    %1788 = vadd.xlane.f32.xlu0 %v1787
    %v1789 = vpop.xlane.xlu0 %1788
    %v1790 = vadd.f32 %v1786, %v1789
    %v1791 = vsel %vm1443, %v1783, 0.0
    %1792 = vadd.xlane.f32.xlu0 %v1791
    %v1793 = vpop.xlane.xlu0 %1792
    %v1794 = vadd.f32 %v1790, %v1793
    %v1795 = vpack.c.bf16 %v1777, %v1777
    %s1796 = scalar_lea.vmem %s4, 2
    %v1797 = vld [vmem:[%s1796] sm:$0x3]
    %v1798 = vpack.c.bf16 %v1780, %v1780
    %v1800 = vsel %vm1443, %v1798, 0
    %v1802 = vsel %vm1478, %v1675, 0
    %1804 = vmatprep.subr.bf16.mxu0 0
    %1805 = vmatpush1.bf16.msra.mxu0 %v1802
    %1806 = vmatprep.subr.bf16.mxu0 0
    %1807 = vmatpush1.bf16.msra.mxu0 0
    %1808 = vmatprep.subr.bf16.mxu0 0
    %1809 = vmatpush1.bf16.msra.mxu0 0
    %1810 = vmatprep.subr.bf16.mxu0 0
    %1811 = vmatpush1.bf16.msra.mxu0 0
    %1812 = vmatprep.subr.bf16.mxu0 0
    %1813 = vmatpush1.bf16.msra.mxu0 0
    %1814 = vmatprep.subr.bf16.mxu0 0
    %1815 = vmatpush1.bf16.msra.mxu0 0
    %1816 = vmatprep.subr.bf16.mxu0 0
    %1817 = vmatpush1.bf16.msra.mxu0 0
    %1818 = vmatprep.subr.bf16.mxu0 0
    %1819 = vmatpush1.bf16.msra.mxu0 0
    %1820 = vmatprep.subr.bf16.mxu0 0
    %1821 = vmatpush1.bf16.msra.mxu0 0
    %1822 = vmatprep.subr.bf16.mxu0 0
    %1823 = vmatpush1.bf16.msra.mxu0 0
    %1824 = vmatprep.subr.bf16.mxu0 0
    %1825 = vmatpush1.bf16.msra.mxu0 0
    %1826 = vmatprep.subr.bf16.mxu0 0
    %1827 = vmatpush1.bf16.msra.mxu0 0
    %1828 = vmatprep.subr.bf16.mxu0 0
    %1829 = vmatpush1.bf16.msra.mxu0 0
    %1830 = vmatprep.subr.bf16.mxu0 0
    %1831 = vmatpush1.bf16.msra.mxu0 0
    %1832 = vmatprep.subr.bf16.mxu0 0
    %1833 = vmatpush1.bf16.msra.mxu0 0
    %1834 = vmatprep.subr.bf16.mxu0 0
    %1835 = vmatpush1.bf16.msra.mxu0 0
    %1836 = vmatprep.mubr.bf16.mxu0 0
    %1837 = vmatmul.mubr.bf16.gmra.mrb[0].mxu0 %v1800
    %v1838 = vpop.f32.mrb[0].mxu0
    %v1839 = vadd.f32 0.0, %v1838
    %v1840 = vpop.f32.mrb[0].mxu0
    %v1841 = vpop.f32.mrb[0].mxu0
    %v1842 = vpop.f32.mrb[0].mxu0
    %1843 = vdwg.mxu0
    %v1845 = vsel %vm1439, %v1795, 0
    %v1848 = vsel %vm1524, %v1797, 0
    %1850 = vmatprep.subr.bf16.mxu0 0
    %1851 = vmatpush1.bf16.msra.mxu0 %v1848
    %1852 = vmatprep.subr.bf16.mxu0 0
    %1853 = vmatpush1.bf16.msra.mxu0 0
    %1854 = vmatprep.subr.bf16.mxu0 0
    %1855 = vmatpush1.bf16.msra.mxu0 0
    %1856 = vmatprep.subr.bf16.mxu0 0
    %1857 = vmatpush1.bf16.msra.mxu0 0
    %1858 = vmatprep.subr.bf16.mxu0 0
    %1859 = vmatpush1.bf16.msra.mxu0 0
    %1860 = vmatprep.subr.bf16.mxu0 0
    %1861 = vmatpush1.bf16.msra.mxu0 0
    %1862 = vmatprep.subr.bf16.mxu0 0
    %1863 = vmatpush1.bf16.msra.mxu0 0
    %1864 = vmatprep.subr.bf16.mxu0 0
    %1865 = vmatpush1.bf16.msra.mxu0 0
    %1866 = vmatprep.subr.bf16.mxu0 0
    %1867 = vmatpush1.bf16.msra.mxu0 0
    %1868 = vmatprep.subr.bf16.mxu0 0
    %1869 = vmatpush1.bf16.msra.mxu0 0
    %1870 = vmatprep.subr.bf16.mxu0 0
    %1871 = vmatpush1.bf16.msra.mxu0 0
    %1872 = vmatprep.subr.bf16.mxu0 0
    %1873 = vmatpush1.bf16.msra.mxu0 0
    %1874 = vmatprep.subr.bf16.mxu0 0
    %1875 = vmatpush1.bf16.msra.mxu0 0
    %1876 = vmatprep.subr.bf16.mxu0 0
    %1877 = vmatpush1.bf16.msra.mxu0 0
    %1878 = vmatprep.subr.bf16.mxu0 0
    %1879 = vmatpush1.bf16.msra.mxu0 0
    %1880 = vmatprep.subr.bf16.mxu0 0
    %1881 = vmatpush1.bf16.msra.mxu0 0
    %1882 = vmatprep.mubr.bf16.mxu0 0
    %1883 = vmatmul.mubr.bf16.gmra.mrb[0].mxu0 %v1845
    %v1884 = vpop.f32.mrb[0].mxu0
    %v1885 = vadd.f32 %v1839, %v1884
    %v1886 = vpop.f32.mrb[0].mxu0
    %v1887 = vpop.f32.mrb[0].mxu0
    %v1888 = vpop.f32.mrb[0].mxu0
    %1889 = vdwg.mxu0
    %v1890 = vpack.c.bf16 %v1783, %v1783
    %1892 = vrot.lane.b32.xlu0 %v1297, 112
    %v1893 = vpop.permute.xlu0 %1892
    %v1895 = vsel %vm1443, %v1890, 0
    %v1898 = vsel %vm1478, %v1893, 0
    %1900 = vmatprep.subr.bf16.mxu0 0
    %1901 = vmatpush1.bf16.msra.mxu0 %v1898
    %1902 = vmatprep.subr.bf16.mxu0 0
    %1903 = vmatpush1.bf16.msra.mxu0 0
    %1904 = vmatprep.subr.bf16.mxu0 0
    %1905 = vmatpush1.bf16.msra.mxu0 0
    %1906 = vmatprep.subr.bf16.mxu0 0
    %1907 = vmatpush1.bf16.msra.mxu0 0
    %1908 = vmatprep.subr.bf16.mxu0 0
    %1909 = vmatpush1.bf16.msra.mxu0 0
    %1910 = vmatprep.subr.bf16.mxu0 0
    %1911 = vmatpush1.bf16.msra.mxu0 0
    %1912 = vmatprep.subr.bf16.mxu0 0
    %1913 = vmatpush1.bf16.msra.mxu0 0
    %1914 = vmatprep.subr.bf16.mxu0 0
    %1915 = vmatpush1.bf16.msra.mxu0 0
    %1916 = vmatprep.subr.bf16.mxu0 0
    %1917 = vmatpush1.bf16.msra.mxu0 0
    %1918 = vmatprep.subr.bf16.mxu0 0
    %1919 = vmatpush1.bf16.msra.mxu0 0
    %1920 = vmatprep.subr.bf16.mxu0 0
    %1921 = vmatpush1.bf16.msra.mxu0 0
    %1922 = vmatprep.subr.bf16.mxu0 0
    %1923 = vmatpush1.bf16.msra.mxu0 0
    %1924 = vmatprep.subr.bf16.mxu0 0
    %1925 = vmatpush1.bf16.msra.mxu0 0
    %1926 = vmatprep.subr.bf16.mxu0 0
    %1927 = vmatpush1.bf16.msra.mxu0 0
    %1928 = vmatprep.subr.bf16.mxu0 0
    %1929 = vmatpush1.bf16.msra.mxu0 0
    %1930 = vmatprep.subr.bf16.mxu0 0
    %1931 = vmatpush1.bf16.msra.mxu0 0
    %1932 = vmatprep.mubr.bf16.mxu0 0
    %1933 = vmatmul.mubr.bf16.gmra.mrb[0].mxu0 %v1895
    %v1934 = vpop.f32.mrb[0].mxu0
    %v1935 = vadd.f32 0.0, %v1934
    %v1936 = vpop.f32.mrb[0].mxu0
    %v1937 = vpop.f32.mrb[0].mxu0
    %v1938 = vpop.f32.mrb[0].mxu0
    %1939 = vdwg.mxu0
    %v1940 = vadd.f32 %v1885, %v1935
    %v1941 = vrcp.pop %v1794
    %v1942 = vmul.f32 %v1940, %v1941
    %s1943 = scalar_lea.vmem %s3, 16
    %v1944 = vld [vmem:[%s1943] sm:$0xf]
    %v1945 = vld [vmem:[%s1943 + $0x4] sm:$0xf]
    %1946 = vrot.lane.b32.xlu0 %v1295, 96
    %v1947 = vpop.permute.xlu0 %1946
    %v1950 = vunpack.c.l.b16 %v1944
    %v1951 = vunpack.c.l.b16 %v1945
    %v1952 = vpack.c.b16 %v1951, %v1950
    %v1955 = vsel %vm1306, %v1947, 0
    %1957 = vmatprep.subr.bf16.mxu0 0
    %1958 = vmatpush1.bf16.msra.mxu0 %v1952
    %1959 = vmatprep.subr.bf16.mxu0 0
    %1960 = vmatpush1.bf16.msra.mxu0 0
    %1961 = vmatprep.subr.bf16.mxu0 0
    %1962 = vmatpush1.bf16.msra.mxu0 0
    %1963 = vmatprep.subr.bf16.mxu0 0
    %1964 = vmatpush1.bf16.msra.mxu0 0
    %1965 = vmatprep.subr.bf16.mxu0 0
    %1966 = vmatpush1.bf16.msra.mxu0 0
    %1967 = vmatprep.subr.bf16.mxu0 0
    %1968 = vmatpush1.bf16.msra.mxu0 0
    %1969 = vmatprep.subr.bf16.mxu0 0
    %1970 = vmatpush1.bf16.msra.mxu0 0
    %1971 = vmatprep.subr.bf16.mxu0 0
    %1972 = vmatpush1.bf16.msra.mxu0 0
    %1973 = vmatprep.subr.bf16.mxu0 0
    %1974 = vmatpush1.bf16.msra.mxu0 0
    %1975 = vmatprep.subr.bf16.mxu0 0
    %1976 = vmatpush1.bf16.msra.mxu0 0
    %1977 = vmatprep.subr.bf16.mxu0 0
    %1978 = vmatpush1.bf16.msra.mxu0 0
    %1979 = vmatprep.subr.bf16.mxu0 0
    %1980 = vmatpush1.bf16.msra.mxu0 0
    %1981 = vmatprep.subr.bf16.mxu0 0
    %1982 = vmatpush1.bf16.msra.mxu0 0
    %1983 = vmatprep.subr.bf16.mxu0 0
    %1984 = vmatpush1.bf16.msra.mxu0 0
    %1985 = vmatprep.subr.bf16.mxu0 0
    %1986 = vmatpush1.bf16.msra.mxu0 0
    %1987 = vmatprep.subr.bf16.mxu0 0
    %1988 = vmatpush1.bf16.msra.mxu0 0
    %1989 = vmatprep.mubr.bf16.mxu0 0
    %1990 = vmatmul.mubr.bf16.gmra.mrb[0].mxu0 %v1955
    %v1991 = vpop.f32.mrb[0].mxu0
    %v1992 = vadd.f32 0.0, %v1991
    %v1993 = vpop.f32.mrb[0].mxu0
    %v1994 = vpop.f32.mrb[0].mxu0
    %v1995 = vpop.f32.mrb[0].mxu0
    %1996 = vdwg.mxu0
    %1997 = vrot.lane.b32.xlu0 %v1034, 96
    %v1998 = vpop.permute.xlu0 %1997
    %v2000 = vsel %vm1306, %v1998, 0
    %2002 = vmatprep.subr.bf16.mxu0 0
    %2003 = vmatpush1.bf16.xpose.msra.mxu0 %v2000
    %2004 = vmatprep.subr.bf16.mxu0 0
    %2005 = vmatpush1.bf16.xpose.msra.mxu0 0
    %2006 = vmatprep.subr.bf16.mxu0 0
    %2007 = vmatpush1.bf16.xpose.msra.mxu0 0
    %2008 = vmatprep.subr.bf16.mxu0 0
    %2009 = vmatpush1.bf16.xpose.msra.mxu0 0
    %2010 = vmatprep.subr.bf16.mxu0 0
    %2011 = vmatpush1.bf16.xpose.msra.mxu0 0
    %2012 = vmatprep.subr.bf16.mxu0 0
    %2013 = vmatpush1.bf16.xpose.msra.mxu0 0
    %2014 = vmatprep.subr.bf16.mxu0 0
    %2015 = vmatpush1.bf16.xpose.msra.mxu0 0
    %2016 = vmatprep.subr.bf16.mxu0 0
    %2017 = vmatpush1.bf16.xpose.msra.mxu0 0
    %2018 = vmatprep.subr.bf16.mxu0 0
    %2019 = vmatpush1.bf16.xpose.msra.mxu0 0
    %2020 = vmatprep.subr.bf16.mxu0 0
    %2021 = vmatpush1.bf16.xpose.msra.mxu0 0
    %2022 = vmatprep.subr.bf16.mxu0 0
    %2023 = vmatpush1.bf16.xpose.msra.mxu0 0
    %2024 = vmatprep.subr.bf16.mxu0 0
    %2025 = vmatpush1.bf16.xpose.msra.mxu0 0
    %2026 = vmatprep.subr.bf16.mxu0 0
    %2027 = vmatpush1.bf16.xpose.msra.mxu0 0
    %2028 = vmatprep.subr.bf16.mxu0 0
    %2029 = vmatpush1.bf16.xpose.msra.mxu0 0
    %2030 = vmatprep.subr.bf16.mxu0 0
    %2031 = vmatpush1.bf16.xpose.msra.mxu0 0
    %2032 = vmatprep.subr.bf16.mxu0 0
    %2033 = vmatpush1.bf16.xpose.msra.mxu0 0
    %2034 = vmatprep.mubr.bf16.mxu0 0
    %2035 = vmatmul.mubr.bf16.gmra.mrb[0].mxu0 %v1955
    %v2036 = vpop.f32.mrb[0].mxu0
    %v2037 = vadd.f32 %v1045, %v2036
    %v2038 = vpop.f32.mrb[0].mxu0
    %v2039 = vpop.f32.mrb[0].mxu0
    %v2040 = vpop.f32.mrb[0].mxu0
    %2041 = vdwg.mxu0
    %2042 = vrot.lane.b32.xlu0 %v1296, 32
    %v2043 = vpop.permute.xlu0 %2042
    %v2045 = vsel %vm1306, %v2043, 0
    %2047 = vmatprep.subr.bf16.mxu0 0
    %2048 = vmatpush1.bf16.xpose.msra.mxu0 %v2045
    %2049 = vmatprep.subr.bf16.mxu0 0
    %2050 = vmatpush1.bf16.xpose.msra.mxu0 0
    %2051 = vmatprep.subr.bf16.mxu0 0
    %2052 = vmatpush1.bf16.xpose.msra.mxu0 0
    %2053 = vmatprep.subr.bf16.mxu0 0
    %2054 = vmatpush1.bf16.xpose.msra.mxu0 0
    %2055 = vmatprep.subr.bf16.mxu0 0
    %2056 = vmatpush1.bf16.xpose.msra.mxu0 0
    %2057 = vmatprep.subr.bf16.mxu0 0
    %2058 = vmatpush1.bf16.xpose.msra.mxu0 0
    %2059 = vmatprep.subr.bf16.mxu0 0
    %2060 = vmatpush1.bf16.xpose.msra.mxu0 0
    %2061 = vmatprep.subr.bf16.mxu0 0
    %2062 = vmatpush1.bf16.xpose.msra.mxu0 0
    %2063 = vmatprep.subr.bf16.mxu0 0
    %2064 = vmatpush1.bf16.xpose.msra.mxu0 0
    %2065 = vmatprep.subr.bf16.mxu0 0
    %2066 = vmatpush1.bf16.xpose.msra.mxu0 0
    %2067 = vmatprep.subr.bf16.mxu0 0
    %2068 = vmatpush1.bf16.xpose.msra.mxu0 0
    %2069 = vmatprep.subr.bf16.mxu0 0
    %2070 = vmatpush1.bf16.xpose.msra.mxu0 0
    %2071 = vmatprep.subr.bf16.mxu0 0
    %2072 = vmatpush1.bf16.xpose.msra.mxu0 0
    %2073 = vmatprep.subr.bf16.mxu0 0
    %2074 = vmatpush1.bf16.xpose.msra.mxu0 0
    %2075 = vmatprep.subr.bf16.mxu0 0
    %2076 = vmatpush1.bf16.xpose.msra.mxu0 0
    %2077 = vmatprep.subr.bf16.mxu0 0
    %2078 = vmatpush1.bf16.xpose.msra.mxu0 0
    %2079 = vmatprep.mubr.bf16.mxu0 0
    %2080 = vmatmul.mubr.bf16.gmra.mrb[0].mxu0 %v1955
    %v2081 = vpop.f32.mrb[0].mxu0
    %v2082 = vadd.f32 %v1046, %v2081
    %v2083 = vpop.f32.mrb[0].mxu0
    %v2084 = vpop.f32.mrb[0].mxu0
    %v2085 = vpop.f32.mrb[0].mxu0
    %2086 = vdwg.mxu0
    %v2087 = vsel %vm1439, %v1992, -inf
    %2088 = vmax.xlane.f32.xlu0 %v2087
    %v2089 = vpop.xlane.xlu0 %2088
    %v2090 = vsel %vm1443, %v2037, -inf
    %2091 = vmax.xlane.f32.xlu0 %v2090
    %v2092 = vpop.xlane.xlu0 %2091
    %v2093 = vsel %vm1443, %v2082, -inf
    %2094 = vmax.xlane.f32.xlu0 %v2093
    %v2095 = vpop.xlane.xlu0 %2094
    %v2096 = vmax.f32 %v2092, %v2095
    %v2097 = vmax.f32 %v2089, %v2096
    %v2098 = vsub.f32 %v1992, %v2097
    %v2099 = vmul.f32 %v2098, 1.442695
    %v2100 = vpow.pop %v2099
    %v2101 = vsub.f32 %v2037, %v2097
    %v2102 = vmul.f32 %v2101, 1.442695
    %v2103 = vpow.pop %v2102
    %v2104 = vsub.f32 %v2082, %v2097
    %v2105 = vmul.f32 %v2104, 1.442695
    %v2106 = vpow.pop %v2105
    %v2107 = vsel %vm1439, %v2100, 0.0
    %2108 = vadd.xlane.f32.xlu0 %v2107
    %v2109 = vpop.xlane.xlu0 %2108
    %v2110 = vsel %vm1443, %v2103, 0.0
    %2111 = vadd.xlane.f32.xlu0 %v2110
    %v2112 = vpop.xlane.xlu0 %2111
    %v2113 = vadd.f32 %v2109, %v2112
    %v2114 = vsel %vm1443, %v2106, 0.0
    %2115 = vadd.xlane.f32.xlu0 %v2114
    %v2116 = vpop.xlane.xlu0 %2115
    %v2117 = vadd.f32 %v2113, %v2116
    %v2118 = vpack.c.bf16 %v2100, %v2100
    %s2119 = scalar_lea.vmem %s4, 4
    %v2120 = vld [vmem:[%s2119] sm:$0x3]
    %v2121 = vpack.c.bf16 %v2103, %v2103
    %v2123 = vsel %vm1443, %v2121, 0
    %v2125 = vsel %vm1478, %v1998, 0
    %2127 = vmatprep.subr.bf16.mxu0 0
    %2128 = vmatpush1.bf16.msra.mxu0 %v2125
    %2129 = vmatprep.subr.bf16.mxu0 0
    %2130 = vmatpush1.bf16.msra.mxu0 0
    %2131 = vmatprep.subr.bf16.mxu0 0
    %2132 = vmatpush1.bf16.msra.mxu0 0
    %2133 = vmatprep.subr.bf16.mxu0 0
    %2134 = vmatpush1.bf16.msra.mxu0 0
    %2135 = vmatprep.subr.bf16.mxu0 0
    %2136 = vmatpush1.bf16.msra.mxu0 0
    %2137 = vmatprep.subr.bf16.mxu0 0
    %2138 = vmatpush1.bf16.msra.mxu0 0
    %2139 = vmatprep.subr.bf16.mxu0 0
    %2140 = vmatpush1.bf16.msra.mxu0 0
    %2141 = vmatprep.subr.bf16.mxu0 0
    %2142 = vmatpush1.bf16.msra.mxu0 0
    %2143 = vmatprep.subr.bf16.mxu0 0
    %2144 = vmatpush1.bf16.msra.mxu0 0
    %2145 = vmatprep.subr.bf16.mxu0 0
    %2146 = vmatpush1.bf16.msra.mxu0 0
    %2147 = vmatprep.subr.bf16.mxu0 0
    %2148 = vmatpush1.bf16.msra.mxu0 0
    %2149 = vmatprep.subr.bf16.mxu0 0
    %2150 = vmatpush1.bf16.msra.mxu0 0
    %2151 = vmatprep.subr.bf16.mxu0 0
    %2152 = vmatpush1.bf16.msra.mxu0 0
    %2153 = vmatprep.subr.bf16.mxu0 0
    %2154 = vmatpush1.bf16.msra.mxu0 0
    %2155 = vmatprep.subr.bf16.mxu0 0
    %2156 = vmatpush1.bf16.msra.mxu0 0
    %2157 = vmatprep.subr.bf16.mxu0 0
    %2158 = vmatpush1.bf16.msra.mxu0 0
    %2159 = vmatprep.mubr.bf16.mxu0 0
    %2160 = vmatmul.mubr.bf16.gmra.mrb[0].mxu0 %v2123
    %v2161 = vpop.f32.mrb[0].mxu0
    %v2162 = vadd.f32 0.0, %v2161
    %v2163 = vpop.f32.mrb[0].mxu0
    %v2164 = vpop.f32.mrb[0].mxu0
    %v2165 = vpop.f32.mrb[0].mxu0
    %2166 = vdwg.mxu0
    %v2168 = vsel %vm1439, %v2118, 0
    %v2171 = vsel %vm1524, %v2120, 0
    %2173 = vmatprep.subr.bf16.mxu0 0
    %2174 = vmatpush1.bf16.msra.mxu0 %v2171
    %2175 = vmatprep.subr.bf16.mxu0 0
    %2176 = vmatpush1.bf16.msra.mxu0 0
    %2177 = vmatprep.subr.bf16.mxu0 0
    %2178 = vmatpush1.bf16.msra.mxu0 0
    %2179 = vmatprep.subr.bf16.mxu0 0
    %2180 = vmatpush1.bf16.msra.mxu0 0
    %2181 = vmatprep.subr.bf16.mxu0 0
    %2182 = vmatpush1.bf16.msra.mxu0 0
    %2183 = vmatprep.subr.bf16.mxu0 0
    %2184 = vmatpush1.bf16.msra.mxu0 0
    %2185 = vmatprep.subr.bf16.mxu0 0
    %2186 = vmatpush1.bf16.msra.mxu0 0
    %2187 = vmatprep.subr.bf16.mxu0 0
    %2188 = vmatpush1.bf16.msra.mxu0 0
    %2189 = vmatprep.subr.bf16.mxu0 0
    %2190 = vmatpush1.bf16.msra.mxu0 0
    %2191 = vmatprep.subr.bf16.mxu0 0
    %2192 = vmatpush1.bf16.msra.mxu0 0
    %2193 = vmatprep.subr.bf16.mxu0 0
    %2194 = vmatpush1.bf16.msra.mxu0 0
    %2195 = vmatprep.subr.bf16.mxu0 0
    %2196 = vmatpush1.bf16.msra.mxu0 0
    %2197 = vmatprep.subr.bf16.mxu0 0
    %2198 = vmatpush1.bf16.msra.mxu0 0
    %2199 = vmatprep.subr.bf16.mxu0 0
    %2200 = vmatpush1.bf16.msra.mxu0 0
    %2201 = vmatprep.subr.bf16.mxu0 0
    %2202 = vmatpush1.bf16.msra.mxu0 0
    %2203 = vmatprep.subr.bf16.mxu0 0
    %2204 = vmatpush1.bf16.msra.mxu0 0
    %2205 = vmatprep.mubr.bf16.mxu0 0
    %2206 = vmatmul.mubr.bf16.gmra.mrb[0].mxu0 %v2168
    %v2207 = vpop.f32.mrb[0].mxu0
    %v2208 = vadd.f32 %v2162, %v2207
    %v2209 = vpop.f32.mrb[0].mxu0
    %v2210 = vpop.f32.mrb[0].mxu0
    %v2211 = vpop.f32.mrb[0].mxu0
    %2212 = vdwg.mxu0
    %v2213 = vpack.c.bf16 %v2106, %v2106
    %2214 = vrot.lane.b32.xlu0 %v1297, 96
    %v2215 = vpop.permute.xlu0 %2214
    %v2217 = vsel %vm1443, %v2213, 0
    %v2220 = vsel %vm1478, %v2215, 0
    %2222 = vmatprep.subr.bf16.mxu0 0
    %2223 = vmatpush1.bf16.msra.mxu0 %v2220
    %2224 = vmatprep.subr.bf16.mxu0 0
    %2225 = vmatpush1.bf16.msra.mxu0 0
    %2226 = vmatprep.subr.bf16.mxu0 0
    %2227 = vmatpush1.bf16.msra.mxu0 0
    %2228 = vmatprep.subr.bf16.mxu0 0
    %2229 = vmatpush1.bf16.msra.mxu0 0
    %2230 = vmatprep.subr.bf16.mxu0 0
    %2231 = vmatpush1.bf16.msra.mxu0 0
    %2232 = vmatprep.subr.bf16.mxu0 0
    %2233 = vmatpush1.bf16.msra.mxu0 0
    %2234 = vmatprep.subr.bf16.mxu0 0
    %2235 = vmatpush1.bf16.msra.mxu0 0
    %2236 = vmatprep.subr.bf16.mxu0 0
    %2237 = vmatpush1.bf16.msra.mxu0 0
    %2238 = vmatprep.subr.bf16.mxu0 0
    %2239 = vmatpush1.bf16.msra.mxu0 0
    %2240 = vmatprep.subr.bf16.mxu0 0
    %2241 = vmatpush1.bf16.msra.mxu0 0
    %2242 = vmatprep.subr.bf16.mxu0 0
    %2243 = vmatpush1.bf16.msra.mxu0 0
    %2244 = vmatprep.subr.bf16.mxu0 0
    %2245 = vmatpush1.bf16.msra.mxu0 0
    %2246 = vmatprep.subr.bf16.mxu0 0
    %2247 = vmatpush1.bf16.msra.mxu0 0
    %2248 = vmatprep.subr.bf16.mxu0 0
    %2249 = vmatpush1.bf16.msra.mxu0 0
    %2250 = vmatprep.subr.bf16.mxu0 0
    %2251 = vmatpush1.bf16.msra.mxu0 0
    %2252 = vmatprep.subr.bf16.mxu0 0
    %2253 = vmatpush1.bf16.msra.mxu0 0
    %2254 = vmatprep.mubr.bf16.mxu0 0
    %2255 = vmatmul.mubr.bf16.gmra.mrb[0].mxu0 %v2217
    %v2256 = vpop.f32.mrb[0].mxu0
    %v2257 = vadd.f32 0.0, %v2256
    %v2258 = vpop.f32.mrb[0].mxu0
    %v2259 = vpop.f32.mrb[0].mxu0
    %v2260 = vpop.f32.mrb[0].mxu0
    %2261 = vdwg.mxu0
    %v2262 = vadd.f32 %v2208, %v2257
    %v2263 = vrcp.pop %v2117
    %v2264 = vmul.f32 %v2262, %v2263
    %s2265 = scalar_lea.vmem %s3, 24
    %v2266 = vld [vmem:[%s2265] sm:$0xf]
    %v2267 = vld [vmem:[%s2265 + $0x4] sm:$0xf]
    %2268 = vrot.lane.b32.xlu0 %v1295, 80
    %v2269 = vpop.permute.xlu0 %2268
    %v2272 = vunpack.c.l.b16 %v2266
    %v2273 = vunpack.c.l.b16 %v2267
    %v2274 = vpack.c.b16 %v2273, %v2272
    %v2277 = vsel %vm1306, %v2269, 0
    %2279 = vmatprep.subr.bf16.mxu0 0
    %2280 = vmatpush1.bf16.msra.mxu0 %v2274
    %2281 = vmatprep.subr.bf16.mxu0 0
    %2282 = vmatpush1.bf16.msra.mxu0 0
    %2283 = vmatprep.subr.bf16.mxu0 0
    %2284 = vmatpush1.bf16.msra.mxu0 0
    %2285 = vmatprep.subr.bf16.mxu0 0
    %2286 = vmatpush1.bf16.msra.mxu0 0
    %2287 = vmatprep.subr.bf16.mxu0 0
    %2288 = vmatpush1.bf16.msra.mxu0 0
    %2289 = vmatprep.subr.bf16.mxu0 0
    %2290 = vmatpush1.bf16.msra.mxu0 0
    %2291 = vmatprep.subr.bf16.mxu0 0
    %2292 = vmatpush1.bf16.msra.mxu0 0
    %2293 = vmatprep.subr.bf16.mxu0 0
    %2294 = vmatpush1.bf16.msra.mxu0 0
    %2295 = vmatprep.subr.bf16.mxu0 0
    %2296 = vmatpush1.bf16.msra.mxu0 0
    %2297 = vmatprep.subr.bf16.mxu0 0
    %2298 = vmatpush1.bf16.msra.mxu0 0
    %2299 = vmatprep.subr.bf16.mxu0 0
    %2300 = vmatpush1.bf16.msra.mxu0 0
    %2301 = vmatprep.subr.bf16.mxu0 0
    %2302 = vmatpush1.bf16.msra.mxu0 0
    %2303 = vmatprep.subr.bf16.mxu0 0
    %2304 = vmatpush1.bf16.msra.mxu0 0
    %2305 = vmatprep.subr.bf16.mxu0 0
    %2306 = vmatpush1.bf16.msra.mxu0 0
    %2307 = vmatprep.subr.bf16.mxu0 0
    %2308 = vmatpush1.bf16.msra.mxu0 0
    %2309 = vmatprep.subr.bf16.mxu0 0
    %2310 = vmatpush1.bf16.msra.mxu0 0
    %2311 = vmatprep.mubr.bf16.mxu0 0
    %2312 = vmatmul.mubr.bf16.gmra.mrb[0].mxu0 %v2277
    %v2313 = vpop.f32.mrb[0].mxu0
    %v2314 = vadd.f32 0.0, %v2313
    %v2315 = vpop.f32.mrb[0].mxu0
    %v2316 = vpop.f32.mrb[0].mxu0
    %v2317 = vpop.f32.mrb[0].mxu0
    %2318 = vdwg.mxu0
    %2319 = vrot.lane.b32.xlu0 %v1034, 80
    %v2320 = vpop.permute.xlu0 %2319
    %v2322 = vsel %vm1306, %v2320, 0
    %2324 = vmatprep.subr.bf16.mxu0 0
    %2325 = vmatpush1.bf16.xpose.msra.mxu0 %v2322
    %2326 = vmatprep.subr.bf16.mxu0 0
    %2327 = vmatpush1.bf16.xpose.msra.mxu0 0
    %2328 = vmatprep.subr.bf16.mxu0 0
    %2329 = vmatpush1.bf16.xpose.msra.mxu0 0
    %2330 = vmatprep.subr.bf16.mxu0 0
    %2331 = vmatpush1.bf16.xpose.msra.mxu0 0
    %2332 = vmatprep.subr.bf16.mxu0 0
    %2333 = vmatpush1.bf16.xpose.msra.mxu0 0
    %2334 = vmatprep.subr.bf16.mxu0 0
    %2335 = vmatpush1.bf16.xpose.msra.mxu0 0
    %2336 = vmatprep.subr.bf16.mxu0 0
    %2337 = vmatpush1.bf16.xpose.msra.mxu0 0
    %2338 = vmatprep.subr.bf16.mxu0 0
    %2339 = vmatpush1.bf16.xpose.msra.mxu0 0
    %2340 = vmatprep.subr.bf16.mxu0 0
    %2341 = vmatpush1.bf16.xpose.msra.mxu0 0
    %2342 = vmatprep.subr.bf16.mxu0 0
    %2343 = vmatpush1.bf16.xpose.msra.mxu0 0
    %2344 = vmatprep.subr.bf16.mxu0 0
    %2345 = vmatpush1.bf16.xpose.msra.mxu0 0
    %2346 = vmatprep.subr.bf16.mxu0 0
    %2347 = vmatpush1.bf16.xpose.msra.mxu0 0
    %2348 = vmatprep.subr.bf16.mxu0 0
    %2349 = vmatpush1.bf16.xpose.msra.mxu0 0
    %2350 = vmatprep.subr.bf16.mxu0 0
    %2351 = vmatpush1.bf16.xpose.msra.mxu0 0
    %2352 = vmatprep.subr.bf16.mxu0 0
    %2353 = vmatpush1.bf16.xpose.msra.mxu0 0
    %2354 = vmatprep.subr.bf16.mxu0 0
    %2355 = vmatpush1.bf16.xpose.msra.mxu0 0
    %2356 = vmatprep.mubr.bf16.mxu0 0
    %2357 = vmatmul.mubr.bf16.gmra.mrb[0].mxu0 %v2277
    %v2358 = vpop.f32.mrb[0].mxu0
    %v2359 = vadd.f32 %v1045, %v2358
    %v2360 = vpop.f32.mrb[0].mxu0
    %v2361 = vpop.f32.mrb[0].mxu0
    %v2362 = vpop.f32.mrb[0].mxu0
    %2363 = vdwg.mxu0
    %2364 = vrot.lane.b32.xlu0 %v1296, 16
    %v2365 = vpop.permute.xlu0 %2364
    %v2367 = vsel %vm1306, %v2365, 0
    %2369 = vmatprep.subr.bf16.mxu0 0
    %2370 = vmatpush1.bf16.xpose.msra.mxu0 %v2367
    %2371 = vmatprep.subr.bf16.mxu0 0
    %2372 = vmatpush1.bf16.xpose.msra.mxu0 0
    %2373 = vmatprep.subr.bf16.mxu0 0
    %2374 = vmatpush1.bf16.xpose.msra.mxu0 0
    %2375 = vmatprep.subr.bf16.mxu0 0
    %2376 = vmatpush1.bf16.xpose.msra.mxu0 0
    %2377 = vmatprep.subr.bf16.mxu0 0
    %2378 = vmatpush1.bf16.xpose.msra.mxu0 0
    %2379 = vmatprep.subr.bf16.mxu0 0
    %2380 = vmatpush1.bf16.xpose.msra.mxu0 0
    %2381 = vmatprep.subr.bf16.mxu0 0
    %2382 = vmatpush1.bf16.xpose.msra.mxu0 0
    %2383 = vmatprep.subr.bf16.mxu0 0
    %2384 = vmatpush1.bf16.xpose.msra.mxu0 0
    %2385 = vmatprep.subr.bf16.mxu0 0
    %2386 = vmatpush1.bf16.xpose.msra.mxu0 0
    %2387 = vmatprep.subr.bf16.mxu0 0
    %2388 = vmatpush1.bf16.xpose.msra.mxu0 0
    %2389 = vmatprep.subr.bf16.mxu0 0
    %2390 = vmatpush1.bf16.xpose.msra.mxu0 0
    %2391 = vmatprep.subr.bf16.mxu0 0
    %2392 = vmatpush1.bf16.xpose.msra.mxu0 0
    %2393 = vmatprep.subr.bf16.mxu0 0
    %2394 = vmatpush1.bf16.xpose.msra.mxu0 0
    %2395 = vmatprep.subr.bf16.mxu0 0
    %2396 = vmatpush1.bf16.xpose.msra.mxu0 0
    %2397 = vmatprep.subr.bf16.mxu0 0
    %2398 = vmatpush1.bf16.xpose.msra.mxu0 0
    %2399 = vmatprep.subr.bf16.mxu0 0
    %2400 = vmatpush1.bf16.xpose.msra.mxu0 0
    %2401 = vmatprep.mubr.bf16.mxu0 0
    %2402 = vmatmul.mubr.bf16.gmra.mrb[0].mxu0 %v2277
    %v2403 = vpop.f32.mrb[0].mxu0
    %v2404 = vadd.f32 %v1046, %v2403
    %v2405 = vpop.f32.mrb[0].mxu0
    %v2406 = vpop.f32.mrb[0].mxu0
    %v2407 = vpop.f32.mrb[0].mxu0
    %2408 = vdwg.mxu0
    %v2409 = vsel %vm1439, %v2314, -inf
    %2410 = vmax.xlane.f32.xlu0 %v2409
    %v2411 = vpop.xlane.xlu0 %2410
    %v2412 = vsel %vm1443, %v2359, -inf
    %2413 = vmax.xlane.f32.xlu0 %v2412
    %v2414 = vpop.xlane.xlu0 %2413
    %v2415 = vsel %vm1443, %v2404, -inf
    %2416 = vmax.xlane.f32.xlu0 %v2415
    %v2417 = vpop.xlane.xlu0 %2416
    %v2418 = vmax.f32 %v2414, %v2417
    %v2419 = vmax.f32 %v2411, %v2418
    %v2420 = vsub.f32 %v2314, %v2419
    %v2421 = vmul.f32 %v2420, 1.442695
    %v2422 = vpow.pop %v2421
    %v2423 = vsub.f32 %v2359, %v2419
    %v2424 = vmul.f32 %v2423, 1.442695
    %v2425 = vpow.pop %v2424
    %v2426 = vsub.f32 %v2404, %v2419
    %v2427 = vmul.f32 %v2426, 1.442695
    %v2428 = vpow.pop %v2427
    %v2429 = vsel %vm1439, %v2422, 0.0
    %2430 = vadd.xlane.f32.xlu0 %v2429
    %v2431 = vpop.xlane.xlu0 %2430
    %v2432 = vsel %vm1443, %v2425, 0.0
    %2433 = vadd.xlane.f32.xlu0 %v2432
    %v2434 = vpop.xlane.xlu0 %2433
    %v2435 = vadd.f32 %v2431, %v2434
    %v2436 = vsel %vm1443, %v2428, 0.0
    %2437 = vadd.xlane.f32.xlu0 %v2436
    %v2438 = vpop.xlane.xlu0 %2437
    %v2439 = vadd.f32 %v2435, %v2438
    %v2440 = vpack.c.bf16 %v2422, %v2422
    %s2441 = scalar_lea.vmem %s4, 6
    %v2442 = vld [vmem:[%s2441] sm:$0x3]
    %v2443 = vpack.c.bf16 %v2425, %v2425
    %v2445 = vsel %vm1443, %v2443, 0
    %v2447 = vsel %vm1478, %v2320, 0
    %2449 = vmatprep.subr.bf16.mxu0 0
    %2450 = vmatpush1.bf16.msra.mxu0 %v2447
    %2451 = vmatprep.subr.bf16.mxu0 0
    %2452 = vmatpush1.bf16.msra.mxu0 0
    %2453 = vmatprep.subr.bf16.mxu0 0
    %2454 = vmatpush1.bf16.msra.mxu0 0
    %2455 = vmatprep.subr.bf16.mxu0 0
    %2456 = vmatpush1.bf16.msra.mxu0 0
    %2457 = vmatprep.subr.bf16.mxu0 0
    %2458 = vmatpush1.bf16.msra.mxu0 0
    %2459 = vmatprep.subr.bf16.mxu0 0
    %2460 = vmatpush1.bf16.msra.mxu0 0
    %2461 = vmatprep.subr.bf16.mxu0 0
    %2462 = vmatpush1.bf16.msra.mxu0 0
    %2463 = vmatprep.subr.bf16.mxu0 0
    %2464 = vmatpush1.bf16.msra.mxu0 0
    %2465 = vmatprep.subr.bf16.mxu0 0
    %2466 = vmatpush1.bf16.msra.mxu0 0
    %2467 = vmatprep.subr.bf16.mxu0 0
    %2468 = vmatpush1.bf16.msra.mxu0 0
    %2469 = vmatprep.subr.bf16.mxu0 0
    %2470 = vmatpush1.bf16.msra.mxu0 0
    %2471 = vmatprep.subr.bf16.mxu0 0
    %2472 = vmatpush1.bf16.msra.mxu0 0
    %2473 = vmatprep.subr.bf16.mxu0 0
    %2474 = vmatpush1.bf16.msra.mxu0 0
    %2475 = vmatprep.subr.bf16.mxu0 0
    %2476 = vmatpush1.bf16.msra.mxu0 0
    %2477 = vmatprep.subr.bf16.mxu0 0
    %2478 = vmatpush1.bf16.msra.mxu0 0
    %2479 = vmatprep.subr.bf16.mxu0 0
    %2480 = vmatpush1.bf16.msra.mxu0 0
    %2481 = vmatprep.mubr.bf16.mxu0 0
    %2482 = vmatmul.mubr.bf16.gmra.mrb[0].mxu0 %v2445
    %v2483 = vpop.f32.mrb[0].mxu0
    %v2484 = vadd.f32 0.0, %v2483
    %v2485 = vpop.f32.mrb[0].mxu0
    %v2486 = vpop.f32.mrb[0].mxu0
    %v2487 = vpop.f32.mrb[0].mxu0
    %2488 = vdwg.mxu0
    %v2490 = vsel %vm1439, %v2440, 0
    %v2493 = vsel %vm1524, %v2442, 0
    %2495 = vmatprep.subr.bf16.mxu0 0
    %2496 = vmatpush1.bf16.msra.mxu0 %v2493
    %2497 = vmatprep.subr.bf16.mxu0 0
    %2498 = vmatpush1.bf16.msra.mxu0 0
    %2499 = vmatprep.subr.bf16.mxu0 0
    %2500 = vmatpush1.bf16.msra.mxu0 0
    %2501 = vmatprep.subr.bf16.mxu0 0
    %2502 = vmatpush1.bf16.msra.mxu0 0
    %2503 = vmatprep.subr.bf16.mxu0 0
    %2504 = vmatpush1.bf16.msra.mxu0 0
    %2505 = vmatprep.subr.bf16.mxu0 0
    %2506 = vmatpush1.bf16.msra.mxu0 0
    %2507 = vmatprep.subr.bf16.mxu0 0
    %2508 = vmatpush1.bf16.msra.mxu0 0
    %2509 = vmatprep.subr.bf16.mxu0 0
    %2510 = vmatpush1.bf16.msra.mxu0 0
    %2511 = vmatprep.subr.bf16.mxu0 0
    %2512 = vmatpush1.bf16.msra.mxu0 0
    %2513 = vmatprep.subr.bf16.mxu0 0
    %2514 = vmatpush1.bf16.msra.mxu0 0
    %2515 = vmatprep.subr.bf16.mxu0 0
    %2516 = vmatpush1.bf16.msra.mxu0 0
    %2517 = vmatprep.subr.bf16.mxu0 0
    %2518 = vmatpush1.bf16.msra.mxu0 0
    %2519 = vmatprep.subr.bf16.mxu0 0
    %2520 = vmatpush1.bf16.msra.mxu0 0
    %2521 = vmatprep.subr.bf16.mxu0 0
    %2522 = vmatpush1.bf16.msra.mxu0 0
    %2523 = vmatprep.subr.bf16.mxu0 0
    %2524 = vmatpush1.bf16.msra.mxu0 0
    %2525 = vmatprep.subr.bf16.mxu0 0
    %2526 = vmatpush1.bf16.msra.mxu0 0
    %2527 = vmatprep.mubr.bf16.mxu0 0
    %2528 = vmatmul.mubr.bf16.gmra.mrb[0].mxu0 %v2490
    %v2529 = vpop.f32.mrb[0].mxu0
    %v2530 = vadd.f32 %v2484, %v2529
    %v2531 = vpop.f32.mrb[0].mxu0
    %v2532 = vpop.f32.mrb[0].mxu0
    %v2533 = vpop.f32.mrb[0].mxu0
    %2534 = vdwg.mxu0
    %v2535 = vpack.c.bf16 %v2428, %v2428
    %2536 = vrot.lane.b32.xlu0 %v1297, 80
    %v2537 = vpop.permute.xlu0 %2536
    %v2539 = vsel %vm1443, %v2535, 0
    %v2542 = vsel %vm1478, %v2537, 0
    %2544 = vmatprep.subr.bf16.mxu0 0
    %2545 = vmatpush1.bf16.msra.mxu0 %v2542
    %2546 = vmatprep.subr.bf16.mxu0 0
    %2547 = vmatpush1.bf16.msra.mxu0 0
    %2548 = vmatprep.subr.bf16.mxu0 0
    %2549 = vmatpush1.bf16.msra.mxu0 0
    %2550 = vmatprep.subr.bf16.mxu0 0
    %2551 = vmatpush1.bf16.msra.mxu0 0
    %2552 = vmatprep.subr.bf16.mxu0 0
    %2553 = vmatpush1.bf16.msra.mxu0 0
    %2554 = vmatprep.subr.bf16.mxu0 0
    %2555 = vmatpush1.bf16.msra.mxu0 0
    %2556 = vmatprep.subr.bf16.mxu0 0
    %2557 = vmatpush1.bf16.msra.mxu0 0
    %2558 = vmatprep.subr.bf16.mxu0 0
    %2559 = vmatpush1.bf16.msra.mxu0 0
    %2560 = vmatprep.subr.bf16.mxu0 0
    %2561 = vmatpush1.bf16.msra.mxu0 0
    %2562 = vmatprep.subr.bf16.mxu0 0
    %2563 = vmatpush1.bf16.msra.mxu0 0
    %2564 = vmatprep.subr.bf16.mxu0 0
    %2565 = vmatpush1.bf16.msra.mxu0 0
    %2566 = vmatprep.subr.bf16.mxu0 0
    %2567 = vmatpush1.bf16.msra.mxu0 0
    %2568 = vmatprep.subr.bf16.mxu0 0
    %2569 = vmatpush1.bf16.msra.mxu0 0
    %2570 = vmatprep.subr.bf16.mxu0 0
    %2571 = vmatpush1.bf16.msra.mxu0 0
    %2572 = vmatprep.subr.bf16.mxu0 0
    %2573 = vmatpush1.bf16.msra.mxu0 0
    %2574 = vmatprep.subr.bf16.mxu0 0
    %2575 = vmatpush1.bf16.msra.mxu0 0
    %2576 = vmatprep.mubr.bf16.mxu0 0
    %2577 = vmatmul.mubr.bf16.gmra.mrb[0].mxu0 %v2539
    %v2578 = vpop.f32.mrb[0].mxu0
    %v2579 = vadd.f32 0.0, %v2578
    %v2580 = vpop.f32.mrb[0].mxu0
    %v2581 = vpop.f32.mrb[0].mxu0
    %v2582 = vpop.f32.mrb[0].mxu0
    %2583 = vdwg.mxu0
    %v2584 = vadd.f32 %v2530, %v2579
    %v2585 = vrcp.pop %v2439
    %v2586 = vmul.f32 %v2584, %v2585
    %2588 = vrot.lane.b32.xlu0 %v1942, 16
    %v2589 = vpop.permute.xlu0 %2588
    %2592 = vrot.lane.b32.xlu0 %v2264, 32
    %v2593 = vpop.permute.xlu0 %2592
    %2596 = vrot.lane.b32.xlu0 %v2586, 48
    %v2597 = vpop.permute.xlu0 %2596
    %v2599 = vsel %vm1306, %v1617, %v2589
    %v2600 = vsel %vm68, %v2599, %v2593
    %vm2601 = vcmask 392192
    %v2602 = vsel %vm2601, %v2600, %v2597
    %v2603 = vpack.c.bf16 %v2602, %v2602
    %v2604 = vld [vmem:[%s7] sm:$0xf]
    %v2605 = vld [vmem:[%s7 + $0x4] sm:$0xf]
    %v2606 = vld [vmem:[%s7 + $0x8] sm:$0xf]
    %v2607 = vld [vmem:[%s7 + $0xc] sm:$0xf]
    %v2608 = vld [vmem:[%s7 + $0x10] sm:$0xf]
    %v2609 = vld [vmem:[%s7 + $0x14] sm:$0xf]
    %v2610 = vld [vmem:[%s7 + $0x18] sm:$0xf]
    %v2611 = vld [vmem:[%s7 + $0x1c] sm:$0xf]
    %v2612 = vld [vmem:[%s8] sm:$0x1]
    %v2614 = vlaneseq
    %v2615 = vshrl.u32 %v2614, 7
    %v2616 = vsub.s32 0, %v2615
    %v2617 = vrot.slane %v2612, %v2616
    %v2627 = vunpack.c.l.b16 %v2604
    %v2628 = vunpack.c.l.b16 %v2605
    %v2629 = vunpack.c.l.b16 %v2606
    %v2630 = vunpack.c.l.b16 %v2607
    %v2631 = vunpack.c.l.b16 %v2608
    %v2632 = vunpack.c.l.b16 %v2609
    %v2633 = vunpack.c.l.b16 %v2610
    %v2634 = vunpack.c.l.b16 %v2611
    %v2635 = vpack.c.b16 %v2628, %v2627
    %v2636 = vpack.c.b16 %v2630, %v2629
    %v2637 = vpack.c.b16 %v2632, %v2631
    %v2638 = vpack.c.b16 %v2634, %v2633
    %v2644 = vsel %vm1047, %v2603, 0
    %2646 = vmatprep.subr.bf16.mxu0 0
    %2647 = vmatpush1.bf16.msra.mxu0 %v2635
    %2648 = vmatprep.subr.bf16.mxu0 0
    %2649 = vmatpush1.bf16.msra.mxu0 %v2636
    %2650 = vmatprep.subr.bf16.mxu0 0
    %2651 = vmatpush1.bf16.msra.mxu0 %v2637
    %2652 = vmatprep.subr.bf16.mxu0 0
    %2653 = vmatpush1.bf16.msra.mxu0 %v2638
    %2654 = vmatprep.subr.bf16.mxu0 0
    %2655 = vmatpush1.bf16.msra.mxu0 0
    %2656 = vmatprep.subr.bf16.mxu0 0
    %2657 = vmatpush1.bf16.msra.mxu0 0
    %2658 = vmatprep.subr.bf16.mxu0 0
    %2659 = vmatpush1.bf16.msra.mxu0 0
    %2660 = vmatprep.subr.bf16.mxu0 0
    %2661 = vmatpush1.bf16.msra.mxu0 0
    %2662 = vmatprep.subr.bf16.mxu0 0
    %2663 = vmatpush1.bf16.msra.mxu0 0
    %2664 = vmatprep.subr.bf16.mxu0 0
    %2665 = vmatpush1.bf16.msra.mxu0 0
    %2666 = vmatprep.subr.bf16.mxu0 0
    %2667 = vmatpush1.bf16.msra.mxu0 0
    %2668 = vmatprep.subr.bf16.mxu0 0
    %2669 = vmatpush1.bf16.msra.mxu0 0
    %2670 = vmatprep.subr.bf16.mxu0 0
    %2671 = vmatpush1.bf16.msra.mxu0 0
    %2672 = vmatprep.subr.bf16.mxu0 0
    %2673 = vmatpush1.bf16.msra.mxu0 0
    %2674 = vmatprep.subr.bf16.mxu0 0
    %2675 = vmatpush1.bf16.msra.mxu0 0
    %2676 = vmatprep.subr.bf16.mxu0 0
    %2677 = vmatpush1.bf16.msra.mxu0 0
    %2678 = vmatprep.mubr.bf16.mxu0 0
    %2679 = vmatmul.mubr.bf16.gmra.mrb[0].mxu0 %v2644
    %v2680 = vpop.f32.mrb[0].mxu0
    %v2681 = vadd.f32 %v2617, %v2680
    %v2682 = vpop.f32.mrb[0].mxu0
    %v2683 = vpop.f32.mrb[0].mxu0
    %v2684 = vpop.f32.mrb[0].mxu0
    %2685 = vdwg.mxu0
    %v2686 = vld [vmem:[%s9] sm:$0xff]
    %v2687 = vld [vmem:[%s9 + $0x8] sm:$0xff]
    %v2688 = vld [vmem:[%s9 + $0x10] sm:$0xff]
    %v2689 = vld [vmem:[%s9 + $0x18] sm:$0xff]
    %v2690 = vld [vmem:[%s9 + $0x20] sm:$0xff]
    %v2691 = vld [vmem:[%s9 + $0x28] sm:$0xff]
    %v2692 = vld [vmem:[%s9 + $0x30] sm:$0xff]
    %v2693 = vld [vmem:[%s9 + $0x38] sm:$0xff]
    %v2694 = vld [vmem:[%s10] sm:$0x3]
    %v2696 = vlaneseq
    %v2697 = vshrl.u32 %v2696, 7
    %v2698 = vsub.s32 0, %v2697
    %v2699 = vrot.slane %v2694, %v2698
    %v2700 = vlaneseq
    %v2701 = vshrl.u32 %v2700, 7
    %v2702 = vsub.s32 1, %v2701
    %v2703 = vrot.slane %v2694, %v2702
    %v2714 = vunpack.c.l.b16 %v2686
    %v2715 = vunpack.c.h.b16 %v2686
    %v2716 = vunpack.c.l.b16 %v2687
    %v2717 = vunpack.c.h.b16 %v2687
    %v2718 = vunpack.c.l.b16 %v2688
    %v2719 = vunpack.c.h.b16 %v2688
    %v2720 = vunpack.c.l.b16 %v2689
    %v2721 = vunpack.c.h.b16 %v2689
    %v2722 = vunpack.c.l.b16 %v2690
    %v2723 = vunpack.c.h.b16 %v2690
    %v2724 = vunpack.c.l.b16 %v2691
    %v2725 = vunpack.c.h.b16 %v2691
    %v2726 = vunpack.c.l.b16 %v2692
    %v2727 = vunpack.c.h.b16 %v2692
    %v2728 = vunpack.c.l.b16 %v2693
    %v2729 = vunpack.c.h.b16 %v2693
    %v2730 = vpack.c.b16 %v2716, %v2714
    %v2731 = vpack.c.b16 %v2717, %v2715
    %v2732 = vpack.c.b16 %v2720, %v2718
    %v2733 = vpack.c.b16 %v2721, %v2719
    %v2734 = vpack.c.b16 %v2724, %v2722
    %v2735 = vpack.c.b16 %v2725, %v2723
    %v2736 = vpack.c.b16 %v2728, %v2726
    %v2737 = vpack.c.b16 %v2729, %v2727
    %2746 = vmatprep.subr.bf16.mxu0 %v2731
    %2747 = vmatpush1.bf16.msra.mxu0 %v2730
    %2748 = vmatprep.subr.bf16.mxu0 %v2733
    %2749 = vmatpush1.bf16.msra.mxu0 %v2732
    %2750 = vmatprep.subr.bf16.mxu0 %v2735
    %2751 = vmatpush1.bf16.msra.mxu0 %v2734
    %2752 = vmatprep.subr.bf16.mxu0 %v2737
    %2753 = vmatpush1.bf16.msra.mxu0 %v2736
    %2754 = vmatprep.subr.bf16.mxu0 0
    %2755 = vmatpush1.bf16.msra.mxu0 0
    %2756 = vmatprep.subr.bf16.mxu0 0
    %2757 = vmatpush1.bf16.msra.mxu0 0
    %2758 = vmatprep.subr.bf16.mxu0 0
    %2759 = vmatpush1.bf16.msra.mxu0 0
    %2760 = vmatprep.subr.bf16.mxu0 0
    %2761 = vmatpush1.bf16.msra.mxu0 0
    %2762 = vmatprep.subr.bf16.mxu0 0
    %2763 = vmatpush1.bf16.msra.mxu0 0
    %2764 = vmatprep.subr.bf16.mxu0 0
    %2765 = vmatpush1.bf16.msra.mxu0 0
    %2766 = vmatprep.subr.bf16.mxu0 0
    %2767 = vmatpush1.bf16.msra.mxu0 0
    %2768 = vmatprep.subr.bf16.mxu0 0
    %2769 = vmatpush1.bf16.msra.mxu0 0
    %2770 = vmatprep.subr.bf16.mxu0 0
    %2771 = vmatpush1.bf16.msra.mxu0 0
    %2772 = vmatprep.subr.bf16.mxu0 0
    %2773 = vmatpush1.bf16.msra.mxu0 0
    %2774 = vmatprep.subr.bf16.mxu0 0
    %2775 = vmatpush1.bf16.msra.mxu0 0
    %2776 = vmatprep.subr.bf16.mxu0 0
    %2777 = vmatpush1.bf16.msra.mxu0 0
    %2778 = vmatprep.mubr.bf16.mxu0 0
    %2779 = vmatmul.mubr.bf16.gmra.mrb[0].mxu0 %v1124
    %v2780 = vpop.f32.mrb[0].mxu0
    %v2781 = vadd.f32 %v2699, %v2780
    %v2782 = vpop.f32.mrb[0].mxu0
    %v2783 = vadd.f32 %v2703, %v2782
    %v2784 = vpop.f32.mrb[0].mxu0
    %v2785 = vpop.f32.mrb[0].mxu0
    %2786 = vdwg.mxu0
    %v2787 = vmul.f32 %v2781, %v2781
    %v2788 = vmul.f32 %v2783, %v2783
    %v2789 = vmul.f32 %v2781, %v2787
    %v2790 = vmul.f32 %v2783, %v2788
    %v2791 = vmul.f32 %v2789, 0.044715
    %v2792 = vmul.f32 %v2790, 0.044715
    %v2793 = vadd.f32 %v2781, %v2791
    %v2794 = vadd.f32 %v2783, %v2792
    %v2795 = vmul.f32 %v2793, 0.7978846
    %v2796 = vmul.f32 %v2794, 0.7978846
    %v2797 = vtanh.pop %v2795
    %v2798 = vtanh.pop %v2796
    %v2799 = vadd.f32 %v2797, 1.0
    %v2800 = vadd.f32 %v2798, 1.0
    %v2801 = vmul.f32 %v2799, 0.5
    %v2802 = vmul.f32 %v2800, 0.5
    %v2803 = vmul.f32 %v2781, %v2801
    %v2804 = vmul.f32 %v2783, %v2802
    %v2805 = vpack.c.bf16 %v2803, %v2803
    %v2806 = vpack.c.bf16 %v2804, %v2804
    %v2807 = vld [vmem:[%s11] sm:$0xf]
    %v2808 = vld [vmem:[%s11 + $0x4] sm:$0xf]
    %v2809 = vld [vmem:[%s11 + $0x8] sm:$0xf]
    %v2810 = vld [vmem:[%s11 + $0xc] sm:$0xf]
    %v2811 = vld [vmem:[%s11 + $0x10] sm:$0xf]
    %v2812 = vld [vmem:[%s11 + $0x14] sm:$0xf]
    %v2813 = vld [vmem:[%s11 + $0x18] sm:$0xf]
    %v2814 = vld [vmem:[%s11 + $0x1c] sm:$0xf]
    %v2815 = vld [vmem:[%s11 + $0x20] sm:$0xf]
    %v2816 = vld [vmem:[%s11 + $0x24] sm:$0xf]
    %v2817 = vld [vmem:[%s11 + $0x28] sm:$0xf]
    %v2818 = vld [vmem:[%s11 + $0x2c] sm:$0xf]
    %v2819 = vld [vmem:[%s11 + $0x30] sm:$0xf]
    %v2820 = vld [vmem:[%s11 + $0x34] sm:$0xf]
    %v2821 = vld [vmem:[%s11 + $0x38] sm:$0xf]
    %v2822 = vld [vmem:[%s11 + $0x3c] sm:$0xf]
    %v2823 = vld [vmem:[%s11 + $0x40] sm:$0xf]
    %v2824 = vld [vmem:[%s11 + $0x44] sm:$0xf]
    %v2825 = vld [vmem:[%s11 + $0x48] sm:$0xf]
    %v2826 = vld [vmem:[%s11 + $0x4c] sm:$0xf]
    %v2827 = vld [vmem:[%s11 + $0x50] sm:$0xf]
    %v2828 = vld [vmem:[%s11 + $0x54] sm:$0xf]
    %v2829 = vld [vmem:[%s11 + $0x58] sm:$0xf]
    %v2830 = vld [vmem:[%s11 + $0x5c] sm:$0xf]
    %v2831 = vld [vmem:[%s11 + $0x60] sm:$0xf]
    %v2832 = vld [vmem:[%s11 + $0x64] sm:$0xf]
    %v2833 = vld [vmem:[%s11 + $0x68] sm:$0xf]
    %v2834 = vld [vmem:[%s11 + $0x6c] sm:$0xf]
    %v2835 = vld [vmem:[%s11 + $0x70] sm:$0xf]
    %v2836 = vld [vmem:[%s11 + $0x74] sm:$0xf]
    %v2837 = vld [vmem:[%s11 + $0x78] sm:$0xf]
    %v2838 = vld [vmem:[%s11 + $0x7c] sm:$0xf]
    %v2839 = vld [vmem:[%s12] sm:$0x1]
    %v2841 = vlaneseq
    %v2842 = vshrl.u32 %v2841, 7
    %v2843 = vsub.s32 0, %v2842
    %v2844 = vrot.slane %v2839, %v2843
    %v2878 = vunpack.c.l.b16 %v2807
    %v2879 = vunpack.c.l.b16 %v2808
    %v2880 = vunpack.c.l.b16 %v2809
    %v2881 = vunpack.c.l.b16 %v2810
    %v2882 = vunpack.c.l.b16 %v2811
    %v2883 = vunpack.c.l.b16 %v2812
    %v2884 = vunpack.c.l.b16 %v2813
    %v2885 = vunpack.c.l.b16 %v2814
    %v2886 = vunpack.c.l.b16 %v2815
    %v2887 = vunpack.c.l.b16 %v2816
    %v2888 = vunpack.c.l.b16 %v2817
    %v2889 = vunpack.c.l.b16 %v2818
    %v2890 = vunpack.c.l.b16 %v2819
    %v2891 = vunpack.c.l.b16 %v2820
    %v2892 = vunpack.c.l.b16 %v2821
    %v2893 = vunpack.c.l.b16 %v2822
    %v2894 = vunpack.c.l.b16 %v2823
    %v2895 = vunpack.c.l.b16 %v2824
    %v2896 = vunpack.c.l.b16 %v2825
    %v2897 = vunpack.c.l.b16 %v2826
    %v2898 = vunpack.c.l.b16 %v2827
    %v2899 = vunpack.c.l.b16 %v2828
    %v2900 = vunpack.c.l.b16 %v2829
    %v2901 = vunpack.c.l.b16 %v2830
    %v2902 = vunpack.c.l.b16 %v2831
    %v2903 = vunpack.c.l.b16 %v2832
    %v2904 = vunpack.c.l.b16 %v2833
    %v2905 = vunpack.c.l.b16 %v2834
    %v2906 = vunpack.c.l.b16 %v2835
    %v2907 = vunpack.c.l.b16 %v2836
    %v2908 = vunpack.c.l.b16 %v2837
    %v2909 = vunpack.c.l.b16 %v2838
    %v2910 = vpack.c.b16 %v2879, %v2878
    %v2911 = vpack.c.b16 %v2881, %v2880
    %v2912 = vpack.c.b16 %v2883, %v2882
    %v2913 = vpack.c.b16 %v2885, %v2884
    %v2914 = vpack.c.b16 %v2887, %v2886
    %v2915 = vpack.c.b16 %v2889, %v2888
    %v2916 = vpack.c.b16 %v2891, %v2890
    %v2917 = vpack.c.b16 %v2893, %v2892
    %v2918 = vpack.c.b16 %v2895, %v2894
    %v2919 = vpack.c.b16 %v2897, %v2896
    %v2920 = vpack.c.b16 %v2899, %v2898
    %v2921 = vpack.c.b16 %v2901, %v2900
    %v2922 = vpack.c.b16 %v2903, %v2902
    %v2923 = vpack.c.b16 %v2905, %v2904
    %v2924 = vpack.c.b16 %v2907, %v2906
    %v2925 = vpack.c.b16 %v2909, %v2908
    %2942 = vmatprep.subr.bf16.mxu0 0
    %2943 = vmatpush1.bf16.msra.mxu0 %v2910
    %2944 = vmatprep.subr.bf16.mxu0 0
    %2945 = vmatpush1.bf16.msra.mxu0 %v2911
    %2946 = vmatprep.subr.bf16.mxu0 0
    %2947 = vmatpush1.bf16.msra.mxu0 %v2912
    %2948 = vmatprep.subr.bf16.mxu0 0
    %2949 = vmatpush1.bf16.msra.mxu0 %v2913
    %2950 = vmatprep.subr.bf16.mxu0 0
    %2951 = vmatpush1.bf16.msra.mxu0 %v2914
    %2952 = vmatprep.subr.bf16.mxu0 0
    %2953 = vmatpush1.bf16.msra.mxu0 %v2915
    %2954 = vmatprep.subr.bf16.mxu0 0
    %2955 = vmatpush1.bf16.msra.mxu0 %v2916
    %2956 = vmatprep.subr.bf16.mxu0 0
    %2957 = vmatpush1.bf16.msra.mxu0 %v2917
    %2958 = vmatprep.subr.bf16.mxu0 0
    %2959 = vmatpush1.bf16.msra.mxu0 %v2918
    %2960 = vmatprep.subr.bf16.mxu0 0
    %2961 = vmatpush1.bf16.msra.mxu0 %v2919
    %2962 = vmatprep.subr.bf16.mxu0 0
    %2963 = vmatpush1.bf16.msra.mxu0 %v2920
    %2964 = vmatprep.subr.bf16.mxu0 0
    %2965 = vmatpush1.bf16.msra.mxu0 %v2921
    %2966 = vmatprep.subr.bf16.mxu0 0
    %2967 = vmatpush1.bf16.msra.mxu0 %v2922
    %2968 = vmatprep.subr.bf16.mxu0 0
    %2969 = vmatpush1.bf16.msra.mxu0 %v2923
    %2970 = vmatprep.subr.bf16.mxu0 0
    %2971 = vmatpush1.bf16.msra.mxu0 %v2924
    %2972 = vmatprep.subr.bf16.mxu0 0
    %2973 = vmatpush1.bf16.msra.mxu0 %v2925
    %2974 = vmatprep.mubr.bf16.mxu0 %v2806
    %2975 = vmatmul.mubr.bf16.gmra.mrb[0].mxu0 %v2805
    %v2976 = vpop.f32.mrb[0].mxu0
    %v2977 = vadd.f32 %v2844, %v2976
    %v2978 = vpop.f32.mrb[0].mxu0
    %v2979 = vpop.f32.mrb[0].mxu0
    %v2980 = vpop.f32.mrb[0].mxu0
    %2981 = vdwg.mxu0
    %v2982 = vadd.f32 %v2681, %v2977
    %v2983 = vadd.f32 %v2982, %v1029
    %v2984 = vsel %vm1047, %v2983, 0.0
    %2985 = vadd.xlane.f32.xlu0 %v2984
    %v2986 = vpop.xlane.xlu0 %2985
    %v2987 = vmul.f32 %v2986, %v1051
    %v2988 = vsub.f32 %v2983, %v2987
    %v2989 = vmul.f32 %v2988, %v2988
    %v2990 = vsel %vm1047, %v2989, 0.0
    %2991 = vadd.xlane.f32.xlu0 %v2990
    %v2992 = vpop.xlane.xlu0 %2991
    %v2993 = vmul.f32 %v2992, %v1051
    %v2994 = vadd.f32 %v2993, 1e-05
    %v2995 = vrsqrt.pop %v2994
    %v2996 = vmul.f32 %v2988, %v2995
    %v2997 = vpack.c.bf16 %v2996, %v2996
    %s2998 = scalar_lea.vmem %s5, 64
    %v2999 = vld [vmem:[%s2998] sm:$0xff]
    %v3000 = vld [vmem:[%s2998 + $0x8] sm:$0xff]
    %v3001 = vld [vmem:[%s2998 + $0x10] sm:$0xff]
    %v3002 = vld [vmem:[%s2998 + $0x18] sm:$0xff]
    %v3003 = vld [vmem:[%s2998 + $0x20] sm:$0xff]
    %v3004 = vld [vmem:[%s2998 + $0x28] sm:$0xff]
    %v3005 = vld [vmem:[%s2998 + $0x30] sm:$0xff]
    %v3006 = vld [vmem:[%s2998 + $0x38] sm:$0xff]
    %s3007 = scalar_lea.vmem %s6, 2
    %v3008 = vld [vmem:[%s3007] sm:$0x3]
    %v3010 = vlaneseq
    %v3011 = vshrl.u32 %v3010, 7
    %v3012 = vsub.s32 0, %v3011
    %v3013 = vrot.slane %v3008, %v3012
    %v3014 = vlaneseq
    %v3015 = vshrl.u32 %v3014, 7
    %v3016 = vsub.s32 1, %v3015
    %v3017 = vrot.slane %v3008, %v3016
    %v3028 = vunpack.c.l.b16 %v2999
    %v3029 = vunpack.c.h.b16 %v2999
    %v3030 = vunpack.c.l.b16 %v3000
    %v3031 = vunpack.c.h.b16 %v3000
    %v3032 = vunpack.c.l.b16 %v3001
    %v3033 = vunpack.c.h.b16 %v3001
    %v3034 = vunpack.c.l.b16 %v3002
    %v3035 = vunpack.c.h.b16 %v3002
    %v3036 = vunpack.c.l.b16 %v3003
    %v3037 = vunpack.c.h.b16 %v3003
    %v3038 = vunpack.c.l.b16 %v3004
    %v3039 = vunpack.c.h.b16 %v3004
    %v3040 = vunpack.c.l.b16 %v3005
    %v3041 = vunpack.c.h.b16 %v3005
    %v3042 = vunpack.c.l.b16 %v3006
    %v3043 = vunpack.c.h.b16 %v3006
    %v3044 = vpack.c.b16 %v3030, %v3028
    %v3045 = vpack.c.b16 %v3031, %v3029
    %v3046 = vpack.c.b16 %v3034, %v3032
    %v3047 = vpack.c.b16 %v3035, %v3033
    %v3048 = vpack.c.b16 %v3038, %v3036
    %v3049 = vpack.c.b16 %v3039, %v3037
    %v3050 = vpack.c.b16 %v3042, %v3040
    %v3051 = vpack.c.b16 %v3043, %v3041
    %v3061 = vsel %vm1047, %v2997, 0
    %3063 = vmatprep.subr.bf16.mxu0 %v3045
    %3064 = vmatpush1.bf16.msra.mxu0 %v3044
    %3065 = vmatprep.subr.bf16.mxu0 %v3047
    %3066 = vmatpush1.bf16.msra.mxu0 %v3046
    %3067 = vmatprep.subr.bf16.mxu0 %v3049
    %3068 = vmatpush1.bf16.msra.mxu0 %v3048
    %3069 = vmatprep.subr.bf16.mxu0 %v3051
    %3070 = vmatpush1.bf16.msra.mxu0 %v3050
    %3071 = vmatprep.subr.bf16.mxu0 0
    %3072 = vmatpush1.bf16.msra.mxu0 0
    %3073 = vmatprep.subr.bf16.mxu0 0
    %3074 = vmatpush1.bf16.msra.mxu0 0
    %3075 = vmatprep.subr.bf16.mxu0 0
    %3076 = vmatpush1.bf16.msra.mxu0 0
    %3077 = vmatprep.subr.bf16.mxu0 0
    %3078 = vmatpush1.bf16.msra.mxu0 0
    %3079 = vmatprep.subr.bf16.mxu0 0
    %3080 = vmatpush1.bf16.msra.mxu0 0
    %3081 = vmatprep.subr.bf16.mxu0 0
    %3082 = vmatpush1.bf16.msra.mxu0 0
    %3083 = vmatprep.subr.bf16.mxu0 0
    %3084 = vmatpush1.bf16.msra.mxu0 0
    %3085 = vmatprep.subr.bf16.mxu0 0
    %3086 = vmatpush1.bf16.msra.mxu0 0
    %3087 = vmatprep.subr.bf16.mxu0 0
    %3088 = vmatpush1.bf16.msra.mxu0 0
    %3089 = vmatprep.subr.bf16.mxu0 0
    %3090 = vmatpush1.bf16.msra.mxu0 0
    %3091 = vmatprep.subr.bf16.mxu0 0
    %3092 = vmatpush1.bf16.msra.mxu0 0
    %3093 = vmatprep.subr.bf16.mxu0 0
    %3094 = vmatpush1.bf16.msra.mxu0 0
    %3095 = vmatprep.mubr.bf16.mxu0 0
    %3096 = vmatmul.mubr.bf16.gmra.mrb[0].mxu0 %v3061
    %v3097 = vpop.f32.mrb[0].mxu0
    %v3098 = vadd.f32 %v3013, %v3097
    %v3099 = vpop.f32.mrb[0].mxu0
    %v3100 = vadd.f32 %v3017, %v3099
    %v3101 = vpop.f32.mrb[0].mxu0
    %v3102 = vpop.f32.mrb[0].mxu0
    %3103 = vdwg.mxu0
    %v3104 = vmul.f32 %v3098, %v1035
    %v3105 = vpack.c.bf16 %v3098, %v3098
    %v3107 = vsel %vm1047, %v3105, 0
    %3109 = vmatprep.subr.bf16.mxu0 0
    %3110 = vmatpush1.bf16.msra.mxu0 %v1185
    %3111 = vmatprep.subr.bf16.mxu0 0
    %3112 = vmatpush1.bf16.msra.mxu0 %v1186
    %3113 = vmatprep.subr.bf16.mxu0 0
    %3114 = vmatpush1.bf16.msra.mxu0 %v1187
    %3115 = vmatprep.subr.bf16.mxu0 0
    %3116 = vmatpush1.bf16.msra.mxu0 %v1188
    %3117 = vmatprep.subr.bf16.mxu0 0
    %3118 = vmatpush1.bf16.msra.mxu0 0
    %3119 = vmatprep.subr.bf16.mxu0 0
    %3120 = vmatpush1.bf16.msra.mxu0 0
    %3121 = vmatprep.subr.bf16.mxu0 0
    %3122 = vmatpush1.bf16.msra.mxu0 0
    %3123 = vmatprep.subr.bf16.mxu0 0
    %3124 = vmatpush1.bf16.msra.mxu0 0
    %3125 = vmatprep.subr.bf16.mxu0 0
    %3126 = vmatpush1.bf16.msra.mxu0 0
    %3127 = vmatprep.subr.bf16.mxu0 0
    %3128 = vmatpush1.bf16.msra.mxu0 0
    %3129 = vmatprep.subr.bf16.mxu0 0
    %3130 = vmatpush1.bf16.msra.mxu0 0
    %3131 = vmatprep.subr.bf16.mxu0 0
    %3132 = vmatpush1.bf16.msra.mxu0 0
    %3133 = vmatprep.subr.bf16.mxu0 0
    %3134 = vmatpush1.bf16.msra.mxu0 0
    %3135 = vmatprep.subr.bf16.mxu0 0
    %3136 = vmatpush1.bf16.msra.mxu0 0
    %3137 = vmatprep.subr.bf16.mxu0 0
    %3138 = vmatpush1.bf16.msra.mxu0 0
    %3139 = vmatprep.subr.bf16.mxu0 0
    %3140 = vmatpush1.bf16.msra.mxu0 0
    %3141 = vmatprep.mubr.bf16.mxu0 0
    %3142 = vmatmul.mubr.bf16.gmra.mrb[0].mxu0 %v3107
    %v3143 = vpop.f32.mrb[0].mxu0
    %v3144 = vadd.f32 0.0, %v3143
    %v3145 = vpop.f32.mrb[0].mxu0
    %v3146 = vpop.f32.mrb[0].mxu0
    %v3147 = vpop.f32.mrb[0].mxu0
    %3148 = vdwg.mxu0
    %v3149 = vmul.f32 %v3144, %v1036
    %v3150 = vadd.f32 %v3104, %v3149
    %v3151 = vmul.f32 %v3098, %v1240
    %3153 = vrot.lane.b32.xlu0 %v3105, 64
    %v3154 = vpop.permute.xlu0 %3153
    %v3156 = vsel %vm1047, %v3154, 0
    %3158 = vmatprep.subr.bf16.mxu0 0
    %3159 = vmatpush1.bf16.msra.mxu0 %v1185
    %3160 = vmatprep.subr.bf16.mxu0 0
    %3161 = vmatpush1.bf16.msra.mxu0 %v1186
    %3162 = vmatprep.subr.bf16.mxu0 0
    %3163 = vmatpush1.bf16.msra.mxu0 %v1187
    %3164 = vmatprep.subr.bf16.mxu0 0
    %3165 = vmatpush1.bf16.msra.mxu0 %v1188
    %3166 = vmatprep.subr.bf16.mxu0 0
    %3167 = vmatpush1.bf16.msra.mxu0 0
    %3168 = vmatprep.subr.bf16.mxu0 0
    %3169 = vmatpush1.bf16.msra.mxu0 0
    %3170 = vmatprep.subr.bf16.mxu0 0
    %3171 = vmatpush1.bf16.msra.mxu0 0
    %3172 = vmatprep.subr.bf16.mxu0 0
    %3173 = vmatpush1.bf16.msra.mxu0 0
    %3174 = vmatprep.subr.bf16.mxu0 0
    %3175 = vmatpush1.bf16.msra.mxu0 0
    %3176 = vmatprep.subr.bf16.mxu0 0
    %3177 = vmatpush1.bf16.msra.mxu0 0
    %3178 = vmatprep.subr.bf16.mxu0 0
    %3179 = vmatpush1.bf16.msra.mxu0 0
    %3180 = vmatprep.subr.bf16.mxu0 0
    %3181 = vmatpush1.bf16.msra.mxu0 0
    %3182 = vmatprep.subr.bf16.mxu0 0
    %3183 = vmatpush1.bf16.msra.mxu0 0
    %3184 = vmatprep.subr.bf16.mxu0 0
    %3185 = vmatpush1.bf16.msra.mxu0 0
    %3186 = vmatprep.subr.bf16.mxu0 0
    %3187 = vmatpush1.bf16.msra.mxu0 0
    %3188 = vmatprep.subr.bf16.mxu0 0
    %3189 = vmatpush1.bf16.msra.mxu0 0
    %3190 = vmatprep.mubr.bf16.mxu0 0
    %3191 = vmatmul.mubr.bf16.gmra.mrb[0].mxu0 %v3156
    %v3192 = vpop.f32.mrb[0].mxu0
    %v3193 = vadd.f32 0.0, %v3192
    %v3194 = vpop.f32.mrb[0].mxu0
    %v3195 = vpop.f32.mrb[0].mxu0
    %v3196 = vpop.f32.mrb[0].mxu0
    %3197 = vdwg.mxu0
    %v3198 = vmul.f32 %v3193, %v1036
    %3200 = vrot.lane.b32.xlu0 %v3198, 64
    %v3201 = vpop.permute.xlu0 %3200
    %v3203 = vadd.f32 %v3151, %v3201
    %v3204 = vpack.c.bf16 %v3150, %v3150
    %v3205 = vpack.c.bf16 %v3203, %v3203
    %v3206 = vpack.c.bf16 %v3100, %v3100
    %s3207 = scalar_lea.vmem %s3, 32
    %v3208 = vld [vmem:[%s3207] sm:$0xf]
    %v3209 = vld [vmem:[%s3207 + $0x4] sm:$0xf]
    %v3212 = vunpack.c.l.b16 %v3208
    %v3213 = vunpack.c.l.b16 %v3209
    %v3214 = vpack.c.b16 %v3213, %v3212
    %v3217 = vsel %vm1306, %v3204, 0
    %3219 = vmatprep.subr.bf16.mxu0 0
    %3220 = vmatpush1.bf16.msra.mxu0 %v3214
    %3221 = vmatprep.subr.bf16.mxu0 0
    %3222 = vmatpush1.bf16.msra.mxu0 0
    %3223 = vmatprep.subr.bf16.mxu0 0
    %3224 = vmatpush1.bf16.msra.mxu0 0
    %3225 = vmatprep.subr.bf16.mxu0 0
    %3226 = vmatpush1.bf16.msra.mxu0 0
    %3227 = vmatprep.subr.bf16.mxu0 0
    %3228 = vmatpush1.bf16.msra.mxu0 0
    %3229 = vmatprep.subr.bf16.mxu0 0
    %3230 = vmatpush1.bf16.msra.mxu0 0
    %3231 = vmatprep.subr.bf16.mxu0 0
    %3232 = vmatpush1.bf16.msra.mxu0 0
    %3233 = vmatprep.subr.bf16.mxu0 0
    %3234 = vmatpush1.bf16.msra.mxu0 0
    %3235 = vmatprep.subr.bf16.mxu0 0
    %3236 = vmatpush1.bf16.msra.mxu0 0
    %3237 = vmatprep.subr.bf16.mxu0 0
    %3238 = vmatpush1.bf16.msra.mxu0 0
    %3239 = vmatprep.subr.bf16.mxu0 0
    %3240 = vmatpush1.bf16.msra.mxu0 0
    %3241 = vmatprep.subr.bf16.mxu0 0
    %3242 = vmatpush1.bf16.msra.mxu0 0
    %3243 = vmatprep.subr.bf16.mxu0 0
    %3244 = vmatpush1.bf16.msra.mxu0 0
    %3245 = vmatprep.subr.bf16.mxu0 0
    %3246 = vmatpush1.bf16.msra.mxu0 0
    %3247 = vmatprep.subr.bf16.mxu0 0
    %3248 = vmatpush1.bf16.msra.mxu0 0
    %3249 = vmatprep.subr.bf16.mxu0 0
    %3250 = vmatpush1.bf16.msra.mxu0 0
    %3251 = vmatprep.mubr.bf16.mxu0 0
    %3252 = vmatmul.mubr.bf16.gmra.mrb[0].mxu0 %v3217
    %v3253 = vpop.f32.mrb[0].mxu0
    %v3254 = vadd.f32 0.0, %v3253
    %v3255 = vpop.f32.mrb[0].mxu0
    %v3256 = vpop.f32.mrb[0].mxu0
    %v3257 = vpop.f32.mrb[0].mxu0
    %3258 = vdwg.mxu0
    %3259 = vmatprep.subr.bf16.mxu0 0
    %3260 = vmatpush1.bf16.xpose.msra.mxu0 %v1351
    %3261 = vmatprep.subr.bf16.mxu0 0
    %3262 = vmatpush1.bf16.xpose.msra.mxu0 0
    %3263 = vmatprep.subr.bf16.mxu0 0
    %3264 = vmatpush1.bf16.xpose.msra.mxu0 0
    %3265 = vmatprep.subr.bf16.mxu0 0
    %3266 = vmatpush1.bf16.xpose.msra.mxu0 0
    %3267 = vmatprep.subr.bf16.mxu0 0
    %3268 = vmatpush1.bf16.xpose.msra.mxu0 0
    %3269 = vmatprep.subr.bf16.mxu0 0
    %3270 = vmatpush1.bf16.xpose.msra.mxu0 0
    %3271 = vmatprep.subr.bf16.mxu0 0
    %3272 = vmatpush1.bf16.xpose.msra.mxu0 0
    %3273 = vmatprep.subr.bf16.mxu0 0
    %3274 = vmatpush1.bf16.xpose.msra.mxu0 0
    %3275 = vmatprep.subr.bf16.mxu0 0
    %3276 = vmatpush1.bf16.xpose.msra.mxu0 0
    %3277 = vmatprep.subr.bf16.mxu0 0
    %3278 = vmatpush1.bf16.xpose.msra.mxu0 0
    %3279 = vmatprep.subr.bf16.mxu0 0
    %3280 = vmatpush1.bf16.xpose.msra.mxu0 0
    %3281 = vmatprep.subr.bf16.mxu0 0
    %3282 = vmatpush1.bf16.xpose.msra.mxu0 0
    %3283 = vmatprep.subr.bf16.mxu0 0
    %3284 = vmatpush1.bf16.xpose.msra.mxu0 0
    %3285 = vmatprep.subr.bf16.mxu0 0
    %3286 = vmatpush1.bf16.xpose.msra.mxu0 0
    %3287 = vmatprep.subr.bf16.mxu0 0
    %3288 = vmatpush1.bf16.xpose.msra.mxu0 0
    %3289 = vmatprep.subr.bf16.mxu0 0
    %3290 = vmatpush1.bf16.xpose.msra.mxu0 0
    %3291 = vmatprep.mubr.bf16.mxu0 0
    %3292 = vmatmul.mubr.bf16.gmra.mrb[0].mxu0 %v3217
    %v3293 = vpop.f32.mrb[0].mxu0
    %v3294 = vadd.f32 %v1045, %v3293
    %v3295 = vpop.f32.mrb[0].mxu0
    %v3296 = vpop.f32.mrb[0].mxu0
    %v3297 = vpop.f32.mrb[0].mxu0
    %3298 = vdwg.mxu0
    %3300 = vrot.lane.b32.xlu0 %v3205, 64
    %v3301 = vpop.permute.xlu0 %3300
    %v3303 = vsel %vm1306, %v3301, 0
    %3305 = vmatprep.subr.bf16.mxu0 0
    %3306 = vmatpush1.bf16.xpose.msra.mxu0 %v3303
    %3307 = vmatprep.subr.bf16.mxu0 0
    %3308 = vmatpush1.bf16.xpose.msra.mxu0 0
    %3309 = vmatprep.subr.bf16.mxu0 0
    %3310 = vmatpush1.bf16.xpose.msra.mxu0 0
    %3311 = vmatprep.subr.bf16.mxu0 0
    %3312 = vmatpush1.bf16.xpose.msra.mxu0 0
    %3313 = vmatprep.subr.bf16.mxu0 0
    %3314 = vmatpush1.bf16.xpose.msra.mxu0 0
    %3315 = vmatprep.subr.bf16.mxu0 0
    %3316 = vmatpush1.bf16.xpose.msra.mxu0 0
    %3317 = vmatprep.subr.bf16.mxu0 0
    %3318 = vmatpush1.bf16.xpose.msra.mxu0 0
    %3319 = vmatprep.subr.bf16.mxu0 0
    %3320 = vmatpush1.bf16.xpose.msra.mxu0 0
    %3321 = vmatprep.subr.bf16.mxu0 0
    %3322 = vmatpush1.bf16.xpose.msra.mxu0 0
    %3323 = vmatprep.subr.bf16.mxu0 0
    %3324 = vmatpush1.bf16.xpose.msra.mxu0 0
    %3325 = vmatprep.subr.bf16.mxu0 0
    %3326 = vmatpush1.bf16.xpose.msra.mxu0 0
    %3327 = vmatprep.subr.bf16.mxu0 0
    %3328 = vmatpush1.bf16.xpose.msra.mxu0 0
    %3329 = vmatprep.subr.bf16.mxu0 0
    %3330 = vmatpush1.bf16.xpose.msra.mxu0 0
    %3331 = vmatprep.subr.bf16.mxu0 0
    %3332 = vmatpush1.bf16.xpose.msra.mxu0 0
    %3333 = vmatprep.subr.bf16.mxu0 0
    %3334 = vmatpush1.bf16.xpose.msra.mxu0 0
    %3335 = vmatprep.subr.bf16.mxu0 0
    %3336 = vmatpush1.bf16.xpose.msra.mxu0 0
    %3337 = vmatprep.mubr.bf16.mxu0 0
    %3338 = vmatmul.mubr.bf16.gmra.mrb[0].mxu0 %v3217
    %v3339 = vpop.f32.mrb[0].mxu0
    %v3340 = vadd.f32 %v1046, %v3339
    %v3341 = vpop.f32.mrb[0].mxu0
    %v3342 = vpop.f32.mrb[0].mxu0
    %v3343 = vpop.f32.mrb[0].mxu0
    %3344 = vdwg.mxu0
    %v3345 = vsel %vm1439, %v3254, -inf
    %3346 = vmax.xlane.f32.xlu0 %v3345
    %v3347 = vpop.xlane.xlu0 %3346
    %v3348 = vsel %vm1443, %v3294, -inf
    %3349 = vmax.xlane.f32.xlu0 %v3348
    %v3350 = vpop.xlane.xlu0 %3349
    %v3351 = vsel %vm1443, %v3340, -inf
    %3352 = vmax.xlane.f32.xlu0 %v3351
    %v3353 = vpop.xlane.xlu0 %3352
    %v3354 = vmax.f32 %v3350, %v3353
    %v3355 = vmax.f32 %v3347, %v3354
    %v3356 = vsub.f32 %v3254, %v3355
    %v3357 = vmul.f32 %v3356, 1.442695
    %v3358 = vpow.pop %v3357
    %v3359 = vsub.f32 %v3294, %v3355
    %v3360 = vmul.f32 %v3359, 1.442695
    %v3361 = vpow.pop %v3360
    %v3362 = vsub.f32 %v3340, %v3355
    %v3363 = vmul.f32 %v3362, 1.442695
    %v3364 = vpow.pop %v3363
    %v3365 = vsel %vm1439, %v3358, 0.0
    %3366 = vadd.xlane.f32.xlu0 %v3365
    %v3367 = vpop.xlane.xlu0 %3366
    %v3368 = vsel %vm1443, %v3361, 0.0
    %3369 = vadd.xlane.f32.xlu0 %v3368
    %v3370 = vpop.xlane.xlu0 %3369
    %v3371 = vadd.f32 %v3367, %v3370
    %v3372 = vsel %vm1443, %v3364, 0.0
    %3373 = vadd.xlane.f32.xlu0 %v3372
    %v3374 = vpop.xlane.xlu0 %3373
    %v3375 = vadd.f32 %v3371, %v3374
    %v3376 = vpack.c.bf16 %v3358, %v3358
    %s3377 = scalar_lea.vmem %s4, 8
    %v3378 = vld [vmem:[%s3377] sm:$0x3]
    %v3379 = vpack.c.bf16 %v3361, %v3361
    %v3381 = vsel %vm1443, %v3379, 0
    %3383 = vmatprep.subr.bf16.mxu0 0
    %3384 = vmatpush1.bf16.msra.mxu0 %v1479
    %3385 = vmatprep.subr.bf16.mxu0 0
    %3386 = vmatpush1.bf16.msra.mxu0 0
    %3387 = vmatprep.subr.bf16.mxu0 0
    %3388 = vmatpush1.bf16.msra.mxu0 0
    %3389 = vmatprep.subr.bf16.mxu0 0
    %3390 = vmatpush1.bf16.msra.mxu0 0
    %3391 = vmatprep.subr.bf16.mxu0 0
    %3392 = vmatpush1.bf16.msra.mxu0 0
    %3393 = vmatprep.subr.bf16.mxu0 0
    %3394 = vmatpush1.bf16.msra.mxu0 0
    %3395 = vmatprep.subr.bf16.mxu0 0
    %3396 = vmatpush1.bf16.msra.mxu0 0
    %3397 = vmatprep.subr.bf16.mxu0 0
    %3398 = vmatpush1.bf16.msra.mxu0 0
    %3399 = vmatprep.subr.bf16.mxu0 0
    %3400 = vmatpush1.bf16.msra.mxu0 0
    %3401 = vmatprep.subr.bf16.mxu0 0
    %3402 = vmatpush1.bf16.msra.mxu0 0
    %3403 = vmatprep.subr.bf16.mxu0 0
    %3404 = vmatpush1.bf16.msra.mxu0 0
    %3405 = vmatprep.subr.bf16.mxu0 0
    %3406 = vmatpush1.bf16.msra.mxu0 0
    %3407 = vmatprep.subr.bf16.mxu0 0
    %3408 = vmatpush1.bf16.msra.mxu0 0
    %3409 = vmatprep.subr.bf16.mxu0 0
    %3410 = vmatpush1.bf16.msra.mxu0 0
    %3411 = vmatprep.subr.bf16.mxu0 0
    %3412 = vmatpush1.bf16.msra.mxu0 0
    %3413 = vmatprep.subr.bf16.mxu0 0
    %3414 = vmatpush1.bf16.msra.mxu0 0
    %3415 = vmatprep.mubr.bf16.mxu0 0
    %3416 = vmatmul.mubr.bf16.gmra.mrb[0].mxu0 %v3381
    %v3417 = vpop.f32.mrb[0].mxu0
    %v3418 = vadd.f32 0.0, %v3417
    %v3419 = vpop.f32.mrb[0].mxu0
    %v3420 = vpop.f32.mrb[0].mxu0
    %v3421 = vpop.f32.mrb[0].mxu0
    %3422 = vdwg.mxu0
    %v3424 = vsel %vm1439, %v3376, 0
    %v3427 = vsel %vm1524, %v3378, 0
    %3429 = vmatprep.subr.bf16.mxu0 0
    %3430 = vmatpush1.bf16.msra.mxu0 %v3427
    %3431 = vmatprep.subr.bf16.mxu0 0
    %3432 = vmatpush1.bf16.msra.mxu0 0
    %3433 = vmatprep.subr.bf16.mxu0 0
    %3434 = vmatpush1.bf16.msra.mxu0 0
    %3435 = vmatprep.subr.bf16.mxu0 0
    %3436 = vmatpush1.bf16.msra.mxu0 0
    %3437 = vmatprep.subr.bf16.mxu0 0
    %3438 = vmatpush1.bf16.msra.mxu0 0
    %3439 = vmatprep.subr.bf16.mxu0 0
    %3440 = vmatpush1.bf16.msra.mxu0 0
    %3441 = vmatprep.subr.bf16.mxu0 0
    %3442 = vmatpush1.bf16.msra.mxu0 0
    %3443 = vmatprep.subr.bf16.mxu0 0
    %3444 = vmatpush1.bf16.msra.mxu0 0
    %3445 = vmatprep.subr.bf16.mxu0 0
    %3446 = vmatpush1.bf16.msra.mxu0 0
    %3447 = vmatprep.subr.bf16.mxu0 0
    %3448 = vmatpush1.bf16.msra.mxu0 0
    %3449 = vmatprep.subr.bf16.mxu0 0
    %3450 = vmatpush1.bf16.msra.mxu0 0
    %3451 = vmatprep.subr.bf16.mxu0 0
    %3452 = vmatpush1.bf16.msra.mxu0 0
    %3453 = vmatprep.subr.bf16.mxu0 0
    %3454 = vmatpush1.bf16.msra.mxu0 0
    %3455 = vmatprep.subr.bf16.mxu0 0
    %3456 = vmatpush1.bf16.msra.mxu0 0
    %3457 = vmatprep.subr.bf16.mxu0 0
    %3458 = vmatpush1.bf16.msra.mxu0 0
    %3459 = vmatprep.subr.bf16.mxu0 0
    %3460 = vmatpush1.bf16.msra.mxu0 0
    %3461 = vmatprep.mubr.bf16.mxu0 0
    %3462 = vmatmul.mubr.bf16.gmra.mrb[0].mxu0 %v3424
    %v3463 = vpop.f32.mrb[0].mxu0
    %v3464 = vadd.f32 %v3418, %v3463
    %v3465 = vpop.f32.mrb[0].mxu0
    %v3466 = vpop.f32.mrb[0].mxu0
    %v3467 = vpop.f32.mrb[0].mxu0
    %3468 = vdwg.mxu0
    %v3469 = vpack.c.bf16 %v3364, %v3364
    %v3471 = vsel %vm1443, %v3469, 0
    %v3474 = vsel %vm1478, %v3206, 0
    %3476 = vmatprep.subr.bf16.mxu0 0
    %3477 = vmatpush1.bf16.msra.mxu0 %v3474
    %3478 = vmatprep.subr.bf16.mxu0 0
    %3479 = vmatpush1.bf16.msra.mxu0 0
    %3480 = vmatprep.subr.bf16.mxu0 0
    %3481 = vmatpush1.bf16.msra.mxu0 0
    %3482 = vmatprep.subr.bf16.mxu0 0
    %3483 = vmatpush1.bf16.msra.mxu0 0
    %3484 = vmatprep.subr.bf16.mxu0 0
    %3485 = vmatpush1.bf16.msra.mxu0 0
    %3486 = vmatprep.subr.bf16.mxu0 0
    %3487 = vmatpush1.bf16.msra.mxu0 0
    %3488 = vmatprep.subr.bf16.mxu0 0
    %3489 = vmatpush1.bf16.msra.mxu0 0
    %3490 = vmatprep.subr.bf16.mxu0 0
    %3491 = vmatpush1.bf16.msra.mxu0 0
    %3492 = vmatprep.subr.bf16.mxu0 0
    %3493 = vmatpush1.bf16.msra.mxu0 0
    %3494 = vmatprep.subr.bf16.mxu0 0
    %3495 = vmatpush1.bf16.msra.mxu0 0
    %3496 = vmatprep.subr.bf16.mxu0 0
    %3497 = vmatpush1.bf16.msra.mxu0 0
    %3498 = vmatprep.subr.bf16.mxu0 0
    %3499 = vmatpush1.bf16.msra.mxu0 0
    %3500 = vmatprep.subr.bf16.mxu0 0
    %3501 = vmatpush1.bf16.msra.mxu0 0
    %3502 = vmatprep.subr.bf16.mxu0 0
    %3503 = vmatpush1.bf16.msra.mxu0 0
    %3504 = vmatprep.subr.bf16.mxu0 0
    %3505 = vmatpush1.bf16.msra.mxu0 0
    %3506 = vmatprep.subr.bf16.mxu0 0
    %3507 = vmatpush1.bf16.msra.mxu0 0
    %3508 = vmatprep.mubr.bf16.mxu0 0
    %3509 = vmatmul.mubr.bf16.gmra.mrb[0].mxu0 %v3471
    %v3510 = vpop.f32.mrb[0].mxu0
    %v3511 = vadd.f32 0.0, %v3510
    %v3512 = vpop.f32.mrb[0].mxu0
    %v3513 = vpop.f32.mrb[0].mxu0
    %v3514 = vpop.f32.mrb[0].mxu0
    %3515 = vdwg.mxu0
    %v3516 = vadd.f32 %v3464, %v3511
    %v3517 = vrcp.pop %v3375
    %v3518 = vmul.f32 %v3516, %v3517
    %s3519 = scalar_lea.vmem %s3, 40
    %v3520 = vld [vmem:[%s3519] sm:$0xf]
    %v3521 = vld [vmem:[%s3519 + $0x4] sm:$0xf]
    %3523 = vrot.lane.b32.xlu0 %v3204, 112
    %v3524 = vpop.permute.xlu0 %3523
    %v3527 = vunpack.c.l.b16 %v3520
    %v3528 = vunpack.c.l.b16 %v3521
    %v3529 = vpack.c.b16 %v3528, %v3527
    %v3532 = vsel %vm1306, %v3524, 0
    %3534 = vmatprep.subr.bf16.mxu0 0
    %3535 = vmatpush1.bf16.msra.mxu0 %v3529
    %3536 = vmatprep.subr.bf16.mxu0 0
    %3537 = vmatpush1.bf16.msra.mxu0 0
    %3538 = vmatprep.subr.bf16.mxu0 0
    %3539 = vmatpush1.bf16.msra.mxu0 0
    %3540 = vmatprep.subr.bf16.mxu0 0
    %3541 = vmatpush1.bf16.msra.mxu0 0
    %3542 = vmatprep.subr.bf16.mxu0 0
    %3543 = vmatpush1.bf16.msra.mxu0 0
    %3544 = vmatprep.subr.bf16.mxu0 0
    %3545 = vmatpush1.bf16.msra.mxu0 0
    %3546 = vmatprep.subr.bf16.mxu0 0
    %3547 = vmatpush1.bf16.msra.mxu0 0
    %3548 = vmatprep.subr.bf16.mxu0 0
    %3549 = vmatpush1.bf16.msra.mxu0 0
    %3550 = vmatprep.subr.bf16.mxu0 0
    %3551 = vmatpush1.bf16.msra.mxu0 0
    %3552 = vmatprep.subr.bf16.mxu0 0
    %3553 = vmatpush1.bf16.msra.mxu0 0
    %3554 = vmatprep.subr.bf16.mxu0 0
    %3555 = vmatpush1.bf16.msra.mxu0 0
    %3556 = vmatprep.subr.bf16.mxu0 0
    %3557 = vmatpush1.bf16.msra.mxu0 0
    %3558 = vmatprep.subr.bf16.mxu0 0
    %3559 = vmatpush1.bf16.msra.mxu0 0
    %3560 = vmatprep.subr.bf16.mxu0 0
    %3561 = vmatpush1.bf16.msra.mxu0 0
    %3562 = vmatprep.subr.bf16.mxu0 0
    %3563 = vmatpush1.bf16.msra.mxu0 0
    %3564 = vmatprep.subr.bf16.mxu0 0
    %3565 = vmatpush1.bf16.msra.mxu0 0
    %3566 = vmatprep.mubr.bf16.mxu0 0
    %3567 = vmatmul.mubr.bf16.gmra.mrb[0].mxu0 %v3532
    %v3568 = vpop.f32.mrb[0].mxu0
    %v3569 = vadd.f32 0.0, %v3568
    %v3570 = vpop.f32.mrb[0].mxu0
    %v3571 = vpop.f32.mrb[0].mxu0
    %v3572 = vpop.f32.mrb[0].mxu0
    %3573 = vdwg.mxu0
    %3574 = vmatprep.subr.bf16.mxu0 0
    %3575 = vmatpush1.bf16.xpose.msra.mxu0 %v1677
    %3576 = vmatprep.subr.bf16.mxu0 0
    %3577 = vmatpush1.bf16.xpose.msra.mxu0 0
    %3578 = vmatprep.subr.bf16.mxu0 0
    %3579 = vmatpush1.bf16.xpose.msra.mxu0 0
    %3580 = vmatprep.subr.bf16.mxu0 0
    %3581 = vmatpush1.bf16.xpose.msra.mxu0 0
    %3582 = vmatprep.subr.bf16.mxu0 0
    %3583 = vmatpush1.bf16.xpose.msra.mxu0 0
    %3584 = vmatprep.subr.bf16.mxu0 0
    %3585 = vmatpush1.bf16.xpose.msra.mxu0 0
    %3586 = vmatprep.subr.bf16.mxu0 0
    %3587 = vmatpush1.bf16.xpose.msra.mxu0 0
    %3588 = vmatprep.subr.bf16.mxu0 0
    %3589 = vmatpush1.bf16.xpose.msra.mxu0 0
    %3590 = vmatprep.subr.bf16.mxu0 0
    %3591 = vmatpush1.bf16.xpose.msra.mxu0 0
    %3592 = vmatprep.subr.bf16.mxu0 0
    %3593 = vmatpush1.bf16.xpose.msra.mxu0 0
    %3594 = vmatprep.subr.bf16.mxu0 0
    %3595 = vmatpush1.bf16.xpose.msra.mxu0 0
    %3596 = vmatprep.subr.bf16.mxu0 0
    %3597 = vmatpush1.bf16.xpose.msra.mxu0 0
    %3598 = vmatprep.subr.bf16.mxu0 0
    %3599 = vmatpush1.bf16.xpose.msra.mxu0 0
    %3600 = vmatprep.subr.bf16.mxu0 0
    %3601 = vmatpush1.bf16.xpose.msra.mxu0 0
    %3602 = vmatprep.subr.bf16.mxu0 0
    %3603 = vmatpush1.bf16.xpose.msra.mxu0 0
    %3604 = vmatprep.subr.bf16.mxu0 0
    %3605 = vmatpush1.bf16.xpose.msra.mxu0 0
    %3606 = vmatprep.mubr.bf16.mxu0 0
    %3607 = vmatmul.mubr.bf16.gmra.mrb[0].mxu0 %v3532
    %v3608 = vpop.f32.mrb[0].mxu0
    %v3609 = vadd.f32 %v1045, %v3608
    %v3610 = vpop.f32.mrb[0].mxu0
    %v3611 = vpop.f32.mrb[0].mxu0
    %v3612 = vpop.f32.mrb[0].mxu0
    %3613 = vdwg.mxu0
    %3614 = vrot.lane.b32.xlu0 %v3205, 48
    %v3615 = vpop.permute.xlu0 %3614
    %v3617 = vsel %vm1306, %v3615, 0
    %3619 = vmatprep.subr.bf16.mxu0 0
    %3620 = vmatpush1.bf16.xpose.msra.mxu0 %v3617
    %3621 = vmatprep.subr.bf16.mxu0 0
    %3622 = vmatpush1.bf16.xpose.msra.mxu0 0
    %3623 = vmatprep.subr.bf16.mxu0 0
    %3624 = vmatpush1.bf16.xpose.msra.mxu0 0
    %3625 = vmatprep.subr.bf16.mxu0 0
    %3626 = vmatpush1.bf16.xpose.msra.mxu0 0
    %3627 = vmatprep.subr.bf16.mxu0 0
    %3628 = vmatpush1.bf16.xpose.msra.mxu0 0
    %3629 = vmatprep.subr.bf16.mxu0 0
    %3630 = vmatpush1.bf16.xpose.msra.mxu0 0
    %3631 = vmatprep.subr.bf16.mxu0 0
    %3632 = vmatpush1.bf16.xpose.msra.mxu0 0
    %3633 = vmatprep.subr.bf16.mxu0 0
    %3634 = vmatpush1.bf16.xpose.msra.mxu0 0
    %3635 = vmatprep.subr.bf16.mxu0 0
    %3636 = vmatpush1.bf16.xpose.msra.mxu0 0
    %3637 = vmatprep.subr.bf16.mxu0 0
    %3638 = vmatpush1.bf16.xpose.msra.mxu0 0
    %3639 = vmatprep.subr.bf16.mxu0 0
    %3640 = vmatpush1.bf16.xpose.msra.mxu0 0
    %3641 = vmatprep.subr.bf16.mxu0 0
    %3642 = vmatpush1.bf16.xpose.msra.mxu0 0
    %3643 = vmatprep.subr.bf16.mxu0 0
    %3644 = vmatpush1.bf16.xpose.msra.mxu0 0
    %3645 = vmatprep.subr.bf16.mxu0 0
    %3646 = vmatpush1.bf16.xpose.msra.mxu0 0
    %3647 = vmatprep.subr.bf16.mxu0 0
    %3648 = vmatpush1.bf16.xpose.msra.mxu0 0
    %3649 = vmatprep.subr.bf16.mxu0 0
    %3650 = vmatpush1.bf16.xpose.msra.mxu0 0
    %3651 = vmatprep.mubr.bf16.mxu0 0
    %3652 = vmatmul.mubr.bf16.gmra.mrb[0].mxu0 %v3532
    %v3653 = vpop.f32.mrb[0].mxu0
    %v3654 = vadd.f32 %v1046, %v3653
    %v3655 = vpop.f32.mrb[0].mxu0
    %v3656 = vpop.f32.mrb[0].mxu0
    %v3657 = vpop.f32.mrb[0].mxu0
    %3658 = vdwg.mxu0
    %v3659 = vsel %vm1439, %v3569, -inf
    %3660 = vmax.xlane.f32.xlu0 %v3659
    %v3661 = vpop.xlane.xlu0 %3660
    %v3662 = vsel %vm1443, %v3609, -inf
    %3663 = vmax.xlane.f32.xlu0 %v3662
    %v3664 = vpop.xlane.xlu0 %3663
    %v3665 = vsel %vm1443, %v3654, -inf
    %3666 = vmax.xlane.f32.xlu0 %v3665
    %v3667 = vpop.xlane.xlu0 %3666
    %v3668 = vmax.f32 %v3664, %v3667
    %v3669 = vmax.f32 %v3661, %v3668
    %v3670 = vsub.f32 %v3569, %v3669
    %v3671 = vmul.f32 %v3670, 1.442695
    %v3672 = vpow.pop %v3671
    %v3673 = vsub.f32 %v3609, %v3669
    %v3674 = vmul.f32 %v3673, 1.442695
    %v3675 = vpow.pop %v3674
    %v3676 = vsub.f32 %v3654, %v3669
    %v3677 = vmul.f32 %v3676, 1.442695
    %v3678 = vpow.pop %v3677
    %v3679 = vsel %vm1439, %v3672, 0.0
    %3680 = vadd.xlane.f32.xlu0 %v3679
    %v3681 = vpop.xlane.xlu0 %3680
    %v3682 = vsel %vm1443, %v3675, 0.0
    %3683 = vadd.xlane.f32.xlu0 %v3682
    %v3684 = vpop.xlane.xlu0 %3683
    %v3685 = vadd.f32 %v3681, %v3684
    %v3686 = vsel %vm1443, %v3678, 0.0
    %3687 = vadd.xlane.f32.xlu0 %v3686
    %v3688 = vpop.xlane.xlu0 %3687
    %v3689 = vadd.f32 %v3685, %v3688
    %v3690 = vpack.c.bf16 %v3672, %v3672
    %s3691 = scalar_lea.vmem %s4, 10
    %v3692 = vld [vmem:[%s3691] sm:$0x3]
    %v3693 = vpack.c.bf16 %v3675, %v3675
    %v3695 = vsel %vm1443, %v3693, 0
    %3697 = vmatprep.subr.bf16.mxu0 0
    %3698 = vmatpush1.bf16.msra.mxu0 %v1802
    %3699 = vmatprep.subr.bf16.mxu0 0
    %3700 = vmatpush1.bf16.msra.mxu0 0
    %3701 = vmatprep.subr.bf16.mxu0 0
    %3702 = vmatpush1.bf16.msra.mxu0 0
    %3703 = vmatprep.subr.bf16.mxu0 0
    %3704 = vmatpush1.bf16.msra.mxu0 0
    %3705 = vmatprep.subr.bf16.mxu0 0
    %3706 = vmatpush1.bf16.msra.mxu0 0
    %3707 = vmatprep.subr.bf16.mxu0 0
    %3708 = vmatpush1.bf16.msra.mxu0 0
    %3709 = vmatprep.subr.bf16.mxu0 0
    %3710 = vmatpush1.bf16.msra.mxu0 0
    %3711 = vmatprep.subr.bf16.mxu0 0
    %3712 = vmatpush1.bf16.msra.mxu0 0
    %3713 = vmatprep.subr.bf16.mxu0 0
    %3714 = vmatpush1.bf16.msra.mxu0 0
    %3715 = vmatprep.subr.bf16.mxu0 0
    %3716 = vmatpush1.bf16.msra.mxu0 0
    %3717 = vmatprep.subr.bf16.mxu0 0
    %3718 = vmatpush1.bf16.msra.mxu0 0
    %3719 = vmatprep.subr.bf16.mxu0 0
    %3720 = vmatpush1.bf16.msra.mxu0 0
    %3721 = vmatprep.subr.bf16.mxu0 0
    %3722 = vmatpush1.bf16.msra.mxu0 0
    %3723 = vmatprep.subr.bf16.mxu0 0
    %3724 = vmatpush1.bf16.msra.mxu0 0
    %3725 = vmatprep.subr.bf16.mxu0 0
    %3726 = vmatpush1.bf16.msra.mxu0 0
    %3727 = vmatprep.subr.bf16.mxu0 0
    %3728 = vmatpush1.bf16.msra.mxu0 0
    %3729 = vmatprep.mubr.bf16.mxu0 0
    %3730 = vmatmul.mubr.bf16.gmra.mrb[0].mxu0 %v3695
    %v3731 = vpop.f32.mrb[0].mxu0
    %v3732 = vadd.f32 0.0, %v3731
    %v3733 = vpop.f32.mrb[0].mxu0
    %v3734 = vpop.f32.mrb[0].mxu0
    %v3735 = vpop.f32.mrb[0].mxu0
    %3736 = vdwg.mxu0
    %v3738 = vsel %vm1439, %v3690, 0
    %v3741 = vsel %vm1524, %v3692, 0
    %3743 = vmatprep.subr.bf16.mxu0 0
    %3744 = vmatpush1.bf16.msra.mxu0 %v3741
    %3745 = vmatprep.subr.bf16.mxu0 0
    %3746 = vmatpush1.bf16.msra.mxu0 0
    %3747 = vmatprep.subr.bf16.mxu0 0
    %3748 = vmatpush1.bf16.msra.mxu0 0
    %3749 = vmatprep.subr.bf16.mxu0 0
    %3750 = vmatpush1.bf16.msra.mxu0 0
    %3751 = vmatprep.subr.bf16.mxu0 0
    %3752 = vmatpush1.bf16.msra.mxu0 0
    %3753 = vmatprep.subr.bf16.mxu0 0
    %3754 = vmatpush1.bf16.msra.mxu0 0
    %3755 = vmatprep.subr.bf16.mxu0 0
    %3756 = vmatpush1.bf16.msra.mxu0 0
    %3757 = vmatprep.subr.bf16.mxu0 0
    %3758 = vmatpush1.bf16.msra.mxu0 0
    %3759 = vmatprep.subr.bf16.mxu0 0
    %3760 = vmatpush1.bf16.msra.mxu0 0
    %3761 = vmatprep.subr.bf16.mxu0 0
    %3762 = vmatpush1.bf16.msra.mxu0 0
    %3763 = vmatprep.subr.bf16.mxu0 0
    %3764 = vmatpush1.bf16.msra.mxu0 0
    %3765 = vmatprep.subr.bf16.mxu0 0
    %3766 = vmatpush1.bf16.msra.mxu0 0
    %3767 = vmatprep.subr.bf16.mxu0 0
    %3768 = vmatpush1.bf16.msra.mxu0 0
    %3769 = vmatprep.subr.bf16.mxu0 0
    %3770 = vmatpush1.bf16.msra.mxu0 0
    %3771 = vmatprep.subr.bf16.mxu0 0
    %3772 = vmatpush1.bf16.msra.mxu0 0
    %3773 = vmatprep.subr.bf16.mxu0 0
    %3774 = vmatpush1.bf16.msra.mxu0 0
    %3775 = vmatprep.mubr.bf16.mxu0 0
    %3776 = vmatmul.mubr.bf16.gmra.mrb[0].mxu0 %v3738
    %v3777 = vpop.f32.mrb[0].mxu0
    %v3778 = vadd.f32 %v3732, %v3777
    %v3779 = vpop.f32.mrb[0].mxu0
    %v3780 = vpop.f32.mrb[0].mxu0
    %v3781 = vpop.f32.mrb[0].mxu0
    %3782 = vdwg.mxu0
    %v3783 = vpack.c.bf16 %v3678, %v3678
    %3785 = vrot.lane.b32.xlu0 %v3206, 112
    %v3786 = vpop.permute.xlu0 %3785
    %v3788 = vsel %vm1443, %v3783, 0
    %v3791 = vsel %vm1478, %v3786, 0
    %3793 = vmatprep.subr.bf16.mxu0 0
    %3794 = vmatpush1.bf16.msra.mxu0 %v3791
    %3795 = vmatprep.subr.bf16.mxu0 0
    %3796 = vmatpush1.bf16.msra.mxu0 0
    %3797 = vmatprep.subr.bf16.mxu0 0
    %3798 = vmatpush1.bf16.msra.mxu0 0
    %3799 = vmatprep.subr.bf16.mxu0 0
    %3800 = vmatpush1.bf16.msra.mxu0 0
    %3801 = vmatprep.subr.bf16.mxu0 0
    %3802 = vmatpush1.bf16.msra.mxu0 0
    %3803 = vmatprep.subr.bf16.mxu0 0
    %3804 = vmatpush1.bf16.msra.mxu0 0
    %3805 = vmatprep.subr.bf16.mxu0 0
    %3806 = vmatpush1.bf16.msra.mxu0 0
    %3807 = vmatprep.subr.bf16.mxu0 0
    %3808 = vmatpush1.bf16.msra.mxu0 0
    %3809 = vmatprep.subr.bf16.mxu0 0
    %3810 = vmatpush1.bf16.msra.mxu0 0
    %3811 = vmatprep.subr.bf16.mxu0 0
    %3812 = vmatpush1.bf16.msra.mxu0 0
    %3813 = vmatprep.subr.bf16.mxu0 0
    %3814 = vmatpush1.bf16.msra.mxu0 0
    %3815 = vmatprep.subr.bf16.mxu0 0
    %3816 = vmatpush1.bf16.msra.mxu0 0
    %3817 = vmatprep.subr.bf16.mxu0 0
    %3818 = vmatpush1.bf16.msra.mxu0 0
    %3819 = vmatprep.subr.bf16.mxu0 0
    %3820 = vmatpush1.bf16.msra.mxu0 0
    %3821 = vmatprep.subr.bf16.mxu0 0
    %3822 = vmatpush1.bf16.msra.mxu0 0
    %3823 = vmatprep.subr.bf16.mxu0 0
    %3824 = vmatpush1.bf16.msra.mxu0 0
    %3825 = vmatprep.mubr.bf16.mxu0 0
    %3826 = vmatmul.mubr.bf16.gmra.mrb[0].mxu0 %v3788
    %v3827 = vpop.f32.mrb[0].mxu0
    %v3828 = vadd.f32 0.0, %v3827
    %v3829 = vpop.f32.mrb[0].mxu0
    %v3830 = vpop.f32.mrb[0].mxu0
    %v3831 = vpop.f32.mrb[0].mxu0
    %3832 = vdwg.mxu0
    %v3833 = vadd.f32 %v3778, %v3828
    %v3834 = vrcp.pop %v3689
    %v3835 = vmul.f32 %v3833, %v3834
    %s3836 = scalar_lea.vmem %s3, 48
    %v3837 = vld [vmem:[%s3836] sm:$0xf]
    %v3838 = vld [vmem:[%s3836 + $0x4] sm:$0xf]
    %3839 = vrot.lane.b32.xlu0 %v3204, 96
    %v3840 = vpop.permute.xlu0 %3839
    %v3843 = vunpack.c.l.b16 %v3837
    %v3844 = vunpack.c.l.b16 %v3838
    %v3845 = vpack.c.b16 %v3844, %v3843
    %v3848 = vsel %vm1306, %v3840, 0
    %3850 = vmatprep.subr.bf16.mxu0 0
    %3851 = vmatpush1.bf16.msra.mxu0 %v3845
    %3852 = vmatprep.subr.bf16.mxu0 0
    %3853 = vmatpush1.bf16.msra.mxu0 0
    %3854 = vmatprep.subr.bf16.mxu0 0
    %3855 = vmatpush1.bf16.msra.mxu0 0
    %3856 = vmatprep.subr.bf16.mxu0 0
    %3857 = vmatpush1.bf16.msra.mxu0 0
    %3858 = vmatprep.subr.bf16.mxu0 0
    %3859 = vmatpush1.bf16.msra.mxu0 0
    %3860 = vmatprep.subr.bf16.mxu0 0
    %3861 = vmatpush1.bf16.msra.mxu0 0
    %3862 = vmatprep.subr.bf16.mxu0 0
    %3863 = vmatpush1.bf16.msra.mxu0 0
    %3864 = vmatprep.subr.bf16.mxu0 0
    %3865 = vmatpush1.bf16.msra.mxu0 0
    %3866 = vmatprep.subr.bf16.mxu0 0
    %3867 = vmatpush1.bf16.msra.mxu0 0
    %3868 = vmatprep.subr.bf16.mxu0 0
    %3869 = vmatpush1.bf16.msra.mxu0 0
    %3870 = vmatprep.subr.bf16.mxu0 0
    %3871 = vmatpush1.bf16.msra.mxu0 0
    %3872 = vmatprep.subr.bf16.mxu0 0
    %3873 = vmatpush1.bf16.msra.mxu0 0
    %3874 = vmatprep.subr.bf16.mxu0 0
    %3875 = vmatpush1.bf16.msra.mxu0 0
    %3876 = vmatprep.subr.bf16.mxu0 0
    %3877 = vmatpush1.bf16.msra.mxu0 0
    %3878 = vmatprep.subr.bf16.mxu0 0
    %3879 = vmatpush1.bf16.msra.mxu0 0
    %3880 = vmatprep.subr.bf16.mxu0 0
    %3881 = vmatpush1.bf16.msra.mxu0 0
    %3882 = vmatprep.mubr.bf16.mxu0 0
    %3883 = vmatmul.mubr.bf16.gmra.mrb[0].mxu0 %v3848
    %v3884 = vpop.f32.mrb[0].mxu0
    %v3885 = vadd.f32 0.0, %v3884
    %v3886 = vpop.f32.mrb[0].mxu0
    %v3887 = vpop.f32.mrb[0].mxu0
    %v3888 = vpop.f32.mrb[0].mxu0
    %3889 = vdwg.mxu0
    %3890 = vmatprep.subr.bf16.mxu0 0
    %3891 = vmatpush1.bf16.xpose.msra.mxu0 %v2000
    %3892 = vmatprep.subr.bf16.mxu0 0
    %3893 = vmatpush1.bf16.xpose.msra.mxu0 0
    %3894 = vmatprep.subr.bf16.mxu0 0
    %3895 = vmatpush1.bf16.xpose.msra.mxu0 0
    %3896 = vmatprep.subr.bf16.mxu0 0
    %3897 = vmatpush1.bf16.xpose.msra.mxu0 0
    %3898 = vmatprep.subr.bf16.mxu0 0
    %3899 = vmatpush1.bf16.xpose.msra.mxu0 0
    %3900 = vmatprep.subr.bf16.mxu0 0
    %3901 = vmatpush1.bf16.xpose.msra.mxu0 0
    %3902 = vmatprep.subr.bf16.mxu0 0
    %3903 = vmatpush1.bf16.xpose.msra.mxu0 0
    %3904 = vmatprep.subr.bf16.mxu0 0
    %3905 = vmatpush1.bf16.xpose.msra.mxu0 0
    %3906 = vmatprep.subr.bf16.mxu0 0
    %3907 = vmatpush1.bf16.xpose.msra.mxu0 0
    %3908 = vmatprep.subr.bf16.mxu0 0
    %3909 = vmatpush1.bf16.xpose.msra.mxu0 0
    %3910 = vmatprep.subr.bf16.mxu0 0
    %3911 = vmatpush1.bf16.xpose.msra.mxu0 0
    %3912 = vmatprep.subr.bf16.mxu0 0
    %3913 = vmatpush1.bf16.xpose.msra.mxu0 0
    %3914 = vmatprep.subr.bf16.mxu0 0
    %3915 = vmatpush1.bf16.xpose.msra.mxu0 0
    %3916 = vmatprep.subr.bf16.mxu0 0
    %3917 = vmatpush1.bf16.xpose.msra.mxu0 0
    %3918 = vmatprep.subr.bf16.mxu0 0
    %3919 = vmatpush1.bf16.xpose.msra.mxu0 0
    %3920 = vmatprep.subr.bf16.mxu0 0
    %3921 = vmatpush1.bf16.xpose.msra.mxu0 0
    %3922 = vmatprep.mubr.bf16.mxu0 0
    %3923 = vmatmul.mubr.bf16.gmra.mrb[0].mxu0 %v3848
    %v3924 = vpop.f32.mrb[0].mxu0
    %v3925 = vadd.f32 %v1045, %v3924
    %v3926 = vpop.f32.mrb[0].mxu0
    %v3927 = vpop.f32.mrb[0].mxu0
    %v3928 = vpop.f32.mrb[0].mxu0
    %3929 = vdwg.mxu0
    %3930 = vrot.lane.b32.xlu0 %v3205, 32
    %v3931 = vpop.permute.xlu0 %3930
    %v3933 = vsel %vm1306, %v3931, 0
    %3935 = vmatprep.subr.bf16.mxu0 0
    %3936 = vmatpush1.bf16.xpose.msra.mxu0 %v3933
    %3937 = vmatprep.subr.bf16.mxu0 0
    %3938 = vmatpush1.bf16.xpose.msra.mxu0 0
    %3939 = vmatprep.subr.bf16.mxu0 0
    %3940 = vmatpush1.bf16.xpose.msra.mxu0 0
    %3941 = vmatprep.subr.bf16.mxu0 0
    %3942 = vmatpush1.bf16.xpose.msra.mxu0 0
    %3943 = vmatprep.subr.bf16.mxu0 0
    %3944 = vmatpush1.bf16.xpose.msra.mxu0 0
    %3945 = vmatprep.subr.bf16.mxu0 0
    %3946 = vmatpush1.bf16.xpose.msra.mxu0 0
    %3947 = vmatprep.subr.bf16.mxu0 0
    %3948 = vmatpush1.bf16.xpose.msra.mxu0 0
    %3949 = vmatprep.subr.bf16.mxu0 0
    %3950 = vmatpush1.bf16.xpose.msra.mxu0 0
    %3951 = vmatprep.subr.bf16.mxu0 0
    %3952 = vmatpush1.bf16.xpose.msra.mxu0 0
    %3953 = vmatprep.subr.bf16.mxu0 0
    %3954 = vmatpush1.bf16.xpose.msra.mxu0 0
    %3955 = vmatprep.subr.bf16.mxu0 0
    %3956 = vmatpush1.bf16.xpose.msra.mxu0 0
    %3957 = vmatprep.subr.bf16.mxu0 0
    %3958 = vmatpush1.bf16.xpose.msra.mxu0 0
    %3959 = vmatprep.subr.bf16.mxu0 0
    %3960 = vmatpush1.bf16.xpose.msra.mxu0 0
    %3961 = vmatprep.subr.bf16.mxu0 0
    %3962 = vmatpush1.bf16.xpose.msra.mxu0 0
    %3963 = vmatprep.subr.bf16.mxu0 0
    %3964 = vmatpush1.bf16.xpose.msra.mxu0 0
    %3965 = vmatprep.subr.bf16.mxu0 0
    %3966 = vmatpush1.bf16.xpose.msra.mxu0 0
    %3967 = vmatprep.mubr.bf16.mxu0 0
    %3968 = vmatmul.mubr.bf16.gmra.mrb[0].mxu0 %v3848
    %v3969 = vpop.f32.mrb[0].mxu0
    %v3970 = vadd.f32 %v1046, %v3969
    %v3971 = vpop.f32.mrb[0].mxu0
    %v3972 = vpop.f32.mrb[0].mxu0
    %v3973 = vpop.f32.mrb[0].mxu0
    %3974 = vdwg.mxu0
    %v3975 = vsel %vm1439, %v3885, -inf
    %3976 = vmax.xlane.f32.xlu0 %v3975
    %v3977 = vpop.xlane.xlu0 %3976
    %v3978 = vsel %vm1443, %v3925, -inf
    %3979 = vmax.xlane.f32.xlu0 %v3978
    %v3980 = vpop.xlane.xlu0 %3979
    %v3981 = vsel %vm1443, %v3970, -inf
    %3982 = vmax.xlane.f32.xlu0 %v3981
    %v3983 = vpop.xlane.xlu0 %3982
    %v3984 = vmax.f32 %v3980, %v3983
    %v3985 = vmax.f32 %v3977, %v3984
    %v3986 = vsub.f32 %v3885, %v3985
    %v3987 = vmul.f32 %v3986, 1.442695
    %v3988 = vpow.pop %v3987
    %v3989 = vsub.f32 %v3925, %v3985
    %v3990 = vmul.f32 %v3989, 1.442695
    %v3991 = vpow.pop %v3990
    %v3992 = vsub.f32 %v3970, %v3985
    %v3993 = vmul.f32 %v3992, 1.442695
    %v3994 = vpow.pop %v3993
    %v3995 = vsel %vm1439, %v3988, 0.0
    %3996 = vadd.xlane.f32.xlu0 %v3995
    %v3997 = vpop.xlane.xlu0 %3996
    %v3998 = vsel %vm1443, %v3991, 0.0
    %3999 = vadd.xlane.f32.xlu0 %v3998
    %v4000 = vpop.xlane.xlu0 %3999
    %v4001 = vadd.f32 %v3997, %v4000
    %v4002 = vsel %vm1443, %v3994, 0.0
    %4003 = vadd.xlane.f32.xlu0 %v4002
    %v4004 = vpop.xlane.xlu0 %4003
    %v4005 = vadd.f32 %v4001, %v4004
    %v4006 = vpack.c.bf16 %v3988, %v3988
    %s4007 = scalar_lea.vmem %s4, 12
    %v4008 = vld [vmem:[%s4007] sm:$0x3]
    %v4009 = vpack.c.bf16 %v3991, %v3991
    %v4011 = vsel %vm1443, %v4009, 0
    %4013 = vmatprep.subr.bf16.mxu0 0
    %4014 = vmatpush1.bf16.msra.mxu0 %v2125
    %4015 = vmatprep.subr.bf16.mxu0 0
    %4016 = vmatpush1.bf16.msra.mxu0 0
    %4017 = vmatprep.subr.bf16.mxu0 0
    %4018 = vmatpush1.bf16.msra.mxu0 0
    %4019 = vmatprep.subr.bf16.mxu0 0
    %4020 = vmatpush1.bf16.msra.mxu0 0
    %4021 = vmatprep.subr.bf16.mxu0 0
    %4022 = vmatpush1.bf16.msra.mxu0 0
    %4023 = vmatprep.subr.bf16.mxu0 0
    %4024 = vmatpush1.bf16.msra.mxu0 0
    %4025 = vmatprep.subr.bf16.mxu0 0
    %4026 = vmatpush1.bf16.msra.mxu0 0
    %4027 = vmatprep.subr.bf16.mxu0 0
    %4028 = vmatpush1.bf16.msra.mxu0 0
    %4029 = vmatprep.subr.bf16.mxu0 0
    %4030 = vmatpush1.bf16.msra.mxu0 0
    %4031 = vmatprep.subr.bf16.mxu0 0
    %4032 = vmatpush1.bf16.msra.mxu0 0
    %4033 = vmatprep.subr.bf16.mxu0 0
    %4034 = vmatpush1.bf16.msra.mxu0 0
    %4035 = vmatprep.subr.bf16.mxu0 0
    %4036 = vmatpush1.bf16.msra.mxu0 0
    %4037 = vmatprep.subr.bf16.mxu0 0
    %4038 = vmatpush1.bf16.msra.mxu0 0
    %4039 = vmatprep.subr.bf16.mxu0 0
    %4040 = vmatpush1.bf16.msra.mxu0 0
    %4041 = vmatprep.subr.bf16.mxu0 0
    %4042 = vmatpush1.bf16.msra.mxu0 0
    %4043 = vmatprep.subr.bf16.mxu0 0
    %4044 = vmatpush1.bf16.msra.mxu0 0
    %4045 = vmatprep.mubr.bf16.mxu0 0
    %4046 = vmatmul.mubr.bf16.gmra.mrb[0].mxu0 %v4011
    %v4047 = vpop.f32.mrb[0].mxu0
    %v4048 = vadd.f32 0.0, %v4047
    %v4049 = vpop.f32.mrb[0].mxu0
    %v4050 = vpop.f32.mrb[0].mxu0
    %v4051 = vpop.f32.mrb[0].mxu0
    %4052 = vdwg.mxu0
    %v4054 = vsel %vm1439, %v4006, 0
    %v4057 = vsel %vm1524, %v4008, 0
    %4059 = vmatprep.subr.bf16.mxu0 0
    %4060 = vmatpush1.bf16.msra.mxu0 %v4057
    %4061 = vmatprep.subr.bf16.mxu0 0
    %4062 = vmatpush1.bf16.msra.mxu0 0
    %4063 = vmatprep.subr.bf16.mxu0 0
    %4064 = vmatpush1.bf16.msra.mxu0 0
    %4065 = vmatprep.subr.bf16.mxu0 0
    %4066 = vmatpush1.bf16.msra.mxu0 0
    %4067 = vmatprep.subr.bf16.mxu0 0
    %4068 = vmatpush1.bf16.msra.mxu0 0
    %4069 = vmatprep.subr.bf16.mxu0 0
    %4070 = vmatpush1.bf16.msra.mxu0 0
    %4071 = vmatprep.subr.bf16.mxu0 0
    %4072 = vmatpush1.bf16.msra.mxu0 0
    %4073 = vmatprep.subr.bf16.mxu0 0
    %4074 = vmatpush1.bf16.msra.mxu0 0
    %4075 = vmatprep.subr.bf16.mxu0 0
    %4076 = vmatpush1.bf16.msra.mxu0 0
    %4077 = vmatprep.subr.bf16.mxu0 0
    %4078 = vmatpush1.bf16.msra.mxu0 0
    %4079 = vmatprep.subr.bf16.mxu0 0
    %4080 = vmatpush1.bf16.msra.mxu0 0
    %4081 = vmatprep.subr.bf16.mxu0 0
    %4082 = vmatpush1.bf16.msra.mxu0 0
    %4083 = vmatprep.subr.bf16.mxu0 0
    %4084 = vmatpush1.bf16.msra.mxu0 0
    %4085 = vmatprep.subr.bf16.mxu0 0
    %4086 = vmatpush1.bf16.msra.mxu0 0
    %4087 = vmatprep.subr.bf16.mxu0 0
    %4088 = vmatpush1.bf16.msra.mxu0 0
    %4089 = vmatprep.subr.bf16.mxu0 0
    %4090 = vmatpush1.bf16.msra.mxu0 0
    %4091 = vmatprep.mubr.bf16.mxu0 0
    %4092 = vmatmul.mubr.bf16.gmra.mrb[0].mxu0 %v4054
    %v4093 = vpop.f32.mrb[0].mxu0
    %v4094 = vadd.f32 %v4048, %v4093
    %v4095 = vpop.f32.mrb[0].mxu0
    %v4096 = vpop.f32.mrb[0].mxu0
    %v4097 = vpop.f32.mrb[0].mxu0
    %4098 = vdwg.mxu0
    %v4099 = vpack.c.bf16 %v3994, %v3994
    %4100 = vrot.lane.b32.xlu0 %v3206, 96
    %v4101 = vpop.permute.xlu0 %4100
    %v4103 = vsel %vm1443, %v4099, 0
    %v4106 = vsel %vm1478, %v4101, 0
    %4108 = vmatprep.subr.bf16.mxu0 0
    %4109 = vmatpush1.bf16.msra.mxu0 %v4106
    %4110 = vmatprep.subr.bf16.mxu0 0
    %4111 = vmatpush1.bf16.msra.mxu0 0
    %4112 = vmatprep.subr.bf16.mxu0 0
    %4113 = vmatpush1.bf16.msra.mxu0 0
    %4114 = vmatprep.subr.bf16.mxu0 0
    %4115 = vmatpush1.bf16.msra.mxu0 0
    %4116 = vmatprep.subr.bf16.mxu0 0
    %4117 = vmatpush1.bf16.msra.mxu0 0
    %4118 = vmatprep.subr.bf16.mxu0 0
    %4119 = vmatpush1.bf16.msra.mxu0 0
    %4120 = vmatprep.subr.bf16.mxu0 0
    %4121 = vmatpush1.bf16.msra.mxu0 0
    %4122 = vmatprep.subr.bf16.mxu0 0
    %4123 = vmatpush1.bf16.msra.mxu0 0
    %4124 = vmatprep.subr.bf16.mxu0 0
    %4125 = vmatpush1.bf16.msra.mxu0 0
    %4126 = vmatprep.subr.bf16.mxu0 0
    %4127 = vmatpush1.bf16.msra.mxu0 0
    %4128 = vmatprep.subr.bf16.mxu0 0
    %4129 = vmatpush1.bf16.msra.mxu0 0
    %4130 = vmatprep.subr.bf16.mxu0 0
    %4131 = vmatpush1.bf16.msra.mxu0 0
    %4132 = vmatprep.subr.bf16.mxu0 0
    %4133 = vmatpush1.bf16.msra.mxu0 0
    %4134 = vmatprep.subr.bf16.mxu0 0
    %4135 = vmatpush1.bf16.msra.mxu0 0
    %4136 = vmatprep.subr.bf16.mxu0 0
    %4137 = vmatpush1.bf16.msra.mxu0 0
    %4138 = vmatprep.subr.bf16.mxu0 0
    %4139 = vmatpush1.bf16.msra.mxu0 0
    %4140 = vmatprep.mubr.bf16.mxu0 0
    %4141 = vmatmul.mubr.bf16.gmra.mrb[0].mxu0 %v4103
    %v4142 = vpop.f32.mrb[0].mxu0
    %v4143 = vadd.f32 0.0, %v4142
    %v4144 = vpop.f32.mrb[0].mxu0
    %v4145 = vpop.f32.mrb[0].mxu0
    %v4146 = vpop.f32.mrb[0].mxu0
    %4147 = vdwg.mxu0
    %v4148 = vadd.f32 %v4094, %v4143
    %v4149 = vrcp.pop %v4005
    %v4150 = vmul.f32 %v4148, %v4149
    %s4151 = scalar_lea.vmem %s3, 56
    %v4152 = vld [vmem:[%s4151] sm:$0xf]
    %v4153 = vld [vmem:[%s4151 + $0x4] sm:$0xf]
    %4154 = vrot.lane.b32.xlu0 %v3204, 80
    %v4155 = vpop.permute.xlu0 %4154
    %v4158 = vunpack.c.l.b16 %v4152
    %v4159 = vunpack.c.l.b16 %v4153
    %v4160 = vpack.c.b16 %v4159, %v4158
    %v4163 = vsel %vm1306, %v4155, 0
    %4165 = vmatprep.subr.bf16.mxu0 0
    %4166 = vmatpush1.bf16.msra.mxu0 %v4160
    %4167 = vmatprep.subr.bf16.mxu0 0
    %4168 = vmatpush1.bf16.msra.mxu0 0
    %4169 = vmatprep.subr.bf16.mxu0 0
    %4170 = vmatpush1.bf16.msra.mxu0 0
    %4171 = vmatprep.subr.bf16.mxu0 0
    %4172 = vmatpush1.bf16.msra.mxu0 0
    %4173 = vmatprep.subr.bf16.mxu0 0
    %4174 = vmatpush1.bf16.msra.mxu0 0
    %4175 = vmatprep.subr.bf16.mxu0 0
    %4176 = vmatpush1.bf16.msra.mxu0 0
    %4177 = vmatprep.subr.bf16.mxu0 0
    %4178 = vmatpush1.bf16.msra.mxu0 0
    %4179 = vmatprep.subr.bf16.mxu0 0
    %4180 = vmatpush1.bf16.msra.mxu0 0
    %4181 = vmatprep.subr.bf16.mxu0 0
    %4182 = vmatpush1.bf16.msra.mxu0 0
    %4183 = vmatprep.subr.bf16.mxu0 0
    %4184 = vmatpush1.bf16.msra.mxu0 0
    %4185 = vmatprep.subr.bf16.mxu0 0
    %4186 = vmatpush1.bf16.msra.mxu0 0
    %4187 = vmatprep.subr.bf16.mxu0 0
    %4188 = vmatpush1.bf16.msra.mxu0 0
    %4189 = vmatprep.subr.bf16.mxu0 0
    %4190 = vmatpush1.bf16.msra.mxu0 0
    %4191 = vmatprep.subr.bf16.mxu0 0
    %4192 = vmatpush1.bf16.msra.mxu0 0
    %4193 = vmatprep.subr.bf16.mxu0 0
    %4194 = vmatpush1.bf16.msra.mxu0 0
    %4195 = vmatprep.subr.bf16.mxu0 0
    %4196 = vmatpush1.bf16.msra.mxu0 0
    %4197 = vmatprep.mubr.bf16.mxu0 0
    %4198 = vmatmul.mubr.bf16.gmra.mrb[0].mxu0 %v4163
    %v4199 = vpop.f32.mrb[0].mxu0
    %v4200 = vadd.f32 0.0, %v4199
    %v4201 = vpop.f32.mrb[0].mxu0
    %v4202 = vpop.f32.mrb[0].mxu0
    %v4203 = vpop.f32.mrb[0].mxu0
    %4204 = vdwg.mxu0
    %4205 = vmatprep.subr.bf16.mxu0 0
    %4206 = vmatpush1.bf16.xpose.msra.mxu0 %v2322
    %4207 = vmatprep.subr.bf16.mxu0 0
    %4208 = vmatpush1.bf16.xpose.msra.mxu0 0
    %4209 = vmatprep.subr.bf16.mxu0 0
    %4210 = vmatpush1.bf16.xpose.msra.mxu0 0
    %4211 = vmatprep.subr.bf16.mxu0 0
    %4212 = vmatpush1.bf16.xpose.msra.mxu0 0
    %4213 = vmatprep.subr.bf16.mxu0 0
    %4214 = vmatpush1.bf16.xpose.msra.mxu0 0
    %4215 = vmatprep.subr.bf16.mxu0 0
    %4216 = vmatpush1.bf16.xpose.msra.mxu0 0
    %4217 = vmatprep.subr.bf16.mxu0 0
    %4218 = vmatpush1.bf16.xpose.msra.mxu0 0
    %4219 = vmatprep.subr.bf16.mxu0 0
    %4220 = vmatpush1.bf16.xpose.msra.mxu0 0
    %4221 = vmatprep.subr.bf16.mxu0 0
    %4222 = vmatpush1.bf16.xpose.msra.mxu0 0
    %4223 = vmatprep.subr.bf16.mxu0 0
    %4224 = vmatpush1.bf16.xpose.msra.mxu0 0
    %4225 = vmatprep.subr.bf16.mxu0 0
    %4226 = vmatpush1.bf16.xpose.msra.mxu0 0
    %4227 = vmatprep.subr.bf16.mxu0 0
    %4228 = vmatpush1.bf16.xpose.msra.mxu0 0
    %4229 = vmatprep.subr.bf16.mxu0 0
    %4230 = vmatpush1.bf16.xpose.msra.mxu0 0
    %4231 = vmatprep.subr.bf16.mxu0 0
    %4232 = vmatpush1.bf16.xpose.msra.mxu0 0
    %4233 = vmatprep.subr.bf16.mxu0 0
    %4234 = vmatpush1.bf16.xpose.msra.mxu0 0
    %4235 = vmatprep.subr.bf16.mxu0 0
    %4236 = vmatpush1.bf16.xpose.msra.mxu0 0
    %4237 = vmatprep.mubr.bf16.mxu0 0
    %4238 = vmatmul.mubr.bf16.gmra.mrb[0].mxu0 %v4163
    %v4239 = vpop.f32.mrb[0].mxu0
    %v4240 = vadd.f32 %v1045, %v4239
    %v4241 = vpop.f32.mrb[0].mxu0
    %v4242 = vpop.f32.mrb[0].mxu0
    %v4243 = vpop.f32.mrb[0].mxu0
    %4244 = vdwg.mxu0
    %4245 = vrot.lane.b32.xlu0 %v3205, 16
    %v4246 = vpop.permute.xlu0 %4245
    %v4248 = vsel %vm1306, %v4246, 0
    %4250 = vmatprep.subr.bf16.mxu0 0
    %4251 = vmatpush1.bf16.xpose.msra.mxu0 %v4248
    %4252 = vmatprep.subr.bf16.mxu0 0
    %4253 = vmatpush1.bf16.xpose.msra.mxu0 0
    %4254 = vmatprep.subr.bf16.mxu0 0
    %4255 = vmatpush1.bf16.xpose.msra.mxu0 0
    %4256 = vmatprep.subr.bf16.mxu0 0
    %4257 = vmatpush1.bf16.xpose.msra.mxu0 0
    %4258 = vmatprep.subr.bf16.mxu0 0
    %4259 = vmatpush1.bf16.xpose.msra.mxu0 0
    %4260 = vmatprep.subr.bf16.mxu0 0
    %4261 = vmatpush1.bf16.xpose.msra.mxu0 0
    %4262 = vmatprep.subr.bf16.mxu0 0
    %4263 = vmatpush1.bf16.xpose.msra.mxu0 0
    %4264 = vmatprep.subr.bf16.mxu0 0
    %4265 = vmatpush1.bf16.xpose.msra.mxu0 0
    %4266 = vmatprep.subr.bf16.mxu0 0
    %4267 = vmatpush1.bf16.xpose.msra.mxu0 0
    %4268 = vmatprep.subr.bf16.mxu0 0
    %4269 = vmatpush1.bf16.xpose.msra.mxu0 0
    %4270 = vmatprep.subr.bf16.mxu0 0
    %4271 = vmatpush1.bf16.xpose.msra.mxu0 0
    %4272 = vmatprep.subr.bf16.mxu0 0
    %4273 = vmatpush1.bf16.xpose.msra.mxu0 0
    %4274 = vmatprep.subr.bf16.mxu0 0
    %4275 = vmatpush1.bf16.xpose.msra.mxu0 0
    %4276 = vmatprep.subr.bf16.mxu0 0
    %4277 = vmatpush1.bf16.xpose.msra.mxu0 0
    %4278 = vmatprep.subr.bf16.mxu0 0
    %4279 = vmatpush1.bf16.xpose.msra.mxu0 0
    %4280 = vmatprep.subr.bf16.mxu0 0
    %4281 = vmatpush1.bf16.xpose.msra.mxu0 0
    %4282 = vmatprep.mubr.bf16.mxu0 0
    %4283 = vmatmul.mubr.bf16.gmra.mrb[0].mxu0 %v4163
    %v4284 = vpop.f32.mrb[0].mxu0
    %v4285 = vadd.f32 %v1046, %v4284
    %v4286 = vpop.f32.mrb[0].mxu0
    %v4287 = vpop.f32.mrb[0].mxu0
    %v4288 = vpop.f32.mrb[0].mxu0
    %4289 = vdwg.mxu0
    %v4290 = vsel %vm1439, %v4200, -inf
    %4291 = vmax.xlane.f32.xlu0 %v4290
    %v4292 = vpop.xlane.xlu0 %4291
    %v4293 = vsel %vm1443, %v4240, -inf
    %4294 = vmax.xlane.f32.xlu0 %v4293
    %v4295 = vpop.xlane.xlu0 %4294
    %v4296 = vsel %vm1443, %v4285, -inf
    %4297 = vmax.xlane.f32.xlu0 %v4296
    %v4298 = vpop.xlane.xlu0 %4297
    %v4299 = vmax.f32 %v4295, %v4298
    %v4300 = vmax.f32 %v4292, %v4299
    %v4301 = vsub.f32 %v4200, %v4300
    %v4302 = vmul.f32 %v4301, 1.442695
    %v4303 = vpow.pop %v4302
    %v4304 = vsub.f32 %v4240, %v4300
    %v4305 = vmul.f32 %v4304, 1.442695
    %v4306 = vpow.pop %v4305
    %v4307 = vsub.f32 %v4285, %v4300
    %v4308 = vmul.f32 %v4307, 1.442695
    %v4309 = vpow.pop %v4308
    %v4310 = vsel %vm1439, %v4303, 0.0
    %4311 = vadd.xlane.f32.xlu0 %v4310
    %v4312 = vpop.xlane.xlu0 %4311
    %v4313 = vsel %vm1443, %v4306, 0.0
    %4314 = vadd.xlane.f32.xlu0 %v4313
    %v4315 = vpop.xlane.xlu0 %4314
    %v4316 = vadd.f32 %v4312, %v4315
    %v4317 = vsel %vm1443, %v4309, 0.0
    %4318 = vadd.xlane.f32.xlu0 %v4317
    %v4319 = vpop.xlane.xlu0 %4318
    %v4320 = vadd.f32 %v4316, %v4319
    %v4321 = vpack.c.bf16 %v4303, %v4303
    %s4322 = scalar_lea.vmem %s4, 14
    %v4323 = vld [vmem:[%s4322] sm:$0x3]
    %v4324 = vpack.c.bf16 %v4306, %v4306
    %v4326 = vsel %vm1443, %v4324, 0
    %4328 = vmatprep.subr.bf16.mxu0 0
    %4329 = vmatpush1.bf16.msra.mxu0 %v2447
    %4330 = vmatprep.subr.bf16.mxu0 0
    %4331 = vmatpush1.bf16.msra.mxu0 0
    %4332 = vmatprep.subr.bf16.mxu0 0
    %4333 = vmatpush1.bf16.msra.mxu0 0
    %4334 = vmatprep.subr.bf16.mxu0 0
    %4335 = vmatpush1.bf16.msra.mxu0 0
    %4336 = vmatprep.subr.bf16.mxu0 0
    %4337 = vmatpush1.bf16.msra.mxu0 0
    %4338 = vmatprep.subr.bf16.mxu0 0
    %4339 = vmatpush1.bf16.msra.mxu0 0
    %4340 = vmatprep.subr.bf16.mxu0 0
    %4341 = vmatpush1.bf16.msra.mxu0 0
    %4342 = vmatprep.subr.bf16.mxu0 0
    %4343 = vmatpush1.bf16.msra.mxu0 0
    %4344 = vmatprep.subr.bf16.mxu0 0
    %4345 = vmatpush1.bf16.msra.mxu0 0
    %4346 = vmatprep.subr.bf16.mxu0 0
    %4347 = vmatpush1.bf16.msra.mxu0 0
    %4348 = vmatprep.subr.bf16.mxu0 0
    %4349 = vmatpush1.bf16.msra.mxu0 0
    %4350 = vmatprep.subr.bf16.mxu0 0
    %4351 = vmatpush1.bf16.msra.mxu0 0
    %4352 = vmatprep.subr.bf16.mxu0 0
    %4353 = vmatpush1.bf16.msra.mxu0 0
    %4354 = vmatprep.subr.bf16.mxu0 0
    %4355 = vmatpush1.bf16.msra.mxu0 0
    %4356 = vmatprep.subr.bf16.mxu0 0
    %4357 = vmatpush1.bf16.msra.mxu0 0
    %4358 = vmatprep.subr.bf16.mxu0 0
    %4359 = vmatpush1.bf16.msra.mxu0 0
    %4360 = vmatprep.mubr.bf16.mxu0 0
    %4361 = vmatmul.mubr.bf16.gmra.mrb[0].mxu0 %v4326
    %v4362 = vpop.f32.mrb[0].mxu0
    %v4363 = vadd.f32 0.0, %v4362
    %v4364 = vpop.f32.mrb[0].mxu0
    %v4365 = vpop.f32.mrb[0].mxu0
    %v4366 = vpop.f32.mrb[0].mxu0
    %4367 = vdwg.mxu0
    %v4369 = vsel %vm1439, %v4321, 0
    %v4372 = vsel %vm1524, %v4323, 0
    %4374 = vmatprep.subr.bf16.mxu0 0
    %4375 = vmatpush1.bf16.msra.mxu0 %v4372
    %4376 = vmatprep.subr.bf16.mxu0 0
    %4377 = vmatpush1.bf16.msra.mxu0 0
    %4378 = vmatprep.subr.bf16.mxu0 0
    %4379 = vmatpush1.bf16.msra.mxu0 0
    %4380 = vmatprep.subr.bf16.mxu0 0
    %4381 = vmatpush1.bf16.msra.mxu0 0
    %4382 = vmatprep.subr.bf16.mxu0 0
    %4383 = vmatpush1.bf16.msra.mxu0 0
    %4384 = vmatprep.subr.bf16.mxu0 0
    %4385 = vmatpush1.bf16.msra.mxu0 0
    %4386 = vmatprep.subr.bf16.mxu0 0
    %4387 = vmatpush1.bf16.msra.mxu0 0
    %4388 = vmatprep.subr.bf16.mxu0 0
    %4389 = vmatpush1.bf16.msra.mxu0 0
    %4390 = vmatprep.subr.bf16.mxu0 0
    %4391 = vmatpush1.bf16.msra.mxu0 0
    %4392 = vmatprep.subr.bf16.mxu0 0
    %4393 = vmatpush1.bf16.msra.mxu0 0
    %4394 = vmatprep.subr.bf16.mxu0 0
    %4395 = vmatpush1.bf16.msra.mxu0 0
    %4396 = vmatprep.subr.bf16.mxu0 0
    %4397 = vmatpush1.bf16.msra.mxu0 0
    %4398 = vmatprep.subr.bf16.mxu0 0
    %4399 = vmatpush1.bf16.msra.mxu0 0
    %4400 = vmatprep.subr.bf16.mxu0 0
    %4401 = vmatpush1.bf16.msra.mxu0 0
    %4402 = vmatprep.subr.bf16.mxu0 0
    %4403 = vmatpush1.bf16.msra.mxu0 0
    %4404 = vmatprep.subr.bf16.mxu0 0
    %4405 = vmatpush1.bf16.msra.mxu0 0
    %4406 = vmatprep.mubr.bf16.mxu0 0
    %4407 = vmatmul.mubr.bf16.gmra.mrb[0].mxu0 %v4369
    %v4408 = vpop.f32.mrb[0].mxu0
    %v4409 = vadd.f32 %v4363, %v4408
    %v4410 = vpop.f32.mrb[0].mxu0
    %v4411 = vpop.f32.mrb[0].mxu0
    %v4412 = vpop.f32.mrb[0].mxu0
    %4413 = vdwg.mxu0
    %v4414 = vpack.c.bf16 %v4309, %v4309
    %4415 = vrot.lane.b32.xlu0 %v3206, 80
    %v4416 = vpop.permute.xlu0 %4415
    %v4418 = vsel %vm1443, %v4414, 0
    %v4421 = vsel %vm1478, %v4416, 0
    %4423 = vmatprep.subr.bf16.mxu0 0
    %4424 = vmatpush1.bf16.msra.mxu0 %v4421
    %4425 = vmatprep.subr.bf16.mxu0 0
    %4426 = vmatpush1.bf16.msra.mxu0 0
    %4427 = vmatprep.subr.bf16.mxu0 0
    %4428 = vmatpush1.bf16.msra.mxu0 0
    %4429 = vmatprep.subr.bf16.mxu0 0
    %4430 = vmatpush1.bf16.msra.mxu0 0
    %4431 = vmatprep.subr.bf16.mxu0 0
    %4432 = vmatpush1.bf16.msra.mxu0 0
    %4433 = vmatprep.subr.bf16.mxu0 0
    %4434 = vmatpush1.bf16.msra.mxu0 0
    %4435 = vmatprep.subr.bf16.mxu0 0
    %4436 = vmatpush1.bf16.msra.mxu0 0
    %4437 = vmatprep.subr.bf16.mxu0 0
    %4438 = vmatpush1.bf16.msra.mxu0 0
    %4439 = vmatprep.subr.bf16.mxu0 0
    %4440 = vmatpush1.bf16.msra.mxu0 0
    %4441 = vmatprep.subr.bf16.mxu0 0
    %4442 = vmatpush1.bf16.msra.mxu0 0
    %4443 = vmatprep.subr.bf16.mxu0 0
    %4444 = vmatpush1.bf16.msra.mxu0 0
    %4445 = vmatprep.subr.bf16.mxu0 0
    %4446 = vmatpush1.bf16.msra.mxu0 0
    %4447 = vmatprep.subr.bf16.mxu0 0
    %4448 = vmatpush1.bf16.msra.mxu0 0
    %4449 = vmatprep.subr.bf16.mxu0 0
    %4450 = vmatpush1.bf16.msra.mxu0 0
    %4451 = vmatprep.subr.bf16.mxu0 0
    %4452 = vmatpush1.bf16.msra.mxu0 0
    %4453 = vmatprep.subr.bf16.mxu0 0
    %4454 = vmatpush1.bf16.msra.mxu0 0
    %4455 = vmatprep.mubr.bf16.mxu0 0
    %4456 = vmatmul.mubr.bf16.gmra.mrb[0].mxu0 %v4418
    %v4457 = vpop.f32.mrb[0].mxu0
    %v4458 = vadd.f32 0.0, %v4457
    %v4459 = vpop.f32.mrb[0].mxu0
    %v4460 = vpop.f32.mrb[0].mxu0
    %v4461 = vpop.f32.mrb[0].mxu0
    %4462 = vdwg.mxu0
    %v4463 = vadd.f32 %v4409, %v4458
    %v4464 = vrcp.pop %v4320
    %v4465 = vmul.f32 %v4463, %v4464
    %4467 = vrot.lane.b32.xlu0 %v3835, 16
    %v4468 = vpop.permute.xlu0 %4467
    %4471 = vrot.lane.b32.xlu0 %v4150, 32
    %v4472 = vpop.permute.xlu0 %4471
    %4475 = vrot.lane.b32.xlu0 %v4465, 48
    %v4476 = vpop.permute.xlu0 %4475
    %v4478 = vsel %vm1306, %v3518, %v4468
    %v4479 = vsel %vm68, %v4478, %v4472
    %v4480 = vsel %vm2601, %v4479, %v4476
    %v4481 = vpack.c.bf16 %v4480, %v4480
    %s4482 = scalar_lea.vmem %s7, 32
    %v4483 = vld [vmem:[%s4482] sm:$0xf]
    %v4484 = vld [vmem:[%s4482 + $0x4] sm:$0xf]
    %v4485 = vld [vmem:[%s4482 + $0x8] sm:$0xf]
    %v4486 = vld [vmem:[%s4482 + $0xc] sm:$0xf]
    %v4487 = vld [vmem:[%s4482 + $0x10] sm:$0xf]
    %v4488 = vld [vmem:[%s4482 + $0x14] sm:$0xf]
    %v4489 = vld [vmem:[%s4482 + $0x18] sm:$0xf]
    %v4490 = vld [vmem:[%s4482 + $0x1c] sm:$0xf]
    %s4491 = scalar_lea.vmem %s8, 1
    %v4492 = vld [vmem:[%s4491] sm:$0x1]
    %v4494 = vlaneseq
    %v4495 = vshrl.u32 %v4494, 7
    %v4496 = vsub.s32 0, %v4495
    %v4497 = vrot.slane %v4492, %v4496
    %v4507 = vunpack.c.l.b16 %v4483
    %v4508 = vunpack.c.l.b16 %v4484
    %v4509 = vunpack.c.l.b16 %v4485
    %v4510 = vunpack.c.l.b16 %v4486
    %v4511 = vunpack.c.l.b16 %v4487
    %v4512 = vunpack.c.l.b16 %v4488
    %v4513 = vunpack.c.l.b16 %v4489
    %v4514 = vunpack.c.l.b16 %v4490
    %v4515 = vpack.c.b16 %v4508, %v4507
    %v4516 = vpack.c.b16 %v4510, %v4509
    %v4517 = vpack.c.b16 %v4512, %v4511
    %v4518 = vpack.c.b16 %v4514, %v4513
    %v4524 = vsel %vm1047, %v4481, 0
    %4526 = vmatprep.subr.bf16.mxu0 0
    %4527 = vmatpush1.bf16.msra.mxu0 %v4515
    %4528 = vmatprep.subr.bf16.mxu0 0
    %4529 = vmatpush1.bf16.msra.mxu0 %v4516
    %4530 = vmatprep.subr.bf16.mxu0 0
    %4531 = vmatpush1.bf16.msra.mxu0 %v4517
    %4532 = vmatprep.subr.bf16.mxu0 0
    %4533 = vmatpush1.bf16.msra.mxu0 %v4518
    %4534 = vmatprep.subr.bf16.mxu0 0
    %4535 = vmatpush1.bf16.msra.mxu0 0
    %4536 = vmatprep.subr.bf16.mxu0 0
    %4537 = vmatpush1.bf16.msra.mxu0 0
    %4538 = vmatprep.subr.bf16.mxu0 0
    %4539 = vmatpush1.bf16.msra.mxu0 0
    %4540 = vmatprep.subr.bf16.mxu0 0
    %4541 = vmatpush1.bf16.msra.mxu0 0
    %4542 = vmatprep.subr.bf16.mxu0 0
    %4543 = vmatpush1.bf16.msra.mxu0 0
    %4544 = vmatprep.subr.bf16.mxu0 0
    %4545 = vmatpush1.bf16.msra.mxu0 0
    %4546 = vmatprep.subr.bf16.mxu0 0
    %4547 = vmatpush1.bf16.msra.mxu0 0
    %4548 = vmatprep.subr.bf16.mxu0 0
    %4549 = vmatpush1.bf16.msra.mxu0 0
    %4550 = vmatprep.subr.bf16.mxu0 0
    %4551 = vmatpush1.bf16.msra.mxu0 0
    %4552 = vmatprep.subr.bf16.mxu0 0
    %4553 = vmatpush1.bf16.msra.mxu0 0
    %4554 = vmatprep.subr.bf16.mxu0 0
    %4555 = vmatpush1.bf16.msra.mxu0 0
    %4556 = vmatprep.subr.bf16.mxu0 0
    %4557 = vmatpush1.bf16.msra.mxu0 0
    %4558 = vmatprep.mubr.bf16.mxu0 0
    %4559 = vmatmul.mubr.bf16.gmra.mrb[0].mxu0 %v4524
    %v4560 = vpop.f32.mrb[0].mxu0
    %v4561 = vadd.f32 %v4497, %v4560
    %v4562 = vpop.f32.mrb[0].mxu0
    %v4563 = vpop.f32.mrb[0].mxu0
    %v4564 = vpop.f32.mrb[0].mxu0
    %4565 = vdwg.mxu0
    %s4566 = scalar_lea.vmem %s9, 64
    %v4567 = vld [vmem:[%s4566] sm:$0xff]
    %v4568 = vld [vmem:[%s4566 + $0x8] sm:$0xff]
    %v4569 = vld [vmem:[%s4566 + $0x10] sm:$0xff]
    %v4570 = vld [vmem:[%s4566 + $0x18] sm:$0xff]
    %v4571 = vld [vmem:[%s4566 + $0x20] sm:$0xff]
    %v4572 = vld [vmem:[%s4566 + $0x28] sm:$0xff]
    %v4573 = vld [vmem:[%s4566 + $0x30] sm:$0xff]
    %v4574 = vld [vmem:[%s4566 + $0x38] sm:$0xff]
    %s4575 = scalar_lea.vmem %s10, 2
    %v4576 = vld [vmem:[%s4575] sm:$0x3]
    %v4578 = vlaneseq
    %v4579 = vshrl.u32 %v4578, 7
    %v4580 = vsub.s32 0, %v4579
    %v4581 = vrot.slane %v4576, %v4580
    %v4582 = vlaneseq
    %v4583 = vshrl.u32 %v4582, 7
    %v4584 = vsub.s32 1, %v4583
    %v4585 = vrot.slane %v4576, %v4584
    %v4596 = vunpack.c.l.b16 %v4567
    %v4597 = vunpack.c.h.b16 %v4567
    %v4598 = vunpack.c.l.b16 %v4568
    %v4599 = vunpack.c.h.b16 %v4568
    %v4600 = vunpack.c.l.b16 %v4569
    %v4601 = vunpack.c.h.b16 %v4569
    %v4602 = vunpack.c.l.b16 %v4570
    %v4603 = vunpack.c.h.b16 %v4570
    %v4604 = vunpack.c.l.b16 %v4571
    %v4605 = vunpack.c.h.b16 %v4571
    %v4606 = vunpack.c.l.b16 %v4572
    %v4607 = vunpack.c.h.b16 %v4572
    %v4608 = vunpack.c.l.b16 %v4573
    %v4609 = vunpack.c.h.b16 %v4573
    %v4610 = vunpack.c.l.b16 %v4574
    %v4611 = vunpack.c.h.b16 %v4574
    %v4612 = vpack.c.b16 %v4598, %v4596
    %v4613 = vpack.c.b16 %v4599, %v4597
    %v4614 = vpack.c.b16 %v4602, %v4600
    %v4615 = vpack.c.b16 %v4603, %v4601
    %v4616 = vpack.c.b16 %v4606, %v4604
    %v4617 = vpack.c.b16 %v4607, %v4605
    %v4618 = vpack.c.b16 %v4610, %v4608
    %v4619 = vpack.c.b16 %v4611, %v4609
    %4628 = vmatprep.subr.bf16.mxu0 %v4613
    %4629 = vmatpush1.bf16.msra.mxu0 %v4612
    %4630 = vmatprep.subr.bf16.mxu0 %v4615
    %4631 = vmatpush1.bf16.msra.mxu0 %v4614
    %4632 = vmatprep.subr.bf16.mxu0 %v4617
    %4633 = vmatpush1.bf16.msra.mxu0 %v4616
    %4634 = vmatprep.subr.bf16.mxu0 %v4619
    %4635 = vmatpush1.bf16.msra.mxu0 %v4618
    %4636 = vmatprep.subr.bf16.mxu0 0
    %4637 = vmatpush1.bf16.msra.mxu0 0
    %4638 = vmatprep.subr.bf16.mxu0 0
    %4639 = vmatpush1.bf16.msra.mxu0 0
    %4640 = vmatprep.subr.bf16.mxu0 0
    %4641 = vmatpush1.bf16.msra.mxu0 0
    %4642 = vmatprep.subr.bf16.mxu0 0
    %4643 = vmatpush1.bf16.msra.mxu0 0
    %4644 = vmatprep.subr.bf16.mxu0 0
    %4645 = vmatpush1.bf16.msra.mxu0 0
    %4646 = vmatprep.subr.bf16.mxu0 0
    %4647 = vmatpush1.bf16.msra.mxu0 0
    %4648 = vmatprep.subr.bf16.mxu0 0
    %4649 = vmatpush1.bf16.msra.mxu0 0
    %4650 = vmatprep.subr.bf16.mxu0 0
    %4651 = vmatpush1.bf16.msra.mxu0 0
    %4652 = vmatprep.subr.bf16.mxu0 0
    %4653 = vmatpush1.bf16.msra.mxu0 0
    %4654 = vmatprep.subr.bf16.mxu0 0
    %4655 = vmatpush1.bf16.msra.mxu0 0
    %4656 = vmatprep.subr.bf16.mxu0 0
    %4657 = vmatpush1.bf16.msra.mxu0 0
    %4658 = vmatprep.subr.bf16.mxu0 0
    %4659 = vmatpush1.bf16.msra.mxu0 0
    %4660 = vmatprep.mubr.bf16.mxu0 0
    %4661 = vmatmul.mubr.bf16.gmra.mrb[0].mxu0 %v3061
    %v4662 = vpop.f32.mrb[0].mxu0
    %v4663 = vadd.f32 %v4581, %v4662
    %v4664 = vpop.f32.mrb[0].mxu0
    %v4665 = vadd.f32 %v4585, %v4664
    %v4666 = vpop.f32.mrb[0].mxu0
    %v4667 = vpop.f32.mrb[0].mxu0
    %4668 = vdwg.mxu0
    %v4669 = vmul.f32 %v4663, %v4663
    %v4670 = vmul.f32 %v4665, %v4665
    %v4671 = vmul.f32 %v4663, %v4669
    %v4672 = vmul.f32 %v4665, %v4670
    %v4673 = vmul.f32 %v4671, 0.044715
    %v4674 = vmul.f32 %v4672, 0.044715
    %v4675 = vadd.f32 %v4663, %v4673
    %v4676 = vadd.f32 %v4665, %v4674
    %v4677 = vmul.f32 %v4675, 0.7978846
    %v4678 = vmul.f32 %v4676, 0.7978846
    %v4679 = vtanh.pop %v4677
    %v4680 = vtanh.pop %v4678
    %v4681 = vadd.f32 %v4679, 1.0
    %v4682 = vadd.f32 %v4680, 1.0
    %v4683 = vmul.f32 %v4681, 0.5
    %v4684 = vmul.f32 %v4682, 0.5
    %v4685 = vmul.f32 %v4663, %v4683
    %v4686 = vmul.f32 %v4665, %v4684
    %v4687 = vpack.c.bf16 %v4685, %v4685
    %v4688 = vpack.c.bf16 %v4686, %v4686
    %s4689 = scalar_lea.vmem %s11, 128
    %v4690 = vld [vmem:[%s4689] sm:$0xf]
    %v4691 = vld [vmem:[%s4689 + $0x4] sm:$0xf]
    %v4692 = vld [vmem:[%s4689 + $0x8] sm:$0xf]
    %v4693 = vld [vmem:[%s4689 + $0xc] sm:$0xf]
    %v4694 = vld [vmem:[%s4689 + $0x10] sm:$0xf]
    %v4695 = vld [vmem:[%s4689 + $0x14] sm:$0xf]
    %v4696 = vld [vmem:[%s4689 + $0x18] sm:$0xf]
    %v4697 = vld [vmem:[%s4689 + $0x1c] sm:$0xf]
    %v4698 = vld [vmem:[%s4689 + $0x20] sm:$0xf]
    %v4699 = vld [vmem:[%s4689 + $0x24] sm:$0xf]
    %v4700 = vld [vmem:[%s4689 + $0x28] sm:$0xf]
    %v4701 = vld [vmem:[%s4689 + $0x2c] sm:$0xf]
    %v4702 = vld [vmem:[%s4689 + $0x30] sm:$0xf]
    %v4703 = vld [vmem:[%s4689 + $0x34] sm:$0xf]
    %v4704 = vld [vmem:[%s4689 + $0x38] sm:$0xf]
    %v4705 = vld [vmem:[%s4689 + $0x3c] sm:$0xf]
    %v4706 = vld [vmem:[%s4689 + $0x40] sm:$0xf]
    %v4707 = vld [vmem:[%s4689 + $0x44] sm:$0xf]
    %v4708 = vld [vmem:[%s4689 + $0x48] sm:$0xf]
    %v4709 = vld [vmem:[%s4689 + $0x4c] sm:$0xf]
    %v4710 = vld [vmem:[%s4689 + $0x50] sm:$0xf]
    %v4711 = vld [vmem:[%s4689 + $0x54] sm:$0xf]
    %v4712 = vld [vmem:[%s4689 + $0x58] sm:$0xf]
    %v4713 = vld [vmem:[%s4689 + $0x5c] sm:$0xf]
    %v4714 = vld [vmem:[%s4689 + $0x60] sm:$0xf]
    %v4715 = vld [vmem:[%s4689 + $0x64] sm:$0xf]
    %v4716 = vld [vmem:[%s4689 + $0x68] sm:$0xf]
    %v4717 = vld [vmem:[%s4689 + $0x6c] sm:$0xf]
    %v4718 = vld [vmem:[%s4689 + $0x70] sm:$0xf]
    %v4719 = vld [vmem:[%s4689 + $0x74] sm:$0xf]
    %v4720 = vld [vmem:[%s4689 + $0x78] sm:$0xf]
    %v4721 = vld [vmem:[%s4689 + $0x7c] sm:$0xf]
    %s4722 = scalar_lea.vmem %s12, 1
    %v4723 = vld [vmem:[%s4722] sm:$0x1]
    %v4725 = vlaneseq
    %v4726 = vshrl.u32 %v4725, 7
    %v4727 = vsub.s32 0, %v4726
    %v4728 = vrot.slane %v4723, %v4727
    %v4762 = vunpack.c.l.b16 %v4690
    %v4763 = vunpack.c.l.b16 %v4691
    %v4764 = vunpack.c.l.b16 %v4692
    %v4765 = vunpack.c.l.b16 %v4693
    %v4766 = vunpack.c.l.b16 %v4694
    %v4767 = vunpack.c.l.b16 %v4695
    %v4768 = vunpack.c.l.b16 %v4696
    %v4769 = vunpack.c.l.b16 %v4697
    %v4770 = vunpack.c.l.b16 %v4698
    %v4771 = vunpack.c.l.b16 %v4699
    %v4772 = vunpack.c.l.b16 %v4700
    %v4773 = vunpack.c.l.b16 %v4701
    %v4774 = vunpack.c.l.b16 %v4702
    %v4775 = vunpack.c.l.b16 %v4703
    %v4776 = vunpack.c.l.b16 %v4704
    %v4777 = vunpack.c.l.b16 %v4705
    %v4778 = vunpack.c.l.b16 %v4706
    %v4779 = vunpack.c.l.b16 %v4707
    %v4780 = vunpack.c.l.b16 %v4708
    %v4781 = vunpack.c.l.b16 %v4709
    %v4782 = vunpack.c.l.b16 %v4710
    %v4783 = vunpack.c.l.b16 %v4711
    %v4784 = vunpack.c.l.b16 %v4712
    %v4785 = vunpack.c.l.b16 %v4713
    %v4786 = vunpack.c.l.b16 %v4714
    %v4787 = vunpack.c.l.b16 %v4715
    %v4788 = vunpack.c.l.b16 %v4716
    %v4789 = vunpack.c.l.b16 %v4717
    %v4790 = vunpack.c.l.b16 %v4718
    %v4791 = vunpack.c.l.b16 %v4719
    %v4792 = vunpack.c.l.b16 %v4720
    %v4793 = vunpack.c.l.b16 %v4721
    %v4794 = vpack.c.b16 %v4763, %v4762
    %v4795 = vpack.c.b16 %v4765, %v4764
    %v4796 = vpack.c.b16 %v4767, %v4766
    %v4797 = vpack.c.b16 %v4769, %v4768
    %v4798 = vpack.c.b16 %v4771, %v4770
    %v4799 = vpack.c.b16 %v4773, %v4772
    %v4800 = vpack.c.b16 %v4775, %v4774
    %v4801 = vpack.c.b16 %v4777, %v4776
    %v4802 = vpack.c.b16 %v4779, %v4778
    %v4803 = vpack.c.b16 %v4781, %v4780
    %v4804 = vpack.c.b16 %v4783, %v4782
    %v4805 = vpack.c.b16 %v4785, %v4784
    %v4806 = vpack.c.b16 %v4787, %v4786
    %v4807 = vpack.c.b16 %v4789, %v4788
    %v4808 = vpack.c.b16 %v4791, %v4790
    %v4809 = vpack.c.b16 %v4793, %v4792
    %4826 = vmatprep.subr.bf16.mxu0 0
    %4827 = vmatpush1.bf16.msra.mxu0 %v4794
    %4828 = vmatprep.subr.bf16.mxu0 0
    %4829 = vmatpush1.bf16.msra.mxu0 %v4795
    %4830 = vmatprep.subr.bf16.mxu0 0
    %4831 = vmatpush1.bf16.msra.mxu0 %v4796
    %4832 = vmatprep.subr.bf16.mxu0 0
    %4833 = vmatpush1.bf16.msra.mxu0 %v4797
    %4834 = vmatprep.subr.bf16.mxu0 0
    %4835 = vmatpush1.bf16.msra.mxu0 %v4798
    %4836 = vmatprep.subr.bf16.mxu0 0
    %4837 = vmatpush1.bf16.msra.mxu0 %v4799
    %4838 = vmatprep.subr.bf16.mxu0 0
    %4839 = vmatpush1.bf16.msra.mxu0 %v4800
    %4840 = vmatprep.subr.bf16.mxu0 0
    %4841 = vmatpush1.bf16.msra.mxu0 %v4801
    %4842 = vmatprep.subr.bf16.mxu0 0
    %4843 = vmatpush1.bf16.msra.mxu0 %v4802
    %4844 = vmatprep.subr.bf16.mxu0 0
    %4845 = vmatpush1.bf16.msra.mxu0 %v4803
    %4846 = vmatprep.subr.bf16.mxu0 0
    %4847 = vmatpush1.bf16.msra.mxu0 %v4804
    %4848 = vmatprep.subr.bf16.mxu0 0
    %4849 = vmatpush1.bf16.msra.mxu0 %v4805
    %4850 = vmatprep.subr.bf16.mxu0 0
    %4851 = vmatpush1.bf16.msra.mxu0 %v4806
    %4852 = vmatprep.subr.bf16.mxu0 0
    %4853 = vmatpush1.bf16.msra.mxu0 %v4807
    %4854 = vmatprep.subr.bf16.mxu0 0
    %4855 = vmatpush1.bf16.msra.mxu0 %v4808
    %4856 = vmatprep.subr.bf16.mxu0 0
    %4857 = vmatpush1.bf16.msra.mxu0 %v4809
    %4858 = vmatprep.mubr.bf16.mxu0 %v4688
    %4859 = vmatmul.mubr.bf16.gmra.mrb[0].mxu0 %v4687
    %v4860 = vpop.f32.mrb[0].mxu0
    %v4861 = vadd.f32 %v4728, %v4860
    %v4862 = vpop.f32.mrb[0].mxu0
    %v4863 = vpop.f32.mrb[0].mxu0
    %v4864 = vpop.f32.mrb[0].mxu0
    %4865 = vdwg.mxu0
    %v4866 = vadd.f32 %v4561, %v4861
    %v4867 = vadd.f32 %v4866, %v2983
    %v4868 = vsel %vm1047, %v4867, 0.0
    %4869 = vadd.xlane.f32.xlu0 %v4868
    %v4870 = vpop.xlane.xlu0 %4869
    %v4871 = vmul.f32 %v4870, %v1051
    %v4872 = vsub.f32 %v4867, %v4871
    %v4873 = vmul.f32 %v4872, %v4872
    %v4874 = vsel %vm1047, %v4873, 0.0
    %4875 = vadd.xlane.f32.xlu0 %v4874
    %v4876 = vpop.xlane.xlu0 %4875
    %v4877 = vmul.f32 %v4876, %v1051
    %v4878 = vadd.f32 %v4877, 1e-05
    %v4879 = vrsqrt.pop %v4878
    %v4880 = vmul.f32 %v4872, %v4879
    %v4881 = vld [vmem:[%s13] sm:$0xff]
    %v4882 = vld [vmem:[%s13 + $0x8] sm:$0xff]
    %v4883 = vld [vmem:[%s13 + $0x10] sm:$0xff]
    %v4884 = vld [vmem:[%s13 + $0x18] sm:$0xff]
    %v4885 = vld [vmem:[%s13 + $0x20] sm:$0xff]
    %v4886 = vld [vmem:[%s13 + $0x28] sm:$0xff]
    %v4887 = vld [vmem:[%s13 + $0x30] sm:$0xff]
    %v4888 = vld [vmem:[%s13 + $0x38] sm:$0xff]
    %v4889 = vld [vmem:[%s14] sm:$0x1]
    %v4891 = vlaneseq
    %v4892 = vshrl.u32 %v4891, 7
    %v4893 = vsub.s32 0, %v4892
    %v4894 = vrot.slane %v4889, %v4893
    %v4897 = vsel %vm1047, %v4880, 0
    %4899 = vmatprep.subr.mxu0 0.0
    %4900 = vmatpush1.msra.mxu0 %v4881
    %4901 = vmatprep.subr.mxu0 0.0
    %4902 = vmatpush1.msra.mxu0 %v4882
    %4903 = vmatprep.subr.mxu0 0.0
    %4904 = vmatpush1.msra.mxu0 %v4883
    %4905 = vmatprep.subr.mxu0 0.0
    %4906 = vmatpush1.msra.mxu0 %v4884
    %4907 = vmatprep.subr.mxu0 0.0
    %4908 = vmatpush1.msra.mxu0 %v4885
    %4909 = vmatprep.subr.mxu0 0.0
    %4910 = vmatpush1.msra.mxu0 %v4886
    %4911 = vmatprep.subr.mxu0 0.0
    %4912 = vmatpush1.msra.mxu0 %v4887
    %4913 = vmatprep.subr.mxu0 0.0
    %4914 = vmatpush1.msra.mxu0 %v4888
    %4915 = vmatprep.subr.mxu0 0.0
    %4916 = vmatpush1.msra.mxu0 0.0
    %4917 = vmatprep.subr.mxu0 0.0
    %4918 = vmatpush1.msra.mxu0 0.0
    %4919 = vmatprep.subr.mxu0 0.0
    %4920 = vmatpush1.msra.mxu0 0.0
    %4921 = vmatprep.subr.mxu0 0.0
    %4922 = vmatpush1.msra.mxu0 0.0
    %4923 = vmatprep.subr.mxu0 0.0
    %4924 = vmatpush1.msra.mxu0 0.0
    %4925 = vmatprep.subr.mxu0 0.0
    %4926 = vmatpush1.msra.mxu0 0.0
    %4927 = vmatprep.subr.mxu0 0.0
    %4928 = vmatpush1.msra.mxu0 0.0
    %4929 = vmatprep.subr.mxu0 0.0
    %4930 = vmatpush1.msra.mxu0 0.0
    %4931 = vmatprep.subr.mxu0 0.0
    %4932 = vmatpush1.msra.mxu0 0.0
    %4933 = vmatprep.subr.mxu0 0.0
    %4934 = vmatpush1.msra.mxu0 0.0
    %4935 = vmatprep.subr.mxu0 0.0
    %4936 = vmatpush1.msra.mxu0 0.0
    %4937 = vmatprep.subr.mxu0 0.0
    %4938 = vmatpush1.msra.mxu0 0.0
    %4939 = vmatprep.subr.mxu0 0.0
    %4940 = vmatpush1.msra.mxu0 0.0
    %4941 = vmatprep.subr.mxu0 0.0
    %4942 = vmatpush1.msra.mxu0 0.0
    %4943 = vmatprep.subr.mxu0 0.0
    %4944 = vmatpush1.msra.mxu0 0.0
    %4945 = vmatprep.subr.mxu0 0.0
    %4946 = vmatpush1.msra.mxu0 0.0
    %4947 = vmatprep.subr.mxu0 0.0
    %4948 = vmatpush1.msra.mxu0 0.0
    %4949 = vmatprep.subr.mxu0 0.0
    %4950 = vmatpush1.msra.mxu0 0.0
    %4951 = vmatprep.subr.mxu0 0.0
    %4952 = vmatpush1.msra.mxu0 0.0
    %4953 = vmatprep.subr.mxu0 0.0
    %4954 = vmatpush1.msra.mxu0 0.0
    %4955 = vmatprep.subr.mxu0 0.0
    %4956 = vmatpush1.msra.mxu0 0.0
    %4957 = vmatprep.subr.mxu0 0.0
    %4958 = vmatpush1.msra.mxu0 0.0
    %4959 = vmatprep.subr.mxu0 0.0
    %4960 = vmatpush1.msra.mxu0 0.0
    %4961 = vmatprep.subr.mxu0 0.0
    %4962 = vmatpush1.msra.mxu0 0.0
    %4963 = vmatprep.mubr.f32.mxu0 0.0
    %4964 = vmatmul.mubr.f32.gmra.mrb[0].mxu0 %v4897
    %v4965 = vpop.f32.mrb[0].mxu0
    %v4966 = vadd.f32 %v4894, %v4965
    %v4967 = vpop.f32.mrb[0].mxu0
    %4968 = vdwg.mxu0
    %v4969 = vmul.f32 %v4966, %v87
    %v4970 = vadd.f32 %v4969, %v73
    %4971 = vst.msk [vmem:[#allocation2] sm:$0xff] %vm1443, %v4970
    // Predicated region
    $region82: #{model_forward.1} parent=1 // pred_check
      _
    $region83: #{model_forward.1} parent=1 // pred_check_branch
      %4973 = sbr.rel (0) target = $region85
    $region84: #{model_forward.1} parent=1 // pred_region
      %s4975 = ssub.s32 128, 128
      %4976 = vsyncadd [#allocation3], %s4975
      %s4978 = sshll.u32 [#allocation2], 4
      %s4979 = int_to_ptr.vmem [resolvable:$true] %s4978
      %4981 = dma.vmem_to_hbm [thread:$0]  %s4979, 128, %s20, [#allocation3]
    $region85: #{model_forward.1} parent=1 // pred_fallthru
      _
    // Predicated region
    $region86: #{model_forward.1} parent=1 // pred_check
      _
    $region87: #{model_forward.1} parent=1 // pred_check_branch
      %4983 = sbr.rel (0) target = $region89
    $region88: #{model_forward.1} parent=1 // pred_region
      %4984 = dma.done [#allocation3], 128
    $region89: #{model_forward.1} parent=1 // pred_fallthru
      _
    %4985 = vsyncpa [#allocation3], 1

</llo_original>
